<compile_context>
chip_gen: v7x
topology: tpu7x:2x2x1
jax: 0.10.0
libtpu: 0.0.40
codegen_flags: <defaults>
</compile_context>

<pallas_src>
import functools
import math

import jax
import jax.numpy as jnp
from jax import lax
from jax.experimental import pallas as pl
from jax.experimental.pallas import tpu as pltpu


# ---------------------------------------------------------------------------
# Fused whole-forward kernel (batch folded into a single invocation)
# ---------------------------------------------------------------------------

def _fused_forward_kernel(x2d_ref, xhd_ref, wproj_ref, wout_ref, lnw_ref,
                          flnw_ref, cw_ref, sw_ref, o_ref,
                          kwork, kswork, vwork,
                          *, num_layers, num_heads, head_dim, batch, seq,
                          scale, eps):
    L, H, D, B, T = num_layers, num_heads, head_dim, batch, seq
    E = H * D
    BT = B * T

    # MXU lhs for the head-batched projections (hoisted; broadcast once).
    x_bf = x2d_ref[...].astype(jnp.bfloat16)                    # (BT, E)
    x_b = jnp.broadcast_to(x_bf[None], (H, BT, E))

    # Sign-folded rotary tables at head width: cw = [c, c], sw = [-s, s].
    cw_q = cw_ref[0:T, :][None]                                 # (1, T, D)
    sw_q = sw_ref[0:T, :][None]

    dn_proj = (((2,), (1,)), ((0,), (0,)))   # (H,BT,E) @ (H,E,D) -> (H,BT,D)
    dn_qk = (((2,), (2,)), ((0,), (0,)))     # (H,T,D)  . (H,S,D) -> (H,T,S)
    dn_pv = (((2,), (1,)), ((0,), (0,)))     # (H,T,S)  @ (H,S,D) -> (H,T,D)

    def proj(i, g):
        return lax.dot_general(x_b, wproj_ref[i * 5 + g], dn_proj,
                               preferred_element_type=jnp.float32)

    combined = [jnp.zeros((H, T, D), jnp.float32) for _ in range(B)]

    for i in range(L):
        cur = T * (2 ** i)                   # accumulated KV length this layer

        # Head-batched per-group projections (no lane slicing of outputs).
        q_all = proj(i, 0)                   # (H, BT, D)
        qsw_all = proj(i, 1)                 # swap-halves(q) via permuted weights
        kn_all = proj(i, 2)
        ksw_all = proj(i, 3)
        vn_all = proj(i, 4)

        cw_k = cw_ref[0:cur, :][None]        # (1, cur, D)
        sw_k = sw_ref[0:cur, :][None]
        lnw_i = lnw_ref[i]                   # (H, 1, D), lambda pre-folded

        # Bottom-right aligned causal bias (flash-attn >= 2.1) for KV ordered
        # [new, cached...]; batch-independent, built once per layer.
        qpos = lax.broadcasted_iota(jnp.int32, (T, cur), 0)
        kpos = lax.broadcasted_iota(jnp.int32, (T, cur), 1)
        bias = jnp.where(kpos <= qpos + (cur - T), 0.0, -1e30)
        bias = bias.astype(jnp.float32)[None]                    # (1, T, cur)

        for b in range(B):
            r0, r1 = b * T, (b + 1) * T      # token rows of this batch element
            c0, c1 = b * H, (b + 1) * H      # its cache slots (head-major)

            # Newest K / swap(K) / V rows land in the [0:T) block of the
            # caches; rows [T:) hold previous layers' persisted (rotated) K /
            # swap(K) / V, so each layer's KV is one contiguous prefix read.
            kwork[c0:c1, 0:T, :] = kn_all[:, r0:r1, :]
            kswork[c0:c1, 0:T, :] = ksw_all[:, r0:r1, :]
            vwork[c0:c1, 0:T, :] = vn_all[:, r0:r1, :]

            kc = kwork[c0:c1, 0:cur, :]      # (H, cur, D) = [new, k_0, k_1, ..]
            kcs = kswork[c0:c1, 0:cur, :]
            vc = vwork[c0:c1, 0:cur, :]

            # RoPE with no in-kernel half-swap.
            q_rot = q_all[:, r0:r1, :] * cw_q + qsw_all[:, r0:r1, :] * sw_q
            k_rot = kc * cw_k + kcs * sw_k   # re-rotates cached keys (as ref)

            if i < L - 1:
                # Persist this layer's full rotated K, swap(rotated K) and V
                # for the later layers' accumulated caches (static offsets).
                kwork[c0:c1, cur:2 * cur, :] = k_rot
                kswork[c0:c1, cur:2 * cur, :] = kcs * cw_k - kc * sw_k
                vwork[c0:c1, cur:2 * cur, :] = vc

            # Head-batched attention: bf16 MXU operands, f32 accumulation.
            s = lax.dot_general(q_rot.astype(jnp.bfloat16),
                                k_rot.astype(jnp.bfloat16),
                                dn_qk, preferred_element_type=jnp.float32)
            s = s * scale + bias
            m = jnp.max(s, axis=-1, keepdims=True)
            p = jnp.exp(s - m)
            denom = jnp.sum(p, axis=-1, keepdims=True)
            o = lax.dot_general(p.astype(jnp.bfloat16), vc.astype(jnp.bfloat16),
                                dn_pv, preferred_element_type=jnp.float32)
            o = o * pl.reciprocal(denom, approx=False)           # (H, T, D)

            # RMSNorm over the full embedding (= heads x head_dim jointly),
            # per-layer lambda scalar already folded into the weight.
            ms = jnp.sum(jnp.sum(o * o, axis=-1, keepdims=True),
                         axis=0, keepdims=True) / E
            combined[b] = combined[b] + o * lax.rsqrt(ms + eps) * lnw_i

    # Final residual (alpha pre-folded into xhd) + RMSNorm + out projection.
    flnw = flnw_ref[...]                                         # (H, 1, D)
    outs = []
    for b in range(B):
        pre = combined[b] + xhd_ref[b * H:(b + 1) * H, :, :]
        ms = jnp.sum(jnp.sum(pre * pre, axis=-1, keepdims=True),
                     axis=0, keepdims=True) / E
        pre = (pre * lax.rsqrt(ms + eps) * flnw).astype(jnp.bfloat16)
        out_b = sum(jnp.dot(pre[h], wout_ref[h],
                            preferred_element_type=jnp.float32)
                    for h in range(H))                           # (T, E)
        outs.append(out_b)

    # Lane-dense store: batch concatenated along lanes -> (T, B*E) = (8, 128),
    # one unmasked tile.  The wrapper undoes this layout outside the kernel.
    o_ref[...] = jnp.concatenate(outs, axis=-1).astype(o_ref.dtype)


# ---------------------------------------------------------------------------
# Parameters (deterministic, shapes match the PyTorch module)
# ---------------------------------------------------------------------------

def init_params(key, embed_dim, num_layers=3):
    n_lin = num_layers * 3 + 1
    keys = jax.random.split(key, n_lin)
    # kaiming_uniform_(a=sqrt(5)) on an (out,in) Linear weight is
    # U(-1/sqrt(fan_in), 1/sqrt(fan_in)); we sample the transposed (in,out).
    bound = 1.0 / math.sqrt(embed_dim)

    def lin(k):
        return jax.random.uniform(
            k, (embed_dim, embed_dim), jnp.float32, minval=-bound, maxval=bound)

    return {
        "q": [lin(keys[3 * i + 0]) for i in range(num_layers)],
        "k": [lin(keys[3 * i + 1]) for i in range(num_layers)],
        "v": [lin(keys[3 * i + 2]) for i in range(num_layers)],
        "out": lin(keys[-1]),
        "ln": [jnp.ones((embed_dim,), jnp.float32) for _ in range(num_layers)],
        "final_ln": jnp.ones((embed_dim,), jnp.float32),
        # distinct deterministic values instead of zeros (see header note)
        "lambdas": [jnp.full((1,), 0.1 * i - 0.1, jnp.float32)
                    for i in range(num_layers)],
        "alpha": jnp.ones((1,), jnp.float32),
    }


# ---------------------------------------------------------------------------
# Forward (wrapper: weight re-layout / folding + one pallas_call)
# ---------------------------------------------------------------------------

def forward(params, x, rel_pos, num_heads, head_dim):
    cos, sin = rel_pos                       # (max_len, head_dim // 2) each
    B, T, E = x.shape
    H, D = num_heads, head_dim
    L = len(params["q"])
    scale = D ** (-0.5)                      # flash_attn default softmax scale
    max_tk = T * (2 ** (L - 1))              # accumulated KV length at last layer

    # lambda mixing weights: sigmoid then non-affine LayerNorm across layers.
    lam_raw = jax.nn.sigmoid(jnp.concatenate(params["lambdas"]))     # (L,)
    lam = (lam_raw - lam_raw.mean()) / jnp.sqrt(lam_raw.var() + 1e-5)

    def heads_of(w):                         # (E_in, E_out) -> (H, E, D)
        return jnp.stack([w[:, h * D:(h + 1) * D] for h in range(H)], axis=0)

    def heads_swapped(w):                    # rotate-half column permutation
        blocks = []
        for h in range(H):
            blk = w[:, h * D:(h + 1) * D]
            blocks.append(jnp.concatenate([blk[:, D // 2:], blk[:, :D // 2]],
                                          axis=1))
        return jnp.stack(blocks, axis=0)

    groups = []
    for i in range(L):
        wq, wk, wv = params["q"][i], params["k"][i], params["v"][i]
        groups += [heads_of(wq), heads_swapped(wq),
                   heads_of(wk), heads_swapped(wk), heads_of(wv)]
    wproj = jnp.stack(groups, axis=0).astype(jnp.bfloat16)       # (L*5, H, E, D)
    wout = jnp.stack([params["out"][h * D:(h + 1) * D, :] for h in range(H)],
                     axis=0).astype(jnp.bfloat16)                 # (H, D, E)

    # Per-layer RMSNorm weight with lambda folded in (RMSNorm is linear in its
    # weight), head-major for in-kernel broadcasting.
    lnw = jnp.stack([(params["ln"][i] * lam[i]).reshape(H, 1, D)
                     for i in range(L)], axis=0)                  # (L, H, 1, D)
    flnw = params["final_ln"].reshape(H, 1, D)

    # Sign-folded rotary tables at head width: [c, c] / [-s, s].
    c = cos[:max_tk]
    s = sin[:max_tk]
    cw = jnp.concatenate([c, c], axis=-1)                         # (max_tk, D)
    sw = jnp.concatenate([-s, s], axis=-1)

    # Batch folded into one kernel step; x passed token-major (projections)
    # and head-major with alpha folded in (residual) -> no in-kernel transposes.
    x2d = x.reshape(B * T, E)
    xhd = (params["alpha"][0]
           * x.reshape(B, T, H, D).transpose(0, 2, 1, 3).reshape(B * H, T, D))

    kernel = functools.partial(
        _fused_forward_kernel, num_layers=L, num_heads=H, head_dim=D,
        batch=B, seq=T, scale=scale, eps=1e-5)

    vmem = pl.BlockSpec(memory_space=pltpu.MemorySpace.VMEM)
    out_dense = pl.pallas_call(
        kernel,
        out_shape=jax.ShapeDtypeStruct((T, B * E), x.dtype),
        in_specs=[vmem] * 8,
        out_specs=vmem,
        scratch_shapes=[
            pltpu.VMEM((B * H, max_tk, D), jnp.float32),   # rotated-K cache
            pltpu.VMEM((B * H, max_tk, D), jnp.float32),   # swap(rotated-K) cache
            pltpu.VMEM((B * H, max_tk, D), jnp.float32),   # V cache
        ],
    )(x2d, xhd, wproj, wout, lnw, flnw, cw, sw)
    # TODO(synk): for large B reintroduce a "parallel" batch grid axis (2 TCs on
    # v7x); for large T/E add q/kv grid axes with online softmax and size the
    # bf16 KV-cache tiles to fit v7x's 64 MiB VMEM.

    # Undo the lane-dense (T, B*E) store layout -> (B, T, E).
    return out_dense.reshape(T, B, E).transpose(1, 0, 2)


# ---------------------------------------------------------------------------
# Main
# ---------------------------------------------------------------------------

if __name__ == "__main__":
    B, T, E, NH = 2, 8, 64, 2              # batch, seq, embed, heads
    HD = E // NH                           # head_dim = 32 (model_parallel_size=1)
    num_layers = 3

    key = jax.random.PRNGKey(0)
    kx, kp = jax.random.split(key)
    x = jax.random.normal(kx, (B, T, E), jnp.float32)
    params = init_params(kp, E, num_layers)

    # rotary tables covering the accumulated KV length (grows to 4*T)
    max_len = T * (2 ** (num_layers - 1))
    inv_freq = 1.0 / (10000.0 ** (jnp.arange(0, HD, 2, dtype=jnp.float32) / HD))
    t = jnp.arange(max_len, dtype=jnp.float32)
    freqs = jnp.outer(t, inv_freq)          # (max_len, HD // 2)
    rel_pos = (jnp.cos(freqs), jnp.sin(freqs))

    fwd = jax.jit(functools.partial(forward, num_heads=NH, head_dim=HD))
    out = fwd(params, x, rel_pos)
    jax.block_until_ready(out)
    assert out.shape == (B, T, E)
    print("KERNEL_OK")
</pallas_src>

<mosaic_0001>
module attributes {stable_mosaic.version = 11 : i64} {
  func.func @_fused_forward_kernel(%arg0: memref<16x64xf32, #tpu.memory_space<vmem>>, %arg1: memref<4x8x32xf32, #tpu.memory_space<vmem>>, %arg2: memref<15x2x64x32xbf16, #tpu.memory_space<vmem>>, %arg3: memref<2x32x64xbf16, #tpu.memory_space<vmem>>, %arg4: memref<3x2x1x32xf32, #tpu.memory_space<vmem>>, %arg5: memref<2x1x32xf32, #tpu.memory_space<vmem>>, %arg6: memref<32x32xf32, #tpu.memory_space<vmem>>, %arg7: memref<32x32xf32, #tpu.memory_space<vmem>>, %arg8: memref<8x128xf32, #tpu.memory_space<vmem>>, %arg9: memref<4x32x32xf32, #tpu.memory_space<vmem>>, %arg10: memref<4x32x32xf32, #tpu.memory_space<vmem>>, %arg11: memref<4x32x32xf32, #tpu.memory_space<vmem>>) attributes {dimension_semantics = [], scalar_prefetch = 0 : i64, scratch_operands = 3 : i64, tpu.core_type = #tpu.core_type<tc>} {
    %c0 = arith.constant 0 : index
    %c0_0 = arith.constant 0 : index
    %0 = vector.load %arg0[%c0, %c0_0] : memref<16x64xf32, #tpu.memory_space<vmem>>, vector<16x64xf32>
    %1 = arith.truncf %0 : vector<16x64xf32> to vector<16x64xbf16>
    %2 = vector.shape_cast %1 : vector<16x64xbf16> to vector<1x16x64xbf16>
    %3 = vector.shape_cast %2 : vector<1x16x64xbf16> to vector<1x16x64xbf16>
    %4 = vector.broadcast %3 : vector<1x16x64xbf16> to vector<2x16x64xbf16>
    %c0_1 = arith.constant 0 : index
    %c0_2 = arith.constant 0 : index
    %5 = vector.load %arg6[%c0_1, %c0_2] : memref<32x32xf32, #tpu.memory_space<vmem>>, vector<8x32xf32>
    %6 = vector.shape_cast %5 : vector<8x32xf32> to vector<1x8x32xf32>
    %c0_3 = arith.constant 0 : index
    %c0_4 = arith.constant 0 : index
    %7 = vector.load %arg7[%c0_3, %c0_4] : memref<32x32xf32, #tpu.memory_space<vmem>>, vector<8x32xf32>
    %8 = vector.shape_cast %7 : vector<8x32xf32> to vector<1x8x32xf32>
    %cst = arith.constant 0.000000e+00 : f32
    %9 = vector.broadcast %cst : f32 to vector<2x8x32xf32>
    %cst_5 = arith.constant 0.000000e+00 : f32
    %10 = vector.broadcast %cst_5 : f32 to vector<2x8x32xf32>
    %c0_6 = arith.constant 0 : index
    %c0_7 = arith.constant 0 : index
    %c0_8 = arith.constant 0 : index
    %c0_9 = arith.constant 0 : index
    %11 = vector.load %arg2[%c0_6, %c0_7, %c0_8, %c0_9] : memref<15x2x64x32xbf16, #tpu.memory_space<vmem>>, vector<1x2x64x32xbf16>
    %12 = vector.shape_cast %11 : vector<1x2x64x32xbf16> to vector<2x64x32xbf16>
    %cst_10 = arith.constant dense<0.000000e+00> : vector<2x16x32xf32>
    %13 = tpu.matmul %4, %12, %cst_10 {dimension_numbers = #tpu.dot_dimension_numbers<[2], [1], [1], [2], [0, 0, 0, 1, 1, 2], [0], [0]>} : vector<2x16x64xbf16>, vector<2x64x32xbf16>, vector<2x16x32xf32> -> vector<2x16x32xf32>
    %c1 = arith.constant 1 : index
    %c0_11 = arith.constant 0 : index
    %c0_12 = arith.constant 0 : index
    %c0_13 = arith.constant 0 : index
    %14 = vector.load %arg2[%c1, %c0_11, %c0_12, %c0_13] : memref<15x2x64x32xbf16, #tpu.memory_space<vmem>>, vector<1x2x64x32xbf16>
    %15 = vector.shape_cast %14 : vector<1x2x64x32xbf16> to vector<2x64x32xbf16>
    %cst_14 = arith.constant dense<0.000000e+00> : vector<2x16x32xf32>
    %16 = tpu.matmul %4, %15, %cst_14 {dimension_numbers = #tpu.dot_dimension_numbers<[2], [1], [1], [2], [0, 0, 0, 1, 1, 2], [0], [0]>} : vector<2x16x64xbf16>, vector<2x64x32xbf16>, vector<2x16x32xf32> -> vector<2x16x32xf32>
    %c2 = arith.constant 2 : index
    %c0_15 = arith.constant 0 : index
    %c0_16 = arith.constant 0 : index
    %c0_17 = arith.constant 0 : index
    %17 = vector.load %arg2[%c2, %c0_15, %c0_16, %c0_17] : memref<15x2x64x32xbf16, #tpu.memory_space<vmem>>, vector<1x2x64x32xbf16>
    %18 = vector.shape_cast %17 : vector<1x2x64x32xbf16> to vector<2x64x32xbf16>
    %cst_18 = arith.constant dense<0.000000e+00> : vector<2x16x32xf32>
    %19 = tpu.matmul %4, %18, %cst_18 {dimension_numbers = #tpu.dot_dimension_numbers<[2], [1], [1], [2], [0, 0, 0, 1, 1, 2], [0], [0]>} : vector<2x16x64xbf16>, vector<2x64x32xbf16>, vector<2x16x32xf32> -> vector<2x16x32xf32>
    %c3 = arith.constant 3 : index
    %c0_19 = arith.constant 0 : index
    %c0_20 = arith.constant 0 : index
    %c0_21 = arith.constant 0 : index
    %20 = vector.load %arg2[%c3, %c0_19, %c0_20, %c0_21] : memref<15x2x64x32xbf16, #tpu.memory_space<vmem>>, vector<1x2x64x32xbf16>
    %21 = vector.shape_cast %20 : vector<1x2x64x32xbf16> to vector<2x64x32xbf16>
    %cst_22 = arith.constant dense<0.000000e+00> : vector<2x16x32xf32>
    %22 = tpu.matmul %4, %21, %cst_22 {dimension_numbers = #tpu.dot_dimension_numbers<[2], [1], [1], [2], [0, 0, 0, 1, 1, 2], [0], [0]>} : vector<2x16x64xbf16>, vector<2x64x32xbf16>, vector<2x16x32xf32> -> vector<2x16x32xf32>
    %c4 = arith.constant 4 : index
    %c0_23 = arith.constant 0 : index
    %c0_24 = arith.constant 0 : index
    %c0_25 = arith.constant 0 : index
    %23 = vector.load %arg2[%c4, %c0_23, %c0_24, %c0_25] : memref<15x2x64x32xbf16, #tpu.memory_space<vmem>>, vector<1x2x64x32xbf16>
    %24 = vector.shape_cast %23 : vector<1x2x64x32xbf16> to vector<2x64x32xbf16>
    %cst_26 = arith.constant dense<0.000000e+00> : vector<2x16x32xf32>
    %25 = tpu.matmul %4, %24, %cst_26 {dimension_numbers = #tpu.dot_dimension_numbers<[2], [1], [1], [2], [0, 0, 0, 1, 1, 2], [0], [0]>} : vector<2x16x64xbf16>, vector<2x64x32xbf16>, vector<2x16x32xf32> -> vector<2x16x32xf32>
    %c0_27 = arith.constant 0 : index
    %c0_28 = arith.constant 0 : index
    %26 = vector.load %arg6[%c0_27, %c0_28] : memref<32x32xf32, #tpu.memory_space<vmem>>, vector<8x32xf32>
    %27 = vector.shape_cast %26 : vector<8x32xf32> to vector<1x8x32xf32>
    %c0_29 = arith.constant 0 : index
    %c0_30 = arith.constant 0 : index
    %28 = vector.load %arg7[%c0_29, %c0_30] : memref<32x32xf32, #tpu.memory_space<vmem>>, vector<8x32xf32>
    %29 = vector.shape_cast %28 : vector<8x32xf32> to vector<1x8x32xf32>
    %c0_31 = arith.constant 0 : index
    %c0_32 = arith.constant 0 : index
    %c0_33 = arith.constant 0 : index
    %c0_34 = arith.constant 0 : index
    %30 = vector.load %arg4[%c0_31, %c0_32, %c0_33, %c0_34] : memref<3x2x1x32xf32, #tpu.memory_space<vmem>>, vector<1x2x1x32xf32>
    %31 = vector.shape_cast %30 : vector<1x2x1x32xf32> to vector<2x1x32xf32>
    %32 = tpu.iota {dimensions = array<i32: 0>} : vector<8x8xi32>
    %33 = tpu.iota {dimensions = array<i32: 1>} : vector<8x8xi32>
    %c0_i32 = arith.constant 0 : i32
    %34 = vector.broadcast %c0_i32 : i32 to vector<8x8xi32>
    %35 = arith.addi %32, %34 : vector<8x8xi32>
    %36 = arith.cmpi sle, %33, %35 : vector<8x8xi32>
    %cst_35 = arith.constant 0.000000e+00 : f32
    %cst_36 = arith.constant -1.000000e+30 : f32
    %37 = vector.broadcast %cst_35 : f32 to vector<8x8xf32>
    %38 = vector.broadcast %cst_36 : f32 to vector<8x8xf32>
    %39 = arith.select %36, %37, %38 : vector<8x8xi1>, vector<8x8xf32>
    %40 = vector.shape_cast %39 : vector<8x8xf32> to vector<1x8x8xf32>
    %41 = vector.extract_strided_slice %19 {offsets = [0, 0, 0], sizes = [2, 8, 32], strides = [1, 1, 1]} : vector<2x16x32xf32> to vector<2x8x32xf32>
    %c0_37 = arith.constant 0 : index
    %c0_38 = arith.constant 0 : index
    %c0_39 = arith.constant 0 : index
    %42 = vector.load %arg9[%c0_37, %c0_38, %c0_39] : memref<4x32x32xf32, #tpu.memory_space<vmem>>, vector<2x8x32xf32>
    tpu.vector_store %arg9[%c0_37, %c0_38, %c0_39], %41 {strides = array<i32>} : memref<4x32x32xf32, #tpu.memory_space<vmem>>, vector<2x8x32xf32>,
    %43 = vector.extract_strided_slice %22 {offsets = [0, 0, 0], sizes = [2, 8, 32], strides = [1, 1, 1]} : vector<2x16x32xf32> to vector<2x8x32xf32>
    %c0_40 = arith.constant 0 : index
    %c0_41 = arith.constant 0 : index
    %c0_42 = arith.constant 0 : index
    %44 = vector.load %arg10[%c0_40, %c0_41, %c0_42] : memref<4x32x32xf32, #tpu.memory_space<vmem>>, vector<2x8x32xf32>
    tpu.vector_store %arg10[%c0_40, %c0_41, %c0_42], %43 {strides = array<i32>} : memref<4x32x32xf32, #tpu.memory_space<vmem>>, vector<2x8x32xf32>,
    %45 = vector.extract_strided_slice %25 {offsets = [0, 0, 0], sizes = [2, 8, 32], strides = [1, 1, 1]} : vector<2x16x32xf32> to vector<2x8x32xf32>
    %c0_43 = arith.constant 0 : index
    %c0_44 = arith.constant 0 : index
    %c0_45 = arith.constant 0 : index
    %46 = vector.load %arg11[%c0_43, %c0_44, %c0_45] : memref<4x32x32xf32, #tpu.memory_space<vmem>>, vector<2x8x32xf32>
    tpu.vector_store %arg11[%c0_43, %c0_44, %c0_45], %45 {strides = array<i32>} : memref<4x32x32xf32, #tpu.memory_space<vmem>>, vector<2x8x32xf32>,
    %c0_46 = arith.constant 0 : index
    %c0_47 = arith.constant 0 : index
    %c0_48 = arith.constant 0 : index
    %47 = vector.load %arg9[%c0_46, %c0_47, %c0_48] : memref<4x32x32xf32, #tpu.memory_space<vmem>>, vector<2x8x32xf32>
    %c0_49 = arith.constant 0 : index
    %c0_50 = arith.constant 0 : index
    %c0_51 = arith.constant 0 : index
    %48 = vector.load %arg10[%c0_49, %c0_50, %c0_51] : memref<4x32x32xf32, #tpu.memory_space<vmem>>, vector<2x8x32xf32>
    %c0_52 = arith.constant 0 : index
    %c0_53 = arith.constant 0 : index
    %c0_54 = arith.constant 0 : index
    %49 = vector.load %arg11[%c0_52, %c0_53, %c0_54] : memref<4x32x32xf32, #tpu.memory_space<vmem>>, vector<2x8x32xf32>
    %50 = vector.extract_strided_slice %13 {offsets = [0, 0, 0], sizes = [2, 8, 32], strides = [1, 1, 1]} : vector<2x16x32xf32> to vector<2x8x32xf32>
    %51 = vector.broadcast %6 : vector<1x8x32xf32> to vector<2x8x32xf32>
    %52 = arith.mulf %50, %51 : vector<2x8x32xf32>
    %53 = vector.extract_strided_slice %16 {offsets = [0, 0, 0], sizes = [2, 8, 32], strides = [1, 1, 1]} : vector<2x16x32xf32> to vector<2x8x32xf32>
    %54 = vector.broadcast %8 : vector<1x8x32xf32> to vector<2x8x32xf32>
    %55 = arith.mulf %53, %54 : vector<2x8x32xf32>
    %56 = arith.addf %52, %55 : vector<2x8x32xf32>
    %57 = vector.broadcast %27 : vector<1x8x32xf32> to vector<2x8x32xf32>
    %58 = arith.mulf %47, %57 : vector<2x8x32xf32>
    %59 = vector.broadcast %29 : vector<1x8x32xf32> to vector<2x8x32xf32>
    %60 = arith.mulf %48, %59 : vector<2x8x32xf32>
    %61 = arith.addf %58, %60 : vector<2x8x32xf32>
    %c0_55 = arith.constant 0 : index
    %c8 = arith.constant 8 : index
    %c0_56 = arith.constant 0 : index
    %62 = vector.load %arg9[%c0_55, %c8, %c0_56] : memref<4x32x32xf32, #tpu.memory_space<vmem>>, vector<2x8x32xf32>
    tpu.vector_store %arg9[%c0_55, %c8, %c0_56], %61 {strides = array<i32>} : memref<4x32x32xf32, #tpu.memory_space<vmem>>, vector<2x8x32xf32>,
    %63 = vector.broadcast %27 : vector<1x8x32xf32> to vector<2x8x32xf32>
    %64 = arith.mulf %48, %63 : vector<2x8x32xf32>
    %65 = vector.broadcast %29 : vector<1x8x32xf32> to vector<2x8x32xf32>
    %66 = arith.mulf %47, %65 : vector<2x8x32xf32>
    %67 = arith.subf %64, %66 : vector<2x8x32xf32>
    %c0_57 = arith.constant 0 : index
    %c8_58 = arith.constant 8 : index
    %c0_59 = arith.constant 0 : index
    %68 = vector.load %arg10[%c0_57, %c8_58, %c0_59] : memref<4x32x32xf32, #tpu.memory_space<vmem>>, vector<2x8x32xf32>
    tpu.vector_store %arg10[%c0_57, %c8_58, %c0_59], %67 {strides = array<i32>} : memref<4x32x32xf32, #tpu.memory_space<vmem>>, vector<2x8x32xf32>,
    %c0_60 = arith.constant 0 : index
    %c8_61 = arith.constant 8 : index
    %c0_62 = arith.constant 0 : index
    %69 = vector.load %arg11[%c0_60, %c8_61, %c0_62] : memref<4x32x32xf32, #tpu.memory_space<vmem>>, vector<2x8x32xf32>
    tpu.vector_store %arg11[%c0_60, %c8_61, %c0_62], %49 {strides = array<i32>} : memref<4x32x32xf32, #tpu.memory_space<vmem>>, vector<2x8x32xf32>,
    %70 = arith.truncf %56 : vector<2x8x32xf32> to vector<2x8x32xbf16>
    %71 = arith.truncf %61 : vector<2x8x32xf32> to vector<2x8x32xbf16>
    %cst_63 = arith.constant dense<0.000000e+00> : vector<2x8x8xf32>
    %72 = tpu.matmul %70, %71, %cst_63 {dimension_numbers = #tpu.dot_dimension_numbers<[2], [2], [1], [1], [0, 0, 0, 1, 1, 1], [0], [0]>} : vector<2x8x32xbf16>, vector<2x8x32xbf16>, vector<2x8x8xf32> -> vector<2x8x8xf32>
    %cst_64 = arith.constant 0.176776692 : f32
    %73 = vector.broadcast %cst_64 : f32 to vector<2x8x8xf32>
    %74 = arith.mulf %72, %73 : vector<2x8x8xf32>
    %75 = vector.broadcast %40 : vector<1x8x8xf32> to vector<2x8x8xf32>
    %76 = arith.addf %74, %75 : vector<2x8x8xf32>
    %cst_65 = arith.constant dense<0xFF800000> : vector<2x8xf32>
    %77 = vector.multi_reduction <maximumf>, %76, %cst_65 [2] : vector<2x8x8xf32> to vector<2x8xf32>
    %78 = vector.shape_cast %77 : vector<2x8xf32> to vector<2x8x1xf32>
    %79 = vector.broadcast %78 : vector<2x8x1xf32> to vector<2x8x8xf32>
    %80 = arith.subf %76, %79 : vector<2x8x8xf32>
    %81 = math.exp %80 : vector<2x8x8xf32>
    %cst_66 = arith.constant dense<0.000000e+00> : vector<2x8xf32>
    %82 = vector.multi_reduction <add>, %81, %cst_66 [2] : vector<2x8x8xf32> to vector<2x8xf32>
    %83 = vector.shape_cast %82 : vector<2x8xf32> to vector<2x8x1xf32>
    %84 = arith.truncf %81 : vector<2x8x8xf32> to vector<2x8x8xbf16>
    %85 = arith.truncf %49 : vector<2x8x32xf32> to vector<2x8x32xbf16>
    %cst_67 = arith.constant dense<0.000000e+00> : vector<2x8x32xf32>
    %86 = tpu.matmul %84, %85, %cst_67 {dimension_numbers = #tpu.dot_dimension_numbers<[2], [1], [1], [2], [0, 0, 0, 1, 1, 2], [0], [0]>} : vector<2x8x8xbf16>, vector<2x8x32xbf16>, vector<2x8x32xf32> -> vector<2x8x32xf32>
    %87 = tpu.reciprocal %83 : vector<2x8x1xf32> -> vector<2x8x1xf32>
    %88 = vector.broadcast %87 : vector<2x8x1xf32> to vector<2x8x32xf32>
    %89 = arith.mulf %86, %88 : vector<2x8x32xf32>
    %90 = arith.mulf %89, %89 : vector<2x8x32xf32>
    %cst_68 = arith.constant dense<0.000000e+00> : vector<2x8xf32>
    %91 = vector.multi_reduction <add>, %90, %cst_68 [2] : vector<2x8x32xf32> to vector<2x8xf32>
    %92 = vector.shape_cast %91 : vector<2x8xf32> to vector<2x8x1xf32>
    %cst_69 = arith.constant dense<0.000000e+00> : vector<8x1xf32>
    %93 = vector.multi_reduction <add>, %92, %cst_69 [0] : vector<2x8x1xf32> to vector<8x1xf32>
    %94 = vector.shape_cast %93 : vector<8x1xf32> to vector<1x8x1xf32>
    %cst_70 = arith.constant 6.400000e+01 : f32
    %95 = vector.broadcast %cst_70 : f32 to vector<1x8x1xf32>
    %96 = arith.divf %94, %95 : vector<1x8x1xf32>
    %cst_71 = arith.constant 9.99999974E-6 : f32
    %97 = vector.broadcast %cst_71 : f32 to vector<1x8x1xf32>
    %98 = arith.addf %96, %97 : vector<1x8x1xf32>
    %99 = math.rsqrt %98 : vector<1x8x1xf32>
    %100 = vector.broadcast %99 : vector<1x8x1xf32> to vector<2x8x32xf32>
    %101 = arith.mulf %89, %100 : vector<2x8x32xf32>
    %102 = vector.broadcast %31 : vector<2x1x32xf32> to vector<2x8x32xf32>
    %103 = arith.mulf %101, %102 : vector<2x8x32xf32>
    %104 = arith.addf %9, %103 : vector<2x8x32xf32>
    %105 = vector.extract_strided_slice %19 {offsets = [0, 8, 0], sizes = [2, 8, 32], strides = [1, 1, 1]} : vector<2x16x32xf32> to vector<2x8x32xf32>
    %c2_72 = arith.constant 2 : index
    %c0_73 = arith.constant 0 : index
    %c0_74 = arith.constant 0 : index
    %106 = vector.load %arg9[%c2_72, %c0_73, %c0_74] : memref<4x32x32xf32, #tpu.memory_space<vmem>>, vector<2x8x32xf32>
    tpu.vector_store %arg9[%c2_72, %c0_73, %c0_74], %105 {strides = array<i32>} : memref<4x32x32xf32, #tpu.memory_space<vmem>>, vector<2x8x32xf32>,
    %107 = vector.extract_strided_slice %22 {offsets = [0, 8, 0], sizes = [2, 8, 32], strides = [1, 1, 1]} : vector<2x16x32xf32> to vector<2x8x32xf32>
    %c2_75 = arith.constant 2 : index
    %c0_76 = arith.constant 0 : index
    %c0_77 = arith.constant 0 : index
    %108 = vector.load %arg10[%c2_75, %c0_76, %c0_77] : memref<4x32x32xf32, #tpu.memory_space<vmem>>, vector<2x8x32xf32>
    tpu.vector_store %arg10[%c2_75, %c0_76, %c0_77], %107 {strides = array<i32>} : memref<4x32x32xf32, #tpu.memory_space<vmem>>, vector<2x8x32xf32>,
    %109 = vector.extract_strided_slice %25 {offsets = [0, 8, 0], sizes = [2, 8, 32], strides = [1, 1, 1]} : vector<2x16x32xf32> to vector<2x8x32xf32>
    %c2_78 = arith.constant 2 : index
    %c0_79 = arith.constant 0 : index
    %c0_80 = arith.constant 0 : index
    %110 = vector.load %arg11[%c2_78, %c0_79, %c0_80] : memref<4x32x32xf32, #tpu.memory_space<vmem>>, vector<2x8x32xf32>
    tpu.vector_store %arg11[%c2_78, %c0_79, %c0_80], %109 {strides = array<i32>} : memref<4x32x32xf32, #tpu.memory_space<vmem>>, vector<2x8x32xf32>,
    %c2_81 = arith.constant 2 : index
    %c0_82 = arith.constant 0 : index
    %c0_83 = arith.constant 0 : index
    %111 = vector.load %arg9[%c2_81, %c0_82, %c0_83] : memref<4x32x32xf32, #tpu.memory_space<vmem>>, vector<2x8x32xf32>
    %c2_84 = arith.constant 2 : index
    %c0_85 = arith.constant 0 : index
    %c0_86 = arith.constant 0 : index
    %112 = vector.load %arg10[%c2_84, %c0_85, %c0_86] : memref<4x32x32xf32, #tpu.memory_space<vmem>>, vector<2x8x32xf32>
    %c2_87 = arith.constant 2 : index
    %c0_88 = arith.constant 0 : index
    %c0_89 = arith.constant 0 : index
    %113 = vector.load %arg11[%c2_87, %c0_88, %c0_89] : memref<4x32x32xf32, #tpu.memory_space<vmem>>, vector<2x8x32xf32>
    %114 = vector.extract_strided_slice %13 {offsets = [0, 8, 0], sizes = [2, 8, 32], strides = [1, 1, 1]} : vector<2x16x32xf32> to vector<2x8x32xf32>
    %115 = vector.broadcast %6 : vector<1x8x32xf32> to vector<2x8x32xf32>
    %116 = arith.mulf %114, %115 : vector<2x8x32xf32>
    %117 = vector.extract_strided_slice %16 {offsets = [0, 8, 0], sizes = [2, 8, 32], strides = [1, 1, 1]} : vector<2x16x32xf32> to vector<2x8x32xf32>
    %118 = vector.broadcast %8 : vector<1x8x32xf32> to vector<2x8x32xf32>
    %119 = arith.mulf %117, %118 : vector<2x8x32xf32>
    %120 = arith.addf %116, %119 : vector<2x8x32xf32>
    %121 = vector.broadcast %27 : vector<1x8x32xf32> to vector<2x8x32xf32>
    %122 = arith.mulf %111, %121 : vector<2x8x32xf32>
    %123 = vector.broadcast %29 : vector<1x8x32xf32> to vector<2x8x32xf32>
    %124 = arith.mulf %112, %123 : vector<2x8x32xf32>
    %125 = arith.addf %122, %124 : vector<2x8x32xf32>
    %c2_90 = arith.constant 2 : index
    %c8_91 = arith.constant 8 : index
    %c0_92 = arith.constant 0 : index
    %126 = vector.load %arg9[%c2_90, %c8_91, %c0_92] : memref<4x32x32xf32, #tpu.memory_space<vmem>>, vector<2x8x32xf32>
    tpu.vector_store %arg9[%c2_90, %c8_91, %c0_92], %125 {strides = array<i32>} : memref<4x32x32xf32, #tpu.memory_space<vmem>>, vector<2x8x32xf32>,
    %127 = vector.broadcast %27 : vector<1x8x32xf32> to vector<2x8x32xf32>
    %128 = arith.mulf %112, %127 : vector<2x8x32xf32>
    %129 = vector.broadcast %29 : vector<1x8x32xf32> to vector<2x8x32xf32>
    %130 = arith.mulf %111, %129 : vector<2x8x32xf32>
    %131 = arith.subf %128, %130 : vector<2x8x32xf32>
    %c2_93 = arith.constant 2 : index
    %c8_94 = arith.constant 8 : index
    %c0_95 = arith.constant 0 : index
    %132 = vector.load %arg10[%c2_93, %c8_94, %c0_95] : memref<4x32x32xf32, #tpu.memory_space<vmem>>, vector<2x8x32xf32>
    tpu.vector_store %arg10[%c2_93, %c8_94, %c0_95], %131 {strides = array<i32>} : memref<4x32x32xf32, #tpu.memory_space<vmem>>, vector<2x8x32xf32>,
    %c2_96 = arith.constant 2 : index
    %c8_97 = arith.constant 8 : index
    %c0_98 = arith.constant 0 : index
    %133 = vector.load %arg11[%c2_96, %c8_97, %c0_98] : memref<4x32x32xf32, #tpu.memory_space<vmem>>, vector<2x8x32xf32>
    tpu.vector_store %arg11[%c2_96, %c8_97, %c0_98], %113 {strides = array<i32>} : memref<4x32x32xf32, #tpu.memory_space<vmem>>, vector<2x8x32xf32>,
    %134 = arith.truncf %120 : vector<2x8x32xf32> to vector<2x8x32xbf16>
    %135 = arith.truncf %125 : vector<2x8x32xf32> to vector<2x8x32xbf16>
    %cst_99 = arith.constant dense<0.000000e+00> : vector<2x8x8xf32>
    %136 = tpu.matmul %134, %135, %cst_99 {dimension_numbers = #tpu.dot_dimension_numbers<[2], [2], [1], [1], [0, 0, 0, 1, 1, 1], [0], [0]>} : vector<2x8x32xbf16>, vector<2x8x32xbf16>, vector<2x8x8xf32> -> vector<2x8x8xf32>
    %cst_100 = arith.constant 0.176776692 : f32
    %137 = vector.broadcast %cst_100 : f32 to vector<2x8x8xf32>
    %138 = arith.mulf %136, %137 : vector<2x8x8xf32>
    %139 = vector.broadcast %40 : vector<1x8x8xf32> to vector<2x8x8xf32>
    %140 = arith.addf %138, %139 : vector<2x8x8xf32>
    %cst_101 = arith.constant dense<0xFF800000> : vector<2x8xf32>
    %141 = vector.multi_reduction <maximumf>, %140, %cst_101 [2] : vector<2x8x8xf32> to vector<2x8xf32>
    %142 = vector.shape_cast %141 : vector<2x8xf32> to vector<2x8x1xf32>
    %143 = vector.broadcast %142 : vector<2x8x1xf32> to vector<2x8x8xf32>
    %144 = arith.subf %140, %143 : vector<2x8x8xf32>
    %145 = math.exp %144 : vector<2x8x8xf32>
    %cst_102 = arith.constant dense<0.000000e+00> : vector<2x8xf32>
    %146 = vector.multi_reduction <add>, %145, %cst_102 [2] : vector<2x8x8xf32> to vector<2x8xf32>
    %147 = vector.shape_cast %146 : vector<2x8xf32> to vector<2x8x1xf32>
    %148 = arith.truncf %145 : vector<2x8x8xf32> to vector<2x8x8xbf16>
    %149 = arith.truncf %113 : vector<2x8x32xf32> to vector<2x8x32xbf16>
    %cst_103 = arith.constant dense<0.000000e+00> : vector<2x8x32xf32>
    %150 = tpu.matmul %148, %149, %cst_103 {dimension_numbers = #tpu.dot_dimension_numbers<[2], [1], [1], [2], [0, 0, 0, 1, 1, 2], [0], [0]>} : vector<2x8x8xbf16>, vector<2x8x32xbf16>, vector<2x8x32xf32> -> vector<2x8x32xf32>
    %151 = tpu.reciprocal %147 : vector<2x8x1xf32> -> vector<2x8x1xf32>
    %152 = vector.broadcast %151 : vector<2x8x1xf32> to vector<2x8x32xf32>
    %153 = arith.mulf %150, %152 : vector<2x8x32xf32>
    %154 = arith.mulf %153, %153 : vector<2x8x32xf32>
    %cst_104 = arith.constant dense<0.000000e+00> : vector<2x8xf32>
    %155 = vector.multi_reduction <add>, %154, %cst_104 [2] : vector<2x8x32xf32> to vector<2x8xf32>
    %156 = vector.shape_cast %155 : vector<2x8xf32> to vector<2x8x1xf32>
    %cst_105 = arith.constant dense<0.000000e+00> : vector<8x1xf32>
    %157 = vector.multi_reduction <add>, %156, %cst_105 [0] : vector<2x8x1xf32> to vector<8x1xf32>
    %158 = vector.shape_cast %157 : vector<8x1xf32> to vector<1x8x1xf32>
    %cst_106 = arith.constant 6.400000e+01 : f32
    %159 = vector.broadcast %cst_106 : f32 to vector<1x8x1xf32>
    %160 = arith.divf %158, %159 : vector<1x8x1xf32>
    %cst_107 = arith.constant 9.99999974E-6 : f32
    %161 = vector.broadcast %cst_107 : f32 to vector<1x8x1xf32>
    %162 = arith.addf %160, %161 : vector<1x8x1xf32>
    %163 = math.rsqrt %162 : vector<1x8x1xf32>
    %164 = vector.broadcast %163 : vector<1x8x1xf32> to vector<2x8x32xf32>
    %165 = arith.mulf %153, %164 : vector<2x8x32xf32>
    %166 = vector.broadcast %31 : vector<2x1x32xf32> to vector<2x8x32xf32>
    %167 = arith.mulf %165, %166 : vector<2x8x32xf32>
    %168 = arith.addf %10, %167 : vector<2x8x32xf32>
    %c5 = arith.constant 5 : index
    %c0_108 = arith.constant 0 : index
    %c0_109 = arith.constant 0 : index
    %c0_110 = arith.constant 0 : index
    %169 = vector.load %arg2[%c5, %c0_108, %c0_109, %c0_110] : memref<15x2x64x32xbf16, #tpu.memory_space<vmem>>, vector<1x2x64x32xbf16>
    %170 = vector.shape_cast %169 : vector<1x2x64x32xbf16> to vector<2x64x32xbf16>
    %cst_111 = arith.constant dense<0.000000e+00> : vector<2x16x32xf32>
    %171 = tpu.matmul %4, %170, %cst_111 {dimension_numbers = #tpu.dot_dimension_numbers<[2], [1], [1], [2], [0, 0, 0, 1, 1, 2], [0], [0]>} : vector<2x16x64xbf16>, vector<2x64x32xbf16>, vector<2x16x32xf32> -> vector<2x16x32xf32>
    %c6 = arith.constant 6 : index
    %c0_112 = arith.constant 0 : index
    %c0_113 = arith.constant 0 : index
    %c0_114 = arith.constant 0 : index
    %172 = vector.load %arg2[%c6, %c0_112, %c0_113, %c0_114] : memref<15x2x64x32xbf16, #tpu.memory_space<vmem>>, vector<1x2x64x32xbf16>
    %173 = vector.shape_cast %172 : vector<1x2x64x32xbf16> to vector<2x64x32xbf16>
    %cst_115 = arith.constant dense<0.000000e+00> : vector<2x16x32xf32>
    %174 = tpu.matmul %4, %173, %cst_115 {dimension_numbers = #tpu.dot_dimension_numbers<[2], [1], [1], [2], [0, 0, 0, 1, 1, 2], [0], [0]>} : vector<2x16x64xbf16>, vector<2x64x32xbf16>, vector<2x16x32xf32> -> vector<2x16x32xf32>
    %c7 = arith.constant 7 : index
    %c0_116 = arith.constant 0 : index
    %c0_117 = arith.constant 0 : index
    %c0_118 = arith.constant 0 : index
    %175 = vector.load %arg2[%c7, %c0_116, %c0_117, %c0_118] : memref<15x2x64x32xbf16, #tpu.memory_space<vmem>>, vector<1x2x64x32xbf16>
    %176 = vector.shape_cast %175 : vector<1x2x64x32xbf16> to vector<2x64x32xbf16>
    %cst_119 = arith.constant dense<0.000000e+00> : vector<2x16x32xf32>
    %177 = tpu.matmul %4, %176, %cst_119 {dimension_numbers = #tpu.dot_dimension_numbers<[2], [1], [1], [2], [0, 0, 0, 1, 1, 2], [0], [0]>} : vector<2x16x64xbf16>, vector<2x64x32xbf16>, vector<2x16x32xf32> -> vector<2x16x32xf32>
    %c8_120 = arith.constant 8 : index
    %c0_121 = arith.constant 0 : index
    %c0_122 = arith.constant 0 : index
    %c0_123 = arith.constant 0 : index
    %178 = vector.load %arg2[%c8_120, %c0_121, %c0_122, %c0_123] : memref<15x2x64x32xbf16, #tpu.memory_space<vmem>>, vector<1x2x64x32xbf16>
    %179 = vector.shape_cast %178 : vector<1x2x64x32xbf16> to vector<2x64x32xbf16>
    %cst_124 = arith.constant dense<0.000000e+00> : vector<2x16x32xf32>
    %180 = tpu.matmul %4, %179, %cst_124 {dimension_numbers = #tpu.dot_dimension_numbers<[2], [1], [1], [2], [0, 0, 0, 1, 1, 2], [0], [0]>} : vector<2x16x64xbf16>, vector<2x64x32xbf16>, vector<2x16x32xf32> -> vector<2x16x32xf32>
    %c9 = arith.constant 9 : index
    %c0_125 = arith.constant 0 : index
    %c0_126 = arith.constant 0 : index
    %c0_127 = arith.constant 0 : index
    %181 = vector.load %arg2[%c9, %c0_125, %c0_126, %c0_127] : memref<15x2x64x32xbf16, #tpu.memory_space<vmem>>, vector<1x2x64x32xbf16>
    %182 = vector.shape_cast %181 : vector<1x2x64x32xbf16> to vector<2x64x32xbf16>
    %cst_128 = arith.constant dense<0.000000e+00> : vector<2x16x32xf32>
    %183 = tpu.matmul %4, %182, %cst_128 {dimension_numbers = #tpu.dot_dimension_numbers<[2], [1], [1], [2], [0, 0, 0, 1, 1, 2], [0], [0]>} : vector<2x16x64xbf16>, vector<2x64x32xbf16>, vector<2x16x32xf32> -> vector<2x16x32xf32>
    %c0_129 = arith.constant 0 : index
    %c0_130 = arith.constant 0 : index
    %184 = vector.load %arg6[%c0_129, %c0_130] : memref<32x32xf32, #tpu.memory_space<vmem>>, vector<16x32xf32>
    %185 = vector.shape_cast %184 : vector<16x32xf32> to vector<1x16x32xf32>
    %c0_131 = arith.constant 0 : index
    %c0_132 = arith.constant 0 : index
    %186 = vector.load %arg7[%c0_131, %c0_132] : memref<32x32xf32, #tpu.memory_space<vmem>>, vector<16x32xf32>
    %187 = vector.shape_cast %186 : vector<16x32xf32> to vector<1x16x32xf32>
    %c1_133 = arith.constant 1 : index
    %c0_134 = arith.constant 0 : index
    %c0_135 = arith.constant 0 : index
    %c0_136 = arith.constant 0 : index
    %188 = vector.load %arg4[%c1_133, %c0_134, %c0_135, %c0_136] : memref<3x2x1x32xf32, #tpu.memory_space<vmem>>, vector<1x2x1x32xf32>
    %189 = vector.shape_cast %188 : vector<1x2x1x32xf32> to vector<2x1x32xf32>
    %190 = tpu.iota {dimensions = array<i32: 0>} : vector<8x16xi32>
    %191 = tpu.iota {dimensions = array<i32: 1>} : vector<8x16xi32>
    %c8_i32 = arith.constant 8 : i32
    %192 = vector.broadcast %c8_i32 : i32 to vector<8x16xi32>
    %193 = arith.addi %190, %192 : vector<8x16xi32>
    %194 = arith.cmpi sle, %191, %193 : vector<8x16xi32>
    %cst_137 = arith.constant 0.000000e+00 : f32
    %cst_138 = arith.constant -1.000000e+30 : f32
    %195 = vector.broadcast %cst_137 : f32 to vector<8x16xf32>
    %196 = vector.broadcast %cst_138 : f32 to vector<8x16xf32>
    %197 = arith.select %194, %195, %196 : vector<8x16xi1>, vector<8x16xf32>
    %198 = vector.shape_cast %197 : vector<8x16xf32> to vector<1x8x16xf32>
    %199 = vector.extract_strided_slice %177 {offsets = [0, 0, 0], sizes = [2, 8, 32], strides = [1, 1, 1]} : vector<2x16x32xf32> to vector<2x8x32xf32>
    %c0_139 = arith.constant 0 : index
    %c0_140 = arith.constant 0 : index
    %c0_141 = arith.constant 0 : index
    %200 = vector.load %arg9[%c0_139, %c0_140, %c0_141] : memref<4x32x32xf32, #tpu.memory_space<vmem>>, vector<2x8x32xf32>
    tpu.vector_store %arg9[%c0_139, %c0_140, %c0_141], %199 {strides = array<i32>} : memref<4x32x32xf32, #tpu.memory_space<vmem>>, vector<2x8x32xf32>,
    %201 = vector.extract_strided_slice %180 {offsets = [0, 0, 0], sizes = [2, 8, 32], strides = [1, 1, 1]} : vector<2x16x32xf32> to vector<2x8x32xf32>
    %c0_142 = arith.constant 0 : index
    %c0_143 = arith.constant 0 : index
    %c0_144 = arith.constant 0 : index
    %202 = vector.load %arg10[%c0_142, %c0_143, %c0_144] : memref<4x32x32xf32, #tpu.memory_space<vmem>>, vector<2x8x32xf32>
    tpu.vector_store %arg10[%c0_142, %c0_143, %c0_144], %201 {strides = array<i32>} : memref<4x32x32xf32, #tpu.memory_space<vmem>>, vector<2x8x32xf32>,
    %203 = vector.extract_strided_slice %183 {offsets = [0, 0, 0], sizes = [2, 8, 32], strides = [1, 1, 1]} : vector<2x16x32xf32> to vector<2x8x32xf32>
    %c0_145 = arith.constant 0 : index
    %c0_146 = arith.constant 0 : index
    %c0_147 = arith.constant 0 : index
    %204 = vector.load %arg11[%c0_145, %c0_146, %c0_147] : memref<4x32x32xf32, #tpu.memory_space<vmem>>, vector<2x8x32xf32>
    tpu.vector_store %arg11[%c0_145, %c0_146, %c0_147], %203 {strides = array<i32>} : memref<4x32x32xf32, #tpu.memory_space<vmem>>, vector<2x8x32xf32>,
    %c0_148 = arith.constant 0 : index
    %c0_149 = arith.constant 0 : index
    %c0_150 = arith.constant 0 : index
    %205 = vector.load %arg9[%c0_148, %c0_149, %c0_150] : memref<4x32x32xf32, #tpu.memory_space<vmem>>, vector<2x16x32xf32>
    %c0_151 = arith.constant 0 : index
    %c0_152 = arith.constant 0 : index
    %c0_153 = arith.constant 0 : index
    %206 = vector.load %arg10[%c0_151, %c0_152, %c0_153] : memref<4x32x32xf32, #tpu.memory_space<vmem>>, vector<2x16x32xf32>
    %c0_154 = arith.constant 0 : index
    %c0_155 = arith.constant 0 : index
    %c0_156 = arith.constant 0 : index
    %207 = vector.load %arg11[%c0_154, %c0_155, %c0_156] : memref<4x32x32xf32, #tpu.memory_space<vmem>>, vector<2x16x32xf32>
    %208 = vector.extract_strided_slice %171 {offsets = [0, 0, 0], sizes = [2, 8, 32], strides = [1, 1, 1]} : vector<2x16x32xf32> to vector<2x8x32xf32>
    %209 = vector.broadcast %6 : vector<1x8x32xf32> to vector<2x8x32xf32>
    %210 = arith.mulf %208, %209 : vector<2x8x32xf32>
    %211 = vector.extract_strided_slice %174 {offsets = [0, 0, 0], sizes = [2, 8, 32], strides = [1, 1, 1]} : vector<2x16x32xf32> to vector<2x8x32xf32>
    %212 = vector.broadcast %8 : vector<1x8x32xf32> to vector<2x8x32xf32>
    %213 = arith.mulf %211, %212 : vector<2x8x32xf32>
    %214 = arith.addf %210, %213 : vector<2x8x32xf32>
    %215 = vector.broadcast %185 : vector<1x16x32xf32> to vector<2x16x32xf32>
    %216 = arith.mulf %205, %215 : vector<2x16x32xf32>
    %217 = vector.broadcast %187 : vector<1x16x32xf32> to vector<2x16x32xf32>
    %218 = arith.mulf %206, %217 : vector<2x16x32xf32>
    %219 = arith.addf %216, %218 : vector<2x16x32xf32>
    %c0_157 = arith.constant 0 : index
    %c16 = arith.constant 16 : index
    %c0_158 = arith.constant 0 : index
    %220 = vector.load %arg9[%c0_157, %c16, %c0_158] : memref<4x32x32xf32, #tpu.memory_space<vmem>>, vector<2x16x32xf32>
    tpu.vector_store %arg9[%c0_157, %c16, %c0_158], %219 {strides = array<i32>} : memref<4x32x32xf32, #tpu.memory_space<vmem>>, vector<2x16x32xf32>,
    %221 = vector.broadcast %185 : vector<1x16x32xf32> to vector<2x16x32xf32>
    %222 = arith.mulf %206, %221 : vector<2x16x32xf32>
    %223 = vector.broadcast %187 : vector<1x16x32xf32> to vector<2x16x32xf32>
    %224 = arith.mulf %205, %223 : vector<2x16x32xf32>
    %225 = arith.subf %222, %224 : vector<2x16x32xf32>
    %c0_159 = arith.constant 0 : index
    %c16_160 = arith.constant 16 : index
    %c0_161 = arith.constant 0 : index
    %226 = vector.load %arg10[%c0_159, %c16_160, %c0_161] : memref<4x32x32xf32, #tpu.memory_space<vmem>>, vector<2x16x32xf32>
    tpu.vector_store %arg10[%c0_159, %c16_160, %c0_161], %225 {strides = array<i32>} : memref<4x32x32xf32, #tpu.memory_space<vmem>>, vector<2x16x32xf32>,
    %c0_162 = arith.constant 0 : index
    %c16_163 = arith.constant 16 : index
    %c0_164 = arith.constant 0 : index
    %227 = vector.load %arg11[%c0_162, %c16_163, %c0_164] : memref<4x32x32xf32, #tpu.memory_space<vmem>>, vector<2x16x32xf32>
    tpu.vector_store %arg11[%c0_162, %c16_163, %c0_164], %207 {strides = array<i32>} : memref<4x32x32xf32, #tpu.memory_space<vmem>>, vector<2x16x32xf32>,
    %228 = arith.truncf %214 : vector<2x8x32xf32> to vector<2x8x32xbf16>
    %229 = arith.truncf %219 : vector<2x16x32xf32> to vector<2x16x32xbf16>
    %cst_165 = arith.constant dense<0.000000e+00> : vector<2x8x16xf32>
    %230 = tpu.matmul %228, %229, %cst_165 {dimension_numbers = #tpu.dot_dimension_numbers<[2], [2], [1], [1], [0, 0, 0, 1, 1, 1], [0], [0]>} : vector<2x8x32xbf16>, vector<2x16x32xbf16>, vector<2x8x16xf32> -> vector<2x8x16xf32>
    %cst_166 = arith.constant 0.176776692 : f32
    %231 = vector.broadcast %cst_166 : f32 to vector<2x8x16xf32>
    %232 = arith.mulf %230, %231 : vector<2x8x16xf32>
    %233 = vector.broadcast %198 : vector<1x8x16xf32> to vector<2x8x16xf32>
    %234 = arith.addf %232, %233 : vector<2x8x16xf32>
    %cst_167 = arith.constant dense<0xFF800000> : vector<2x8xf32>
    %235 = vector.multi_reduction <maximumf>, %234, %cst_167 [2] : vector<2x8x16xf32> to vector<2x8xf32>
    %236 = vector.shape_cast %235 : vector<2x8xf32> to vector<2x8x1xf32>
    %237 = vector.broadcast %236 : vector<2x8x1xf32> to vector<2x8x16xf32>
    %238 = arith.subf %234, %237 : vector<2x8x16xf32>
    %239 = math.exp %238 : vector<2x8x16xf32>
    %cst_168 = arith.constant dense<0.000000e+00> : vector<2x8xf32>
    %240 = vector.multi_reduction <add>, %239, %cst_168 [2] : vector<2x8x16xf32> to vector<2x8xf32>
    %241 = vector.shape_cast %240 : vector<2x8xf32> to vector<2x8x1xf32>
    %242 = arith.truncf %239 : vector<2x8x16xf32> to vector<2x8x16xbf16>
    %243 = arith.truncf %207 : vector<2x16x32xf32> to vector<2x16x32xbf16>
    %cst_169 = arith.constant dense<0.000000e+00> : vector<2x8x32xf32>
    %244 = tpu.matmul %242, %243, %cst_169 {dimension_numbers = #tpu.dot_dimension_numbers<[2], [1], [1], [2], [0, 0, 0, 1, 1, 2], [0], [0]>} : vector<2x8x16xbf16>, vector<2x16x32xbf16>, vector<2x8x32xf32> -> vector<2x8x32xf32>
    %245 = tpu.reciprocal %241 : vector<2x8x1xf32> -> vector<2x8x1xf32>
    %246 = vector.broadcast %245 : vector<2x8x1xf32> to vector<2x8x32xf32>
    %247 = arith.mulf %244, %246 : vector<2x8x32xf32>
    %248 = arith.mulf %247, %247 : vector<2x8x32xf32>
    %cst_170 = arith.constant dense<0.000000e+00> : vector<2x8xf32>
    %249 = vector.multi_reduction <add>, %248, %cst_170 [2] : vector<2x8x32xf32> to vector<2x8xf32>
    %250 = vector.shape_cast %249 : vector<2x8xf32> to vector<2x8x1xf32>
    %cst_171 = arith.constant dense<0.000000e+00> : vector<8x1xf32>
    %251 = vector.multi_reduction <add>, %250, %cst_171 [0] : vector<2x8x1xf32> to vector<8x1xf32>
    %252 = vector.shape_cast %251 : vector<8x1xf32> to vector<1x8x1xf32>
    %cst_172 = arith.constant 6.400000e+01 : f32
    %253 = vector.broadcast %cst_172 : f32 to vector<1x8x1xf32>
    %254 = arith.divf %252, %253 : vector<1x8x1xf32>
    %cst_173 = arith.constant 9.99999974E-6 : f32
    %255 = vector.broadcast %cst_173 : f32 to vector<1x8x1xf32>
    %256 = arith.addf %254, %255 : vector<1x8x1xf32>
    %257 = math.rsqrt %256 : vector<1x8x1xf32>
    %258 = vector.broadcast %257 : vector<1x8x1xf32> to vector<2x8x32xf32>
    %259 = arith.mulf %247, %258 : vector<2x8x32xf32>
    %260 = vector.broadcast %189 : vector<2x1x32xf32> to vector<2x8x32xf32>
    %261 = arith.mulf %259, %260 : vector<2x8x32xf32>
    %262 = arith.addf %104, %261 : vector<2x8x32xf32>
    %263 = vector.extract_strided_slice %177 {offsets = [0, 8, 0], sizes = [2, 8, 32], strides = [1, 1, 1]} : vector<2x16x32xf32> to vector<2x8x32xf32>
    %c2_174 = arith.constant 2 : index
    %c0_175 = arith.constant 0 : index
    %c0_176 = arith.constant 0 : index
    %264 = vector.load %arg9[%c2_174, %c0_175, %c0_176] : memref<4x32x32xf32, #tpu.memory_space<vmem>>, vector<2x8x32xf32>
    tpu.vector_store %arg9[%c2_174, %c0_175, %c0_176], %263 {strides = array<i32>} : memref<4x32x32xf32, #tpu.memory_space<vmem>>, vector<2x8x32xf32>,
    %265 = vector.extract_strided_slice %180 {offsets = [0, 8, 0], sizes = [2, 8, 32], strides = [1, 1, 1]} : vector<2x16x32xf32> to vector<2x8x32xf32>
    %c2_177 = arith.constant 2 : index
    %c0_178 = arith.constant 0 : index
    %c0_179 = arith.constant 0 : index
    %266 = vector.load %arg10[%c2_177, %c0_178, %c0_179] : memref<4x32x32xf32, #tpu.memory_space<vmem>>, vector<2x8x32xf32>
    tpu.vector_store %arg10[%c2_177, %c0_178, %c0_179], %265 {strides = array<i32>} : memref<4x32x32xf32, #tpu.memory_space<vmem>>, vector<2x8x32xf32>,
    %267 = vector.extract_strided_slice %183 {offsets = [0, 8, 0], sizes = [2, 8, 32], strides = [1, 1, 1]} : vector<2x16x32xf32> to vector<2x8x32xf32>
    %c2_180 = arith.constant 2 : index
    %c0_181 = arith.constant 0 : index
    %c0_182 = arith.constant 0 : index
    %268 = vector.load %arg11[%c2_180, %c0_181, %c0_182] : memref<4x32x32xf32, #tpu.memory_space<vmem>>, vector<2x8x32xf32>
    tpu.vector_store %arg11[%c2_180, %c0_181, %c0_182], %267 {strides = array<i32>} : memref<4x32x32xf32, #tpu.memory_space<vmem>>, vector<2x8x32xf32>,
    %c2_183 = arith.constant 2 : index
    %c0_184 = arith.constant 0 : index
    %c0_185 = arith.constant 0 : index
    %269 = vector.load %arg9[%c2_183, %c0_184, %c0_185] : memref<4x32x32xf32, #tpu.memory_space<vmem>>, vector<2x16x32xf32>
    %c2_186 = arith.constant 2 : index
    %c0_187 = arith.constant 0 : index
    %c0_188 = arith.constant 0 : index
    %270 = vector.load %arg10[%c2_186, %c0_187, %c0_188] : memref<4x32x32xf32, #tpu.memory_space<vmem>>, vector<2x16x32xf32>
    %c2_189 = arith.constant 2 : index
    %c0_190 = arith.constant 0 : index
    %c0_191 = arith.constant 0 : index
    %271 = vector.load %arg11[%c2_189, %c0_190, %c0_191] : memref<4x32x32xf32, #tpu.memory_space<vmem>>, vector<2x16x32xf32>
    %272 = vector.extract_strided_slice %171 {offsets = [0, 8, 0], sizes = [2, 8, 32], strides = [1, 1, 1]} : vector<2x16x32xf32> to vector<2x8x32xf32>
    %273 = vector.broadcast %6 : vector<1x8x32xf32> to vector<2x8x32xf32>
    %274 = arith.mulf %272, %273 : vector<2x8x32xf32>
    %275 = vector.extract_strided_slice %174 {offsets = [0, 8, 0], sizes = [2, 8, 32], strides = [1, 1, 1]} : vector<2x16x32xf32> to vector<2x8x32xf32>
    %276 = vector.broadcast %8 : vector<1x8x32xf32> to vector<2x8x32xf32>
    %277 = arith.mulf %275, %276 : vector<2x8x32xf32>
    %278 = arith.addf %274, %277 : vector<2x8x32xf32>
    %279 = vector.broadcast %185 : vector<1x16x32xf32> to vector<2x16x32xf32>
    %280 = arith.mulf %269, %279 : vector<2x16x32xf32>
    %281 = vector.broadcast %187 : vector<1x16x32xf32> to vector<2x16x32xf32>
    %282 = arith.mulf %270, %281 : vector<2x16x32xf32>
    %283 = arith.addf %280, %282 : vector<2x16x32xf32>
    %c2_192 = arith.constant 2 : index
    %c16_193 = arith.constant 16 : index
    %c0_194 = arith.constant 0 : index
    %284 = vector.load %arg9[%c2_192, %c16_193, %c0_194] : memref<4x32x32xf32, #tpu.memory_space<vmem>>, vector<2x16x32xf32>
    tpu.vector_store %arg9[%c2_192, %c16_193, %c0_194], %283 {strides = array<i32>} : memref<4x32x32xf32, #tpu.memory_space<vmem>>, vector<2x16x32xf32>,
    %285 = vector.broadcast %185 : vector<1x16x32xf32> to vector<2x16x32xf32>
    %286 = arith.mulf %270, %285 : vector<2x16x32xf32>
    %287 = vector.broadcast %187 : vector<1x16x32xf32> to vector<2x16x32xf32>
    %288 = arith.mulf %269, %287 : vector<2x16x32xf32>
    %289 = arith.subf %286, %288 : vector<2x16x32xf32>
    %c2_195 = arith.constant 2 : index
    %c16_196 = arith.constant 16 : index
    %c0_197 = arith.constant 0 : index
    %290 = vector.load %arg10[%c2_195, %c16_196, %c0_197] : memref<4x32x32xf32, #tpu.memory_space<vmem>>, vector<2x16x32xf32>
    tpu.vector_store %arg10[%c2_195, %c16_196, %c0_197], %289 {strides = array<i32>} : memref<4x32x32xf32, #tpu.memory_space<vmem>>, vector<2x16x32xf32>,
    %c2_198 = arith.constant 2 : index
    %c16_199 = arith.constant 16 : index
    %c0_200 = arith.constant 0 : index
    %291 = vector.load %arg11[%c2_198, %c16_199, %c0_200] : memref<4x32x32xf32, #tpu.memory_space<vmem>>, vector<2x16x32xf32>
    tpu.vector_store %arg11[%c2_198, %c16_199, %c0_200], %271 {strides = array<i32>} : memref<4x32x32xf32, #tpu.memory_space<vmem>>, vector<2x16x32xf32>,
    %292 = arith.truncf %278 : vector<2x8x32xf32> to vector<2x8x32xbf16>
    %293 = arith.truncf %283 : vector<2x16x32xf32> to vector<2x16x32xbf16>
    %cst_201 = arith.constant dense<0.000000e+00> : vector<2x8x16xf32>
    %294 = tpu.matmul %292, %293, %cst_201 {dimension_numbers = #tpu.dot_dimension_numbers<[2], [2], [1], [1], [0, 0, 0, 1, 1, 1], [0], [0]>} : vector<2x8x32xbf16>, vector<2x16x32xbf16>, vector<2x8x16xf32> -> vector<2x8x16xf32>
    %cst_202 = arith.constant 0.176776692 : f32
    %295 = vector.broadcast %cst_202 : f32 to vector<2x8x16xf32>
    %296 = arith.mulf %294, %295 : vector<2x8x16xf32>
    %297 = vector.broadcast %198 : vector<1x8x16xf32> to vector<2x8x16xf32>
    %298 = arith.addf %296, %297 : vector<2x8x16xf32>
    %cst_203 = arith.constant dense<0xFF800000> : vector<2x8xf32>
    %299 = vector.multi_reduction <maximumf>, %298, %cst_203 [2] : vector<2x8x16xf32> to vector<2x8xf32>
    %300 = vector.shape_cast %299 : vector<2x8xf32> to vector<2x8x1xf32>
    %301 = vector.broadcast %300 : vector<2x8x1xf32> to vector<2x8x16xf32>
    %302 = arith.subf %298, %301 : vector<2x8x16xf32>
    %303 = math.exp %302 : vector<2x8x16xf32>
    %cst_204 = arith.constant dense<0.000000e+00> : vector<2x8xf32>
    %304 = vector.multi_reduction <add>, %303, %cst_204 [2] : vector<2x8x16xf32> to vector<2x8xf32>
    %305 = vector.shape_cast %304 : vector<2x8xf32> to vector<2x8x1xf32>
    %306 = arith.truncf %303 : vector<2x8x16xf32> to vector<2x8x16xbf16>
    %307 = arith.truncf %271 : vector<2x16x32xf32> to vector<2x16x32xbf16>
    %cst_205 = arith.constant dense<0.000000e+00> : vector<2x8x32xf32>
    %308 = tpu.matmul %306, %307, %cst_205 {dimension_numbers = #tpu.dot_dimension_numbers<[2], [1], [1], [2], [0, 0, 0, 1, 1, 2], [0], [0]>} : vector<2x8x16xbf16>, vector<2x16x32xbf16>, vector<2x8x32xf32> -> vector<2x8x32xf32>
    %309 = tpu.reciprocal %305 : vector<2x8x1xf32> -> vector<2x8x1xf32>
    %310 = vector.broadcast %309 : vector<2x8x1xf32> to vector<2x8x32xf32>
    %311 = arith.mulf %308, %310 : vector<2x8x32xf32>
    %312 = arith.mulf %311, %311 : vector<2x8x32xf32>
    %cst_206 = arith.constant dense<0.000000e+00> : vector<2x8xf32>
    %313 = vector.multi_reduction <add>, %312, %cst_206 [2] : vector<2x8x32xf32> to vector<2x8xf32>
    %314 = vector.shape_cast %313 : vector<2x8xf32> to vector<2x8x1xf32>
    %cst_207 = arith.constant dense<0.000000e+00> : vector<8x1xf32>
    %315 = vector.multi_reduction <add>, %314, %cst_207 [0] : vector<2x8x1xf32> to vector<8x1xf32>
    %316 = vector.shape_cast %315 : vector<8x1xf32> to vector<1x8x1xf32>
    %cst_208 = arith.constant 6.400000e+01 : f32
    %317 = vector.broadcast %cst_208 : f32 to vector<1x8x1xf32>
    %318 = arith.divf %316, %317 : vector<1x8x1xf32>
    %cst_209 = arith.constant 9.99999974E-6 : f32
    %319 = vector.broadcast %cst_209 : f32 to vector<1x8x1xf32>
    %320 = arith.addf %318, %319 : vector<1x8x1xf32>
    %321 = math.rsqrt %320 : vector<1x8x1xf32>
    %322 = vector.broadcast %321 : vector<1x8x1xf32> to vector<2x8x32xf32>
    %323 = arith.mulf %311, %322 : vector<2x8x32xf32>
    %324 = vector.broadcast %189 : vector<2x1x32xf32> to vector<2x8x32xf32>
    %325 = arith.mulf %323, %324 : vector<2x8x32xf32>
    %326 = arith.addf %168, %325 : vector<2x8x32xf32>
    %c10 = arith.constant 10 : index
    %c0_210 = arith.constant 0 : index
    %c0_211 = arith.constant 0 : index
    %c0_212 = arith.constant 0 : index
    %327 = vector.load %arg2[%c10, %c0_210, %c0_211, %c0_212] : memref<15x2x64x32xbf16, #tpu.memory_space<vmem>>, vector<1x2x64x32xbf16>
    %328 = vector.shape_cast %327 : vector<1x2x64x32xbf16> to vector<2x64x32xbf16>
    %cst_213 = arith.constant dense<0.000000e+00> : vector<2x16x32xf32>
    %329 = tpu.matmul %4, %328, %cst_213 {dimension_numbers = #tpu.dot_dimension_numbers<[2], [1], [1], [2], [0, 0, 0, 1, 1, 2], [0], [0]>} : vector<2x16x64xbf16>, vector<2x64x32xbf16>, vector<2x16x32xf32> -> vector<2x16x32xf32>
    %c11 = arith.constant 11 : index
    %c0_214 = arith.constant 0 : index
    %c0_215 = arith.constant 0 : index
    %c0_216 = arith.constant 0 : index
    %330 = vector.load %arg2[%c11, %c0_214, %c0_215, %c0_216] : memref<15x2x64x32xbf16, #tpu.memory_space<vmem>>, vector<1x2x64x32xbf16>
    %331 = vector.shape_cast %330 : vector<1x2x64x32xbf16> to vector<2x64x32xbf16>
    %cst_217 = arith.constant dense<0.000000e+00> : vector<2x16x32xf32>
    %332 = tpu.matmul %4, %331, %cst_217 {dimension_numbers = #tpu.dot_dimension_numbers<[2], [1], [1], [2], [0, 0, 0, 1, 1, 2], [0], [0]>} : vector<2x16x64xbf16>, vector<2x64x32xbf16>, vector<2x16x32xf32> -> vector<2x16x32xf32>
    %c12 = arith.constant 12 : index
    %c0_218 = arith.constant 0 : index
    %c0_219 = arith.constant 0 : index
    %c0_220 = arith.constant 0 : index
    %333 = vector.load %arg2[%c12, %c0_218, %c0_219, %c0_220] : memref<15x2x64x32xbf16, #tpu.memory_space<vmem>>, vector<1x2x64x32xbf16>
    %334 = vector.shape_cast %333 : vector<1x2x64x32xbf16> to vector<2x64x32xbf16>
    %cst_221 = arith.constant dense<0.000000e+00> : vector<2x16x32xf32>
    %335 = tpu.matmul %4, %334, %cst_221 {dimension_numbers = #tpu.dot_dimension_numbers<[2], [1], [1], [2], [0, 0, 0, 1, 1, 2], [0], [0]>} : vector<2x16x64xbf16>, vector<2x64x32xbf16>, vector<2x16x32xf32> -> vector<2x16x32xf32>
    %c13 = arith.constant 13 : index
    %c0_222 = arith.constant 0 : index
    %c0_223 = arith.constant 0 : index
    %c0_224 = arith.constant 0 : index
    %336 = vector.load %arg2[%c13, %c0_222, %c0_223, %c0_224] : memref<15x2x64x32xbf16, #tpu.memory_space<vmem>>, vector<1x2x64x32xbf16>
    %337 = vector.shape_cast %336 : vector<1x2x64x32xbf16> to vector<2x64x32xbf16>
    %cst_225 = arith.constant dense<0.000000e+00> : vector<2x16x32xf32>
    %338 = tpu.matmul %4, %337, %cst_225 {dimension_numbers = #tpu.dot_dimension_numbers<[2], [1], [1], [2], [0, 0, 0, 1, 1, 2], [0], [0]>} : vector<2x16x64xbf16>, vector<2x64x32xbf16>, vector<2x16x32xf32> -> vector<2x16x32xf32>
    %c14 = arith.constant 14 : index
    %c0_226 = arith.constant 0 : index
    %c0_227 = arith.constant 0 : index
    %c0_228 = arith.constant 0 : index
    %339 = vector.load %arg2[%c14, %c0_226, %c0_227, %c0_228] : memref<15x2x64x32xbf16, #tpu.memory_space<vmem>>, vector<1x2x64x32xbf16>
    %340 = vector.shape_cast %339 : vector<1x2x64x32xbf16> to vector<2x64x32xbf16>
    %cst_229 = arith.constant dense<0.000000e+00> : vector<2x16x32xf32>
    %341 = tpu.matmul %4, %340, %cst_229 {dimension_numbers = #tpu.dot_dimension_numbers<[2], [1], [1], [2], [0, 0, 0, 1, 1, 2], [0], [0]>} : vector<2x16x64xbf16>, vector<2x64x32xbf16>, vector<2x16x32xf32> -> vector<2x16x32xf32>
    %c0_230 = arith.constant 0 : index
    %c0_231 = arith.constant 0 : index
    %342 = vector.load %arg6[%c0_230, %c0_231] : memref<32x32xf32, #tpu.memory_space<vmem>>, vector<32x32xf32>
    %343 = vector.shape_cast %342 : vector<32x32xf32> to vector<1x32x32xf32>
    %c0_232 = arith.constant 0 : index
    %c0_233 = arith.constant 0 : index
    %344 = vector.load %arg7[%c0_232, %c0_233] : memref<32x32xf32, #tpu.memory_space<vmem>>, vector<32x32xf32>
    %345 = vector.shape_cast %344 : vector<32x32xf32> to vector<1x32x32xf32>
    %c2_234 = arith.constant 2 : index
    %c0_235 = arith.constant 0 : index
    %c0_236 = arith.constant 0 : index
    %c0_237 = arith.constant 0 : index
    %346 = vector.load %arg4[%c2_234, %c0_235, %c0_236, %c0_237] : memref<3x2x1x32xf32, #tpu.memory_space<vmem>>, vector<1x2x1x32xf32>
    %347 = vector.shape_cast %346 : vector<1x2x1x32xf32> to vector<2x1x32xf32>
    %348 = tpu.iota {dimensions = array<i32: 0>} : vector<8x32xi32>
    %349 = tpu.iota {dimensions = array<i32: 1>} : vector<8x32xi32>
    %c24_i32 = arith.constant 24 : i32
    %350 = vector.broadcast %c24_i32 : i32 to vector<8x32xi32>
    %351 = arith.addi %348, %350 : vector<8x32xi32>
    %352 = arith.cmpi sle, %349, %351 : vector<8x32xi32>
    %cst_238 = arith.constant 0.000000e+00 : f32
    %cst_239 = arith.constant -1.000000e+30 : f32
    %353 = vector.broadcast %cst_238 : f32 to vector<8x32xf32>
    %354 = vector.broadcast %cst_239 : f32 to vector<8x32xf32>
    %355 = arith.select %352, %353, %354 : vector<8x32xi1>, vector<8x32xf32>
    %356 = vector.shape_cast %355 : vector<8x32xf32> to vector<1x8x32xf32>
    %357 = vector.extract_strided_slice %335 {offsets = [0, 0, 0], sizes = [2, 8, 32], strides = [1, 1, 1]} : vector<2x16x32xf32> to vector<2x8x32xf32>
    %c0_240 = arith.constant 0 : index
    %c0_241 = arith.constant 0 : index
    %c0_242 = arith.constant 0 : index
    %358 = vector.load %arg9[%c0_240, %c0_241, %c0_242] : memref<4x32x32xf32, #tpu.memory_space<vmem>>, vector<2x8x32xf32>
    tpu.vector_store %arg9[%c0_240, %c0_241, %c0_242], %357 {strides = array<i32>} : memref<4x32x32xf32, #tpu.memory_space<vmem>>, vector<2x8x32xf32>,
    %359 = vector.extract_strided_slice %338 {offsets = [0, 0, 0], sizes = [2, 8, 32], strides = [1, 1, 1]} : vector<2x16x32xf32> to vector<2x8x32xf32>
    %c0_243 = arith.constant 0 : index
    %c0_244 = arith.constant 0 : index
    %c0_245 = arith.constant 0 : index
    %360 = vector.load %arg10[%c0_243, %c0_244, %c0_245] : memref<4x32x32xf32, #tpu.memory_space<vmem>>, vector<2x8x32xf32>
    tpu.vector_store %arg10[%c0_243, %c0_244, %c0_245], %359 {strides = array<i32>} : memref<4x32x32xf32, #tpu.memory_space<vmem>>, vector<2x8x32xf32>,
    %361 = vector.extract_strided_slice %341 {offsets = [0, 0, 0], sizes = [2, 8, 32], strides = [1, 1, 1]} : vector<2x16x32xf32> to vector<2x8x32xf32>
    %c0_246 = arith.constant 0 : index
    %c0_247 = arith.constant 0 : index
    %c0_248 = arith.constant 0 : index
    %362 = vector.load %arg11[%c0_246, %c0_247, %c0_248] : memref<4x32x32xf32, #tpu.memory_space<vmem>>, vector<2x8x32xf32>
    tpu.vector_store %arg11[%c0_246, %c0_247, %c0_248], %361 {strides = array<i32>} : memref<4x32x32xf32, #tpu.memory_space<vmem>>, vector<2x8x32xf32>,
    %c0_249 = arith.constant 0 : index
    %c0_250 = arith.constant 0 : index
    %c0_251 = arith.constant 0 : index
    %363 = vector.load %arg9[%c0_249, %c0_250, %c0_251] : memref<4x32x32xf32, #tpu.memory_space<vmem>>, vector<2x32x32xf32>
    %c0_252 = arith.constant 0 : index
    %c0_253 = arith.constant 0 : index
    %c0_254 = arith.constant 0 : index
    %364 = vector.load %arg10[%c0_252, %c0_253, %c0_254] : memref<4x32x32xf32, #tpu.memory_space<vmem>>, vector<2x32x32xf32>
    %c0_255 = arith.constant 0 : index
    %c0_256 = arith.constant 0 : index
    %c0_257 = arith.constant 0 : index
    %365 = vector.load %arg11[%c0_255, %c0_256, %c0_257] : memref<4x32x32xf32, #tpu.memory_space<vmem>>, vector<2x32x32xf32>
    %366 = vector.extract_strided_slice %329 {offsets = [0, 0, 0], sizes = [2, 8, 32], strides = [1, 1, 1]} : vector<2x16x32xf32> to vector<2x8x32xf32>
    %367 = vector.broadcast %6 : vector<1x8x32xf32> to vector<2x8x32xf32>
    %368 = arith.mulf %366, %367 : vector<2x8x32xf32>
    %369 = vector.extract_strided_slice %332 {offsets = [0, 0, 0], sizes = [2, 8, 32], strides = [1, 1, 1]} : vector<2x16x32xf32> to vector<2x8x32xf32>
    %370 = vector.broadcast %8 : vector<1x8x32xf32> to vector<2x8x32xf32>
    %371 = arith.mulf %369, %370 : vector<2x8x32xf32>
    %372 = arith.addf %368, %371 : vector<2x8x32xf32>
    %373 = vector.broadcast %343 : vector<1x32x32xf32> to vector<2x32x32xf32>
    %374 = arith.mulf %363, %373 : vector<2x32x32xf32>
    %375 = vector.broadcast %345 : vector<1x32x32xf32> to vector<2x32x32xf32>
    %376 = arith.mulf %364, %375 : vector<2x32x32xf32>
    %377 = arith.addf %374, %376 : vector<2x32x32xf32>
    %378 = arith.truncf %372 : vector<2x8x32xf32> to vector<2x8x32xbf16>
    %379 = arith.truncf %377 : vector<2x32x32xf32> to vector<2x32x32xbf16>
    %cst_258 = arith.constant dense<0.000000e+00> : vector<2x8x32xf32>
    %380 = tpu.matmul %378, %379, %cst_258 {dimension_numbers = #tpu.dot_dimension_numbers<[2], [2], [1], [1], [0, 0, 0, 1, 1, 1], [0], [0]>} : vector<2x8x32xbf16>, vector<2x32x32xbf16>, vector<2x8x32xf32> -> vector<2x8x32xf32>
    %cst_259 = arith.constant 0.176776692 : f32
    %381 = vector.broadcast %cst_259 : f32 to vector<2x8x32xf32>
    %382 = arith.mulf %380, %381 : vector<2x8x32xf32>
    %383 = vector.broadcast %356 : vector<1x8x32xf32> to vector<2x8x32xf32>
    %384 = arith.addf %382, %383 : vector<2x8x32xf32>
    %cst_260 = arith.constant dense<0xFF800000> : vector<2x8xf32>
    %385 = vector.multi_reduction <maximumf>, %384, %cst_260 [2] : vector<2x8x32xf32> to vector<2x8xf32>
    %386 = vector.shape_cast %385 : vector<2x8xf32> to vector<2x8x1xf32>
    %387 = vector.broadcast %386 : vector<2x8x1xf32> to vector<2x8x32xf32>
    %388 = arith.subf %384, %387 : vector<2x8x32xf32>
    %389 = math.exp %388 : vector<2x8x32xf32>
    %cst_261 = arith.constant dense<0.000000e+00> : vector<2x8xf32>
    %390 = vector.multi_reduction <add>, %389, %cst_261 [2] : vector<2x8x32xf32> to vector<2x8xf32>
    %391 = vector.shape_cast %390 : vector<2x8xf32> to vector<2x8x1xf32>
    %392 = arith.truncf %389 : vector<2x8x32xf32> to vector<2x8x32xbf16>
    %393 = arith.truncf %365 : vector<2x32x32xf32> to vector<2x32x32xbf16>
    %cst_262 = arith.constant dense<0.000000e+00> : vector<2x8x32xf32>
    %394 = tpu.matmul %392, %393, %cst_262 {dimension_numbers = #tpu.dot_dimension_numbers<[2], [1], [1], [2], [0, 0, 0, 1, 1, 2], [0], [0]>} : vector<2x8x32xbf16>, vector<2x32x32xbf16>, vector<2x8x32xf32> -> vector<2x8x32xf32>
    %395 = tpu.reciprocal %391 : vector<2x8x1xf32> -> vector<2x8x1xf32>
    %396 = vector.broadcast %395 : vector<2x8x1xf32> to vector<2x8x32xf32>
    %397 = arith.mulf %394, %396 : vector<2x8x32xf32>
    %398 = arith.mulf %397, %397 : vector<2x8x32xf32>
    %cst_263 = arith.constant dense<0.000000e+00> : vector<2x8xf32>
    %399 = vector.multi_reduction <add>, %398, %cst_263 [2] : vector<2x8x32xf32> to vector<2x8xf32>
    %400 = vector.shape_cast %399 : vector<2x8xf32> to vector<2x8x1xf32>
    %cst_264 = arith.constant dense<0.000000e+00> : vector<8x1xf32>
    %401 = vector.multi_reduction <add>, %400, %cst_264 [0] : vector<2x8x1xf32> to vector<8x1xf32>
    %402 = vector.shape_cast %401 : vector<8x1xf32> to vector<1x8x1xf32>
    %cst_265 = arith.constant 6.400000e+01 : f32
    %403 = vector.broadcast %cst_265 : f32 to vector<1x8x1xf32>
    %404 = arith.divf %402, %403 : vector<1x8x1xf32>
    %cst_266 = arith.constant 9.99999974E-6 : f32
    %405 = vector.broadcast %cst_266 : f32 to vector<1x8x1xf32>
    %406 = arith.addf %404, %405 : vector<1x8x1xf32>
    %407 = math.rsqrt %406 : vector<1x8x1xf32>
    %408 = vector.broadcast %407 : vector<1x8x1xf32> to vector<2x8x32xf32>
    %409 = arith.mulf %397, %408 : vector<2x8x32xf32>
    %410 = vector.broadcast %347 : vector<2x1x32xf32> to vector<2x8x32xf32>
    %411 = arith.mulf %409, %410 : vector<2x8x32xf32>
    %412 = arith.addf %262, %411 : vector<2x8x32xf32>
    %413 = vector.extract_strided_slice %335 {offsets = [0, 8, 0], sizes = [2, 8, 32], strides = [1, 1, 1]} : vector<2x16x32xf32> to vector<2x8x32xf32>
    %c2_267 = arith.constant 2 : index
    %c0_268 = arith.constant 0 : index
    %c0_269 = arith.constant 0 : index
    %414 = vector.load %arg9[%c2_267, %c0_268, %c0_269] : memref<4x32x32xf32, #tpu.memory_space<vmem>>, vector<2x8x32xf32>
    tpu.vector_store %arg9[%c2_267, %c0_268, %c0_269], %413 {strides = array<i32>} : memref<4x32x32xf32, #tpu.memory_space<vmem>>, vector<2x8x32xf32>,
    %415 = vector.extract_strided_slice %338 {offsets = [0, 8, 0], sizes = [2, 8, 32], strides = [1, 1, 1]} : vector<2x16x32xf32> to vector<2x8x32xf32>
    %c2_270 = arith.constant 2 : index
    %c0_271 = arith.constant 0 : index
    %c0_272 = arith.constant 0 : index
    %416 = vector.load %arg10[%c2_270, %c0_271, %c0_272] : memref<4x32x32xf32, #tpu.memory_space<vmem>>, vector<2x8x32xf32>
    tpu.vector_store %arg10[%c2_270, %c0_271, %c0_272], %415 {strides = array<i32>} : memref<4x32x32xf32, #tpu.memory_space<vmem>>, vector<2x8x32xf32>,
    %417 = vector.extract_strided_slice %341 {offsets = [0, 8, 0], sizes = [2, 8, 32], strides = [1, 1, 1]} : vector<2x16x32xf32> to vector<2x8x32xf32>
    %c2_273 = arith.constant 2 : index
    %c0_274 = arith.constant 0 : index
    %c0_275 = arith.constant 0 : index
    %418 = vector.load %arg11[%c2_273, %c0_274, %c0_275] : memref<4x32x32xf32, #tpu.memory_space<vmem>>, vector<2x8x32xf32>
    tpu.vector_store %arg11[%c2_273, %c0_274, %c0_275], %417 {strides = array<i32>} : memref<4x32x32xf32, #tpu.memory_space<vmem>>, vector<2x8x32xf32>,
    %c2_276 = arith.constant 2 : index
    %c0_277 = arith.constant 0 : index
    %c0_278 = arith.constant 0 : index
    %419 = vector.load %arg9[%c2_276, %c0_277, %c0_278] : memref<4x32x32xf32, #tpu.memory_space<vmem>>, vector<2x32x32xf32>
    %c2_279 = arith.constant 2 : index
    %c0_280 = arith.constant 0 : index
    %c0_281 = arith.constant 0 : index
    %420 = vector.load %arg10[%c2_279, %c0_280, %c0_281] : memref<4x32x32xf32, #tpu.memory_space<vmem>>, vector<2x32x32xf32>
    %c2_282 = arith.constant 2 : index
    %c0_283 = arith.constant 0 : index
    %c0_284 = arith.constant 0 : index
    %421 = vector.load %arg11[%c2_282, %c0_283, %c0_284] : memref<4x32x32xf32, #tpu.memory_space<vmem>>, vector<2x32x32xf32>
    %422 = vector.extract_strided_slice %329 {offsets = [0, 8, 0], sizes = [2, 8, 32], strides = [1, 1, 1]} : vector<2x16x32xf32> to vector<2x8x32xf32>
    %423 = vector.broadcast %6 : vector<1x8x32xf32> to vector<2x8x32xf32>
    %424 = arith.mulf %422, %423 : vector<2x8x32xf32>
    %425 = vector.extract_strided_slice %332 {offsets = [0, 8, 0], sizes = [2, 8, 32], strides = [1, 1, 1]} : vector<2x16x32xf32> to vector<2x8x32xf32>
    %426 = vector.broadcast %8 : vector<1x8x32xf32> to vector<2x8x32xf32>
    %427 = arith.mulf %425, %426 : vector<2x8x32xf32>
    %428 = arith.addf %424, %427 : vector<2x8x32xf32>
    %429 = vector.broadcast %343 : vector<1x32x32xf32> to vector<2x32x32xf32>
    %430 = arith.mulf %419, %429 : vector<2x32x32xf32>
    %431 = vector.broadcast %345 : vector<1x32x32xf32> to vector<2x32x32xf32>
    %432 = arith.mulf %420, %431 : vector<2x32x32xf32>
    %433 = arith.addf %430, %432 : vector<2x32x32xf32>
    %434 = arith.truncf %428 : vector<2x8x32xf32> to vector<2x8x32xbf16>
    %435 = arith.truncf %433 : vector<2x32x32xf32> to vector<2x32x32xbf16>
    %cst_285 = arith.constant dense<0.000000e+00> : vector<2x8x32xf32>
    %436 = tpu.matmul %434, %435, %cst_285 {dimension_numbers = #tpu.dot_dimension_numbers<[2], [2], [1], [1], [0, 0, 0, 1, 1, 1], [0], [0]>} : vector<2x8x32xbf16>, vector<2x32x32xbf16>, vector<2x8x32xf32> -> vector<2x8x32xf32>
    %cst_286 = arith.constant 0.176776692 : f32
    %437 = vector.broadcast %cst_286 : f32 to vector<2x8x32xf32>
    %438 = arith.mulf %436, %437 : vector<2x8x32xf32>
    %439 = vector.broadcast %356 : vector<1x8x32xf32> to vector<2x8x32xf32>
    %440 = arith.addf %438, %439 : vector<2x8x32xf32>
    %cst_287 = arith.constant dense<0xFF800000> : vector<2x8xf32>
    %441 = vector.multi_reduction <maximumf>, %440, %cst_287 [2] : vector<2x8x32xf32> to vector<2x8xf32>
    %442 = vector.shape_cast %441 : vector<2x8xf32> to vector<2x8x1xf32>
    %443 = vector.broadcast %442 : vector<2x8x1xf32> to vector<2x8x32xf32>
    %444 = arith.subf %440, %443 : vector<2x8x32xf32>
    %445 = math.exp %444 : vector<2x8x32xf32>
    %cst_288 = arith.constant dense<0.000000e+00> : vector<2x8xf32>
    %446 = vector.multi_reduction <add>, %445, %cst_288 [2] : vector<2x8x32xf32> to vector<2x8xf32>
    %447 = vector.shape_cast %446 : vector<2x8xf32> to vector<2x8x1xf32>
    %448 = arith.truncf %445 : vector<2x8x32xf32> to vector<2x8x32xbf16>
    %449 = arith.truncf %421 : vector<2x32x32xf32> to vector<2x32x32xbf16>
    %cst_289 = arith.constant dense<0.000000e+00> : vector<2x8x32xf32>
    %450 = tpu.matmul %448, %449, %cst_289 {dimension_numbers = #tpu.dot_dimension_numbers<[2], [1], [1], [2], [0, 0, 0, 1, 1, 2], [0], [0]>} : vector<2x8x32xbf16>, vector<2x32x32xbf16>, vector<2x8x32xf32> -> vector<2x8x32xf32>
    %451 = tpu.reciprocal %447 : vector<2x8x1xf32> -> vector<2x8x1xf32>
    %452 = vector.broadcast %451 : vector<2x8x1xf32> to vector<2x8x32xf32>
    %453 = arith.mulf %450, %452 : vector<2x8x32xf32>
    %454 = arith.mulf %453, %453 : vector<2x8x32xf32>
    %cst_290 = arith.constant dense<0.000000e+00> : vector<2x8xf32>
    %455 = vector.multi_reduction <add>, %454, %cst_290 [2] : vector<2x8x32xf32> to vector<2x8xf32>
    %456 = vector.shape_cast %455 : vector<2x8xf32> to vector<2x8x1xf32>
    %cst_291 = arith.constant dense<0.000000e+00> : vector<8x1xf32>
    %457 = vector.multi_reduction <add>, %456, %cst_291 [0] : vector<2x8x1xf32> to vector<8x1xf32>
    %458 = vector.shape_cast %457 : vector<8x1xf32> to vector<1x8x1xf32>
    %cst_292 = arith.constant 6.400000e+01 : f32
    %459 = vector.broadcast %cst_292 : f32 to vector<1x8x1xf32>
    %460 = arith.divf %458, %459 : vector<1x8x1xf32>
    %cst_293 = arith.constant 9.99999974E-6 : f32
    %461 = vector.broadcast %cst_293 : f32 to vector<1x8x1xf32>
    %462 = arith.addf %460, %461 : vector<1x8x1xf32>
    %463 = math.rsqrt %462 : vector<1x8x1xf32>
    %464 = vector.broadcast %463 : vector<1x8x1xf32> to vector<2x8x32xf32>
    %465 = arith.mulf %453, %464 : vector<2x8x32xf32>
    %466 = vector.broadcast %347 : vector<2x1x32xf32> to vector<2x8x32xf32>
    %467 = arith.mulf %465, %466 : vector<2x8x32xf32>
    %468 = arith.addf %326, %467 : vector<2x8x32xf32>
    %c0_294 = arith.constant 0 : index
    %c0_295 = arith.constant 0 : index
    %c0_296 = arith.constant 0 : index
    %469 = vector.load %arg5[%c0_294, %c0_295, %c0_296] : memref<2x1x32xf32, #tpu.memory_space<vmem>>, vector<2x1x32xf32>
    %c0_297 = arith.constant 0 : index
    %c0_298 = arith.constant 0 : index
    %c0_299 = arith.constant 0 : index
    %470 = vector.load %arg1[%c0_297, %c0_298, %c0_299] : memref<4x8x32xf32, #tpu.memory_space<vmem>>, vector<2x8x32xf32>
    %471 = arith.addf %412, %470 : vector<2x8x32xf32>
    %472 = arith.mulf %471, %471 : vector<2x8x32xf32>
    %cst_300 = arith.constant dense<0.000000e+00> : vector<2x8xf32>
    %473 = vector.multi_reduction <add>, %472, %cst_300 [2] : vector<2x8x32xf32> to vector<2x8xf32>
    %474 = vector.shape_cast %473 : vector<2x8xf32> to vector<2x8x1xf32>
    %cst_301 = arith.constant dense<0.000000e+00> : vector<8x1xf32>
    %475 = vector.multi_reduction <add>, %474, %cst_301 [0] : vector<2x8x1xf32> to vector<8x1xf32>
    %476 = vector.shape_cast %475 : vector<8x1xf32> to vector<1x8x1xf32>
    %cst_302 = arith.constant 6.400000e+01 : f32
    %477 = vector.broadcast %cst_302 : f32 to vector<1x8x1xf32>
    %478 = arith.divf %476, %477 : vector<1x8x1xf32>
    %cst_303 = arith.constant 9.99999974E-6 : f32
    %479 = vector.broadcast %cst_303 : f32 to vector<1x8x1xf32>
    %480 = arith.addf %478, %479 : vector<1x8x1xf32>
    %481 = math.rsqrt %480 : vector<1x8x1xf32>
    %482 = vector.broadcast %481 : vector<1x8x1xf32> to vector<2x8x32xf32>
    %483 = arith.mulf %471, %482 : vector<2x8x32xf32>
    %484 = vector.broadcast %469 : vector<2x1x32xf32> to vector<2x8x32xf32>
    %485 = arith.mulf %483, %484 : vector<2x8x32xf32>
    %486 = arith.truncf %485 : vector<2x8x32xf32> to vector<2x8x32xbf16>
    %487 = vector.extract_strided_slice %486 {offsets = [0, 0, 0], sizes = [1, 8, 32], strides = [1, 1, 1]} : vector<2x8x32xbf16> to vector<1x8x32xbf16>
    %488 = vector.shape_cast %487 : vector<1x8x32xbf16> to vector<8x32xbf16>
    %c0_304 = arith.constant 0 : index
    %c0_305 = arith.constant 0 : index
    %c0_306 = arith.constant 0 : index
    %489 = vector.load %arg3[%c0_304, %c0_305, %c0_306] : memref<2x32x64xbf16, #tpu.memory_space<vmem>>, vector<1x32x64xbf16>
    %490 = vector.shape_cast %489 : vector<1x32x64xbf16> to vector<32x64xbf16>
    %cst_307 = arith.constant dense<0.000000e+00> : vector<8x64xf32>
    %491 = tpu.matmul %488, %490, %cst_307 {dimension_numbers = #tpu.dot_dimension_numbers<[1], [0], [0], [1], [0, 0, 1, 1], [], []>} : vector<8x32xbf16>, vector<32x64xbf16>, vector<8x64xf32> -> vector<8x64xf32>
    %cst_308 = arith.constant 0.000000e+00 : f32
    %492 = vector.broadcast %cst_308 : f32 to vector<8x64xf32>
    %493 = arith.addf %492, %491 : vector<8x64xf32>
    %494 = vector.extract_strided_slice %486 {offsets = [1, 0, 0], sizes = [1, 8, 32], strides = [1, 1, 1]} : vector<2x8x32xbf16> to vector<1x8x32xbf16>
    %495 = vector.shape_cast %494 : vector<1x8x32xbf16> to vector<8x32xbf16>
    %c1_309 = arith.constant 1 : index
    %c0_310 = arith.constant 0 : index
    %c0_311 = arith.constant 0 : index
    %496 = vector.load %arg3[%c1_309, %c0_310, %c0_311] : memref<2x32x64xbf16, #tpu.memory_space<vmem>>, vector<1x32x64xbf16>
    %497 = vector.shape_cast %496 : vector<1x32x64xbf16> to vector<32x64xbf16>
    %cst_312 = arith.constant dense<0.000000e+00> : vector<8x64xf32>
    %498 = tpu.matmul %495, %497, %cst_312 {dimension_numbers = #tpu.dot_dimension_numbers<[1], [0], [0], [1], [0, 0, 1, 1], [], []>} : vector<8x32xbf16>, vector<32x64xbf16>, vector<8x64xf32> -> vector<8x64xf32>
    %499 = arith.addf %493, %498 : vector<8x64xf32>
    %c2_313 = arith.constant 2 : index
    %c0_314 = arith.constant 0 : index
    %c0_315 = arith.constant 0 : index
    %500 = vector.load %arg1[%c2_313, %c0_314, %c0_315] : memref<4x8x32xf32, #tpu.memory_space<vmem>>, vector<2x8x32xf32>
    %501 = arith.addf %468, %500 : vector<2x8x32xf32>
    %502 = arith.mulf %501, %501 : vector<2x8x32xf32>
    %cst_316 = arith.constant dense<0.000000e+00> : vector<2x8xf32>
    %503 = vector.multi_reduction <add>, %502, %cst_316 [2] : vector<2x8x32xf32> to vector<2x8xf32>
    %504 = vector.shape_cast %503 : vector<2x8xf32> to vector<2x8x1xf32>
    %cst_317 = arith.constant dense<0.000000e+00> : vector<8x1xf32>
    %505 = vector.multi_reduction <add>, %504, %cst_317 [0] : vector<2x8x1xf32> to vector<8x1xf32>
    %506 = vector.shape_cast %505 : vector<8x1xf32> to vector<1x8x1xf32>
    %cst_318 = arith.constant 6.400000e+01 : f32
    %507 = vector.broadcast %cst_318 : f32 to vector<1x8x1xf32>
    %508 = arith.divf %506, %507 : vector<1x8x1xf32>
    %cst_319 = arith.constant 9.99999974E-6 : f32
    %509 = vector.broadcast %cst_319 : f32 to vector<1x8x1xf32>
    %510 = arith.addf %508, %509 : vector<1x8x1xf32>
    %511 = math.rsqrt %510 : vector<1x8x1xf32>
    %512 = vector.broadcast %511 : vector<1x8x1xf32> to vector<2x8x32xf32>
    %513 = arith.mulf %501, %512 : vector<2x8x32xf32>
    %514 = vector.broadcast %469 : vector<2x1x32xf32> to vector<2x8x32xf32>
    %515 = arith.mulf %513, %514 : vector<2x8x32xf32>
    %516 = arith.truncf %515 : vector<2x8x32xf32> to vector<2x8x32xbf16>
    %517 = vector.extract_strided_slice %516 {offsets = [0, 0, 0], sizes = [1, 8, 32], strides = [1, 1, 1]} : vector<2x8x32xbf16> to vector<1x8x32xbf16>
    %518 = vector.shape_cast %517 : vector<1x8x32xbf16> to vector<8x32xbf16>
    %c0_320 = arith.constant 0 : index
    %c0_321 = arith.constant 0 : index
    %c0_322 = arith.constant 0 : index
    %519 = vector.load %arg3[%c0_320, %c0_321, %c0_322] : memref<2x32x64xbf16, #tpu.memory_space<vmem>>, vector<1x32x64xbf16>
    %520 = vector.shape_cast %519 : vector<1x32x64xbf16> to vector<32x64xbf16>
    %cst_323 = arith.constant dense<0.000000e+00> : vector<8x64xf32>
    %521 = tpu.matmul %518, %520, %cst_323 {dimension_numbers = #tpu.dot_dimension_numbers<[1], [0], [0], [1], [0, 0, 1, 1], [], []>} : vector<8x32xbf16>, vector<32x64xbf16>, vector<8x64xf32> -> vector<8x64xf32>
    %cst_324 = arith.constant 0.000000e+00 : f32
    %522 = vector.broadcast %cst_324 : f32 to vector<8x64xf32>
    %523 = arith.addf %522, %521 : vector<8x64xf32>
    %524 = vector.extract_strided_slice %516 {offsets = [1, 0, 0], sizes = [1, 8, 32], strides = [1, 1, 1]} : vector<2x8x32xbf16> to vector<1x8x32xbf16>
    %525 = vector.shape_cast %524 : vector<1x8x32xbf16> to vector<8x32xbf16>
    %c1_325 = arith.constant 1 : index
    %c0_326 = arith.constant 0 : index
    %c0_327 = arith.constant 0 : index
    %526 = vector.load %arg3[%c1_325, %c0_326, %c0_327] : memref<2x32x64xbf16, #tpu.memory_space<vmem>>, vector<1x32x64xbf16>
    %527 = vector.shape_cast %526 : vector<1x32x64xbf16> to vector<32x64xbf16>
    %cst_328 = arith.constant dense<0.000000e+00> : vector<8x64xf32>
    %528 = tpu.matmul %525, %527, %cst_328 {dimension_numbers = #tpu.dot_dimension_numbers<[1], [0], [0], [1], [0, 0, 1, 1], [], []>} : vector<8x32xbf16>, vector<32x64xbf16>, vector<8x64xf32> -> vector<8x64xf32>
    %529 = arith.addf %523, %528 : vector<8x64xf32>
    %530 = tpu.concatenate %499, %529 in 1 : vector<8x64xf32>, vector<8x64xf32> -> vector<8x128xf32>
    %c0_329 = arith.constant 0 : index
    %c0_330 = arith.constant 0 : index
    %531 = vector.load %arg8[%c0_329, %c0_330] : memref<8x128xf32, #tpu.memory_space<vmem>>, vector<8x128xf32>
    tpu.vector_store %arg8[%c0_329, %c0_330], %530 {strides = array<i32>} : memref<8x128xf32, #tpu.memory_space<vmem>>, vector<8x128xf32>,
    return
  }
}

</mosaic_0001>

<llo_original>
// kernel: neg.3
$region0: #{neg.3}
  #allocation0 [shape = 's32[1]{0}', space=sflag, size = 0x4, scoped, tag = 'scoped memory for neg.3']
  %s0 = inlined_call_operand.vmem [shape: f32[32,16], index: 0, kind: input, shape index: {}]
  %s1 = inlined_call_operand.vmem [shape: f32[32,16], index: 1, kind: output, shape index: {}]
  %v2 = vld [vmem:[%s0] sm:$0xff]
  %3 = xla_tuple %v2
  %4 = xla_tuple %3
  %v5 = vxor.u32 %v2, 2147483648
  %6 = xla_tuple %v5
  %7 = vst [vmem:[%s1] sm:$0xff] %v5
  %s8 = scalar_lea.vmem %s0, 8
  %v9 = vld [vmem:[%s8] sm:$0xff]
  %10 = xla_tuple %v9
  %11 = xla_tuple %10
  %v12 = vxor.u32 %v9, 2147483648
  %13 = xla_tuple %v12
  %s14 = scalar_lea.vmem %s1, 8
  %15 = vst [vmem:[%s14] sm:$0xff] %v12

// kernel: forward.1
$region0: #{forward.1}
  #allocation0 [shape = 'u32[]', space=smem, size = 0x4, offset = 0x4, fixed_abs, tag = 'smem constant byte address 0x4 - core index']
  #allocation1 [shape = 'u32[144,128]{1,0:T(1,128)}', space=vmem, size = 0x12000, scoped, tag = 'internal scratch']
  #allocation2 [shape = 'f32[4,32,32]{2,1,0:T(8,128)}', space=vmem, size = 0x10000, scoped, tag = 'scratch operand']
  #allocation3 [shape = 'f32[4,32,32]{2,1,0:T(8,128)}', space=vmem, size = 0x10000, scoped, tag = 'scratch operand']
  #allocation4 [shape = 'f32[4,32,32]{2,1,0:T(8,128)}', space=vmem, size = 0x10000, scoped, tag = 'scratch operand']
  %s0 = inlined_call_operand.vmem [shape: f32[16,64], index: 0, kind: input, shape index: {}]
  %s1 = inlined_call_operand.vmem [shape: f32[4,8,32], index: 1, kind: input, shape index: {}]
  %s2 = inlined_call_operand.vmem [shape: bf16[15,2,64,32], index: 2, kind: input, shape index: {}]
  %s3 = inlined_call_operand.vmem [shape: bf16[2,32,64], index: 3, kind: input, shape index: {}]
  %s4 = inlined_call_operand.vmem [shape: f32[3,2,1,32], index: 4, kind: input, shape index: {}]
  %s5 = inlined_call_operand.vmem [shape: f32[2,1,32], index: 5, kind: input, shape index: {}]
  %s6 = inlined_call_operand.vmem [shape: f32[32,32], index: 6, kind: input, shape index: {}]
  %s7 = inlined_call_operand.vmem [shape: f32[32,32], index: 7, kind: input, shape index: {}]
  %s8 = inlined_call_operand.vmem [shape: f32[8,128], index: 8, kind: output, shape index: {}]
  %s9 = sld [smem:[#allocation0]]
  $region42: #{forward.1} parent=0
    _
  %s11 = ssub.s32 1, %s9
  %s12 = scalar_select 0, %s11, %s9
  // Predicated region
  $region2: #{forward.1} parent=0 // pred_check
    _
  $region3: #{forward.1} parent=0 // pred_check_branch
    %14 = sbr.rel (0) target = $region5
  $region4: #{forward.1} parent=0 // pred_region
    _
  $region5: #{forward.1} parent=0 // pred_fallthru
    _
  // Predicated region
  $region6: #{forward.1} parent=0 // pred_check
    _
  $region7: #{forward.1} parent=0 // pred_check_branch
    %16 = sbr.rel (0) target = $region9
  $region8: #{forward.1} parent=0 // pred_region
    _
  $region9: #{forward.1} parent=0 // pred_fallthru
    _
  // Predicated region
  $region10: #{forward.1} parent=0 // pred_check
    _
  $region11: #{forward.1} parent=0 // pred_check_branch
    %18 = sbr.rel (0) target = $region13
  $region12: #{forward.1} parent=0 // pred_region
    _
  $region13: #{forward.1} parent=0 // pred_fallthru
    _
  // Predicated region
  $region14: #{forward.1} parent=0 // pred_check
    _
  $region15: #{forward.1} parent=0 // pred_check_branch
    %20 = sbr.rel (0) target = $region17
  $region16: #{forward.1} parent=0 // pred_region
    _
  $region17: #{forward.1} parent=0 // pred_fallthru
    _
  // Predicated region
  $region18: #{forward.1} parent=0 // pred_check
    _
  $region19: #{forward.1} parent=0 // pred_check_branch
    %22 = sbr.rel (0) target = $region21
  $region20: #{forward.1} parent=0 // pred_region
    _
  $region21: #{forward.1} parent=0 // pred_fallthru
    _
  // Predicated region
  $region22: #{forward.1} parent=0 // pred_check
    _
  $region23: #{forward.1} parent=0 // pred_check_branch
    %24 = sbr.rel (0) target = $region25
  $region24: #{forward.1} parent=0 // pred_region
    _
  $region25: #{forward.1} parent=0 // pred_fallthru
    _
  // Predicated region
  $region26: #{forward.1} parent=0 // pred_check
    _
  $region27: #{forward.1} parent=0 // pred_check_branch
    %26 = sbr.rel (0) target = $region29
  $region28: #{forward.1} parent=0 // pred_region
    _
  $region29: #{forward.1} parent=0 // pred_fallthru
    _
  // Predicated region
  $region30: #{forward.1} parent=0 // pred_check
    _
  $region31: #{forward.1} parent=0 // pred_check_branch
    %28 = sbr.rel (0) target = $region33
  $region32: #{forward.1} parent=0 // pred_region
    _
  $region33: #{forward.1} parent=0 // pred_fallthru
    _
  %v30 = vld [vmem:[%s0] sm:$0xff]
  %v31 = vld [vmem:[%s0 + $0x8] sm:$0xff]
  %v32 = vpack.c.bf16 %v31, %v30
  %v33 = vld [vmem:[%s6] sm:$0xff]
  %v34 = vld [vmem:[%s7] sm:$0xff]
  %v35 = vld [vmem:[%s2] sm:$0xf]
  %v36 = vld [vmem:[%s2 + $0x4] sm:$0xf]
  %v37 = vld [vmem:[%s2 + $0x8] sm:$0xf]
  %v38 = vld [vmem:[%s2 + $0xc] sm:$0xf]
  %v39 = vld [vmem:[%s2 + $0x10] sm:$0xf]
  %v40 = vld [vmem:[%s2 + $0x14] sm:$0xf]
  %v41 = vld [vmem:[%s2 + $0x18] sm:$0xf]
  %v42 = vld [vmem:[%s2 + $0x1c] sm:$0xf]
  %v43 = vld [vmem:[%s2 + $0x20] sm:$0xf]
  %v44 = vld [vmem:[%s2 + $0x24] sm:$0xf]
  %v45 = vld [vmem:[%s2 + $0x28] sm:$0xf]
  %v46 = vld [vmem:[%s2 + $0x2c] sm:$0xf]
  %v47 = vld [vmem:[%s2 + $0x30] sm:$0xf]
  %v48 = vld [vmem:[%s2 + $0x34] sm:$0xf]
  %v49 = vld [vmem:[%s2 + $0x38] sm:$0xf]
  %v50 = vld [vmem:[%s2 + $0x3c] sm:$0xf]
  %v59 = vunpack.c.l.b16 %v35
  %v60 = vunpack.c.l.b16 %v36
  %v61 = vunpack.c.l.b16 %v37
  %v62 = vunpack.c.l.b16 %v38
  %v63 = vunpack.c.l.b16 %v39
  %v64 = vunpack.c.l.b16 %v40
  %v65 = vunpack.c.l.b16 %v41
  %v66 = vunpack.c.l.b16 %v42
  %v67 = vpack.c.b16 %v60, %v59
  %v68 = vpack.c.b16 %v62, %v61
  %v69 = vpack.c.b16 %v64, %v63
  %v70 = vpack.c.b16 %v66, %v65
  %vm75 = vcmask 523264
  %v77 = vsel %vm75, %v32, 0
  %79 = vmatprep.subr.bf16.mxu0 0
  %80 = vmatpush1.bf16.msra.mxu0 %v67
  %81 = vmatprep.subr.bf16.mxu0 0
  %82 = vmatpush1.bf16.msra.mxu0 %v68
  %83 = vmatprep.subr.bf16.mxu0 0
  %84 = vmatpush1.bf16.msra.mxu0 %v69
  %85 = vmatprep.subr.bf16.mxu0 0
  %86 = vmatpush1.bf16.msra.mxu0 %v70
  %87 = vmatprep.subr.bf16.mxu0 0
  %88 = vmatpush1.bf16.msra.mxu0 0
  %89 = vmatprep.subr.bf16.mxu0 0
  %90 = vmatpush1.bf16.msra.mxu0 0
  %91 = vmatprep.subr.bf16.mxu0 0
  %92 = vmatpush1.bf16.msra.mxu0 0
  %93 = vmatprep.subr.bf16.mxu0 0
  %94 = vmatpush1.bf16.msra.mxu0 0
  %95 = vmatprep.subr.bf16.mxu0 0
  %96 = vmatpush1.bf16.msra.mxu0 0
  %97 = vmatprep.subr.bf16.mxu0 0
  %98 = vmatpush1.bf16.msra.mxu0 0
  %99 = vmatprep.subr.bf16.mxu0 0
  %100 = vmatpush1.bf16.msra.mxu0 0
  %101 = vmatprep.subr.bf16.mxu0 0
  %102 = vmatpush1.bf16.msra.mxu0 0
  %103 = vmatprep.subr.bf16.mxu0 0
  %104 = vmatpush1.bf16.msra.mxu0 0
  %105 = vmatprep.subr.bf16.mxu0 0
  %106 = vmatpush1.bf16.msra.mxu0 0
  %107 = vmatprep.subr.bf16.mxu0 0
  %108 = vmatpush1.bf16.msra.mxu0 0
  %109 = vmatprep.subr.bf16.mxu0 0
  %110 = vmatpush1.bf16.msra.mxu0 0
  %111 = vmatprep.mubr.bf16.mxu0 0
  %112 = vmatmul.mubr.bf16.gmra.mrb[0].mxu0 %v77
  %v113 = vpop.f32.mrb[0].mxu0
  %v114 = vadd.f32 0.0, %v113
  %v115 = vpop.f32.mrb[0].mxu0
  %v116 = vpop.f32.mrb[0].mxu0
  %v117 = vadd.f32 0.0, %v116
  %v118 = vpop.f32.mrb[0].mxu0
  %119 = vdwg.mxu0
  %v128 = vunpack.c.l.b16 %v43
  %v129 = vunpack.c.l.b16 %v44
  %v130 = vunpack.c.l.b16 %v45
  %v131 = vunpack.c.l.b16 %v46
  %v132 = vunpack.c.l.b16 %v47
  %v133 = vunpack.c.l.b16 %v48
  %v134 = vunpack.c.l.b16 %v49
  %v135 = vunpack.c.l.b16 %v50
  %v136 = vpack.c.b16 %v129, %v128
  %v137 = vpack.c.b16 %v131, %v130
  %v138 = vpack.c.b16 %v133, %v132
  %v139 = vpack.c.b16 %v135, %v134
  %144 = vmatprep.subr.bf16.mxu0 0
  %145 = vmatpush1.bf16.msra.mxu0 %v136
  %146 = vmatprep.subr.bf16.mxu0 0
  %147 = vmatpush1.bf16.msra.mxu0 %v137
  %148 = vmatprep.subr.bf16.mxu0 0
  %149 = vmatpush1.bf16.msra.mxu0 %v138
  %150 = vmatprep.subr.bf16.mxu0 0
  %151 = vmatpush1.bf16.msra.mxu0 %v139
  %152 = vmatprep.subr.bf16.mxu0 0
  %153 = vmatpush1.bf16.msra.mxu0 0
  %154 = vmatprep.subr.bf16.mxu0 0
  %155 = vmatpush1.bf16.msra.mxu0 0
  %156 = vmatprep.subr.bf16.mxu0 0
  %157 = vmatpush1.bf16.msra.mxu0 0
  %158 = vmatprep.subr.bf16.mxu0 0
  %159 = vmatpush1.bf16.msra.mxu0 0
  %160 = vmatprep.subr.bf16.mxu0 0
  %161 = vmatpush1.bf16.msra.mxu0 0
  %162 = vmatprep.subr.bf16.mxu0 0
  %163 = vmatpush1.bf16.msra.mxu0 0
  %164 = vmatprep.subr.bf16.mxu0 0
  %165 = vmatpush1.bf16.msra.mxu0 0
  %166 = vmatprep.subr.bf16.mxu0 0
  %167 = vmatpush1.bf16.msra.mxu0 0
  %168 = vmatprep.subr.bf16.mxu0 0
  %169 = vmatpush1.bf16.msra.mxu0 0
  %170 = vmatprep.subr.bf16.mxu0 0
  %171 = vmatpush1.bf16.msra.mxu0 0
  %172 = vmatprep.subr.bf16.mxu0 0
  %173 = vmatpush1.bf16.msra.mxu0 0
  %174 = vmatprep.subr.bf16.mxu0 0
  %175 = vmatpush1.bf16.msra.mxu0 0
  %176 = vmatprep.mubr.bf16.mxu0 0
  %177 = vmatmul.mubr.bf16.gmra.mrb[0].mxu0 %v77
  %v178 = vpop.f32.mrb[0].mxu0
  %v179 = vadd.f32 0.0, %v178
  %v180 = vpop.f32.mrb[0].mxu0
  %v181 = vpop.f32.mrb[0].mxu0
  %v182 = vadd.f32 0.0, %v181
  %v183 = vpop.f32.mrb[0].mxu0
  %184 = vdwg.mxu0
  %s185 = scalar_lea.vmem %s2, 64
  %v186 = vld [vmem:[%s185] sm:$0xf]
  %v187 = vld [vmem:[%s185 + $0x4] sm:$0xf]
  %v188 = vld [vmem:[%s185 + $0x8] sm:$0xf]
  %v189 = vld [vmem:[%s185 + $0xc] sm:$0xf]
  %v190 = vld [vmem:[%s185 + $0x10] sm:$0xf]
  %v191 = vld [vmem:[%s185 + $0x14] sm:$0xf]
  %v192 = vld [vmem:[%s185 + $0x18] sm:$0xf]
  %v193 = vld [vmem:[%s185 + $0x1c] sm:$0xf]
  %v194 = vld [vmem:[%s185 + $0x20] sm:$0xf]
  %v195 = vld [vmem:[%s185 + $0x24] sm:$0xf]
  %v196 = vld [vmem:[%s185 + $0x28] sm:$0xf]
  %v197 = vld [vmem:[%s185 + $0x2c] sm:$0xf]
  %v198 = vld [vmem:[%s185 + $0x30] sm:$0xf]
  %v199 = vld [vmem:[%s185 + $0x34] sm:$0xf]
  %v200 = vld [vmem:[%s185 + $0x38] sm:$0xf]
  %v201 = vld [vmem:[%s185 + $0x3c] sm:$0xf]
  %v210 = vunpack.c.l.b16 %v186
  %v211 = vunpack.c.l.b16 %v187
  %v212 = vunpack.c.l.b16 %v188
  %v213 = vunpack.c.l.b16 %v189
  %v214 = vunpack.c.l.b16 %v190
  %v215 = vunpack.c.l.b16 %v191
  %v216 = vunpack.c.l.b16 %v192
  %v217 = vunpack.c.l.b16 %v193
  %v218 = vpack.c.b16 %v211, %v210
  %v219 = vpack.c.b16 %v213, %v212
  %v220 = vpack.c.b16 %v215, %v214
  %v221 = vpack.c.b16 %v217, %v216
  %226 = vmatprep.subr.bf16.mxu0 0
  %227 = vmatpush1.bf16.msra.mxu0 %v218
  %228 = vmatprep.subr.bf16.mxu0 0
  %229 = vmatpush1.bf16.msra.mxu0 %v219
  %230 = vmatprep.subr.bf16.mxu0 0
  %231 = vmatpush1.bf16.msra.mxu0 %v220
  %232 = vmatprep.subr.bf16.mxu0 0
  %233 = vmatpush1.bf16.msra.mxu0 %v221
  %234 = vmatprep.subr.bf16.mxu0 0
  %235 = vmatpush1.bf16.msra.mxu0 0
  %236 = vmatprep.subr.bf16.mxu0 0
  %237 = vmatpush1.bf16.msra.mxu0 0
  %238 = vmatprep.subr.bf16.mxu0 0
  %239 = vmatpush1.bf16.msra.mxu0 0
  %240 = vmatprep.subr.bf16.mxu0 0
  %241 = vmatpush1.bf16.msra.mxu0 0
  %242 = vmatprep.subr.bf16.mxu0 0
  %243 = vmatpush1.bf16.msra.mxu0 0
  %244 = vmatprep.subr.bf16.mxu0 0
  %245 = vmatpush1.bf16.msra.mxu0 0
  %246 = vmatprep.subr.bf16.mxu0 0
  %247 = vmatpush1.bf16.msra.mxu0 0
  %248 = vmatprep.subr.bf16.mxu0 0
  %249 = vmatpush1.bf16.msra.mxu0 0
  %250 = vmatprep.subr.bf16.mxu0 0
  %251 = vmatpush1.bf16.msra.mxu0 0
  %252 = vmatprep.subr.bf16.mxu0 0
  %253 = vmatpush1.bf16.msra.mxu0 0
  %254 = vmatprep.subr.bf16.mxu0 0
  %255 = vmatpush1.bf16.msra.mxu0 0
  %256 = vmatprep.subr.bf16.mxu0 0
  %257 = vmatpush1.bf16.msra.mxu0 0
  %258 = vmatprep.mubr.bf16.mxu0 0
  %259 = vmatmul.mubr.bf16.gmra.mrb[0].mxu0 %v77
  %v260 = vpop.f32.mrb[0].mxu0
  %v261 = vadd.f32 0.0, %v260
  %v262 = vpop.f32.mrb[0].mxu0
  %v263 = vpop.f32.mrb[0].mxu0
  %v264 = vadd.f32 0.0, %v263
  %v265 = vpop.f32.mrb[0].mxu0
  %266 = vdwg.mxu0
  %v275 = vunpack.c.l.b16 %v194
  %v276 = vunpack.c.l.b16 %v195
  %v277 = vunpack.c.l.b16 %v196
  %v278 = vunpack.c.l.b16 %v197
  %v279 = vunpack.c.l.b16 %v198
  %v280 = vunpack.c.l.b16 %v199
  %v281 = vunpack.c.l.b16 %v200
  %v282 = vunpack.c.l.b16 %v201
  %v283 = vpack.c.b16 %v276, %v275
  %v284 = vpack.c.b16 %v278, %v277
  %v285 = vpack.c.b16 %v280, %v279
  %v286 = vpack.c.b16 %v282, %v281
  %291 = vmatprep.subr.bf16.mxu0 0
  %292 = vmatpush1.bf16.msra.mxu0 %v283
  %293 = vmatprep.subr.bf16.mxu0 0
  %294 = vmatpush1.bf16.msra.mxu0 %v284
  %295 = vmatprep.subr.bf16.mxu0 0
  %296 = vmatpush1.bf16.msra.mxu0 %v285
  %297 = vmatprep.subr.bf16.mxu0 0
  %298 = vmatpush1.bf16.msra.mxu0 %v286
  %299 = vmatprep.subr.bf16.mxu0 0
  %300 = vmatpush1.bf16.msra.mxu0 0
  %301 = vmatprep.subr.bf16.mxu0 0
  %302 = vmatpush1.bf16.msra.mxu0 0
  %303 = vmatprep.subr.bf16.mxu0 0
  %304 = vmatpush1.bf16.msra.mxu0 0
  %305 = vmatprep.subr.bf16.mxu0 0
  %306 = vmatpush1.bf16.msra.mxu0 0
  %307 = vmatprep.subr.bf16.mxu0 0
  %308 = vmatpush1.bf16.msra.mxu0 0
  %309 = vmatprep.subr.bf16.mxu0 0
  %310 = vmatpush1.bf16.msra.mxu0 0
  %311 = vmatprep.subr.bf16.mxu0 0
  %312 = vmatpush1.bf16.msra.mxu0 0
  %313 = vmatprep.subr.bf16.mxu0 0
  %314 = vmatpush1.bf16.msra.mxu0 0
  %315 = vmatprep.subr.bf16.mxu0 0
  %316 = vmatpush1.bf16.msra.mxu0 0
  %317 = vmatprep.subr.bf16.mxu0 0
  %318 = vmatpush1.bf16.msra.mxu0 0
  %319 = vmatprep.subr.bf16.mxu0 0
  %320 = vmatpush1.bf16.msra.mxu0 0
  %321 = vmatprep.subr.bf16.mxu0 0
  %322 = vmatpush1.bf16.msra.mxu0 0
  %323 = vmatprep.mubr.bf16.mxu0 0
  %324 = vmatmul.mubr.bf16.gmra.mrb[0].mxu0 %v77
  %v325 = vpop.f32.mrb[0].mxu0
  %v326 = vadd.f32 0.0, %v325
  %v327 = vpop.f32.mrb[0].mxu0
  %v328 = vpop.f32.mrb[0].mxu0
  %v329 = vadd.f32 0.0, %v328
  %v330 = vpop.f32.mrb[0].mxu0
  %331 = vdwg.mxu0
  %s332 = scalar_lea.vmem %s2, 128
  %v333 = vld [vmem:[%s332] sm:$0xf]
  %v334 = vld [vmem:[%s332 + $0x4] sm:$0xf]
  %v335 = vld [vmem:[%s332 + $0x8] sm:$0xf]
  %v336 = vld [vmem:[%s332 + $0xc] sm:$0xf]
  %v337 = vld [vmem:[%s332 + $0x10] sm:$0xf]
  %v338 = vld [vmem:[%s332 + $0x14] sm:$0xf]
  %v339 = vld [vmem:[%s332 + $0x18] sm:$0xf]
  %v340 = vld [vmem:[%s332 + $0x1c] sm:$0xf]
  %v341 = vld [vmem:[%s332 + $0x20] sm:$0xf]
  %v342 = vld [vmem:[%s332 + $0x24] sm:$0xf]
  %v343 = vld [vmem:[%s332 + $0x28] sm:$0xf]
  %v344 = vld [vmem:[%s332 + $0x2c] sm:$0xf]
  %v345 = vld [vmem:[%s332 + $0x30] sm:$0xf]
  %v346 = vld [vmem:[%s332 + $0x34] sm:$0xf]
  %v347 = vld [vmem:[%s332 + $0x38] sm:$0xf]
  %v348 = vld [vmem:[%s332 + $0x3c] sm:$0xf]
  %v357 = vunpack.c.l.b16 %v333
  %v358 = vunpack.c.l.b16 %v334
  %v359 = vunpack.c.l.b16 %v335
  %v360 = vunpack.c.l.b16 %v336
  %v361 = vunpack.c.l.b16 %v337
  %v362 = vunpack.c.l.b16 %v338
  %v363 = vunpack.c.l.b16 %v339
  %v364 = vunpack.c.l.b16 %v340
  %v365 = vpack.c.b16 %v358, %v357
  %v366 = vpack.c.b16 %v360, %v359
  %v367 = vpack.c.b16 %v362, %v361
  %v368 = vpack.c.b16 %v364, %v363
  %373 = vmatprep.subr.bf16.mxu0 0
  %374 = vmatpush1.bf16.msra.mxu0 %v365
  %375 = vmatprep.subr.bf16.mxu0 0
  %376 = vmatpush1.bf16.msra.mxu0 %v366
  %377 = vmatprep.subr.bf16.mxu0 0
  %378 = vmatpush1.bf16.msra.mxu0 %v367
  %379 = vmatprep.subr.bf16.mxu0 0
  %380 = vmatpush1.bf16.msra.mxu0 %v368
  %381 = vmatprep.subr.bf16.mxu0 0
  %382 = vmatpush1.bf16.msra.mxu0 0
  %383 = vmatprep.subr.bf16.mxu0 0
  %384 = vmatpush1.bf16.msra.mxu0 0
  %385 = vmatprep.subr.bf16.mxu0 0
  %386 = vmatpush1.bf16.msra.mxu0 0
  %387 = vmatprep.subr.bf16.mxu0 0
  %388 = vmatpush1.bf16.msra.mxu0 0
  %389 = vmatprep.subr.bf16.mxu0 0
  %390 = vmatpush1.bf16.msra.mxu0 0
  %391 = vmatprep.subr.bf16.mxu0 0
  %392 = vmatpush1.bf16.msra.mxu0 0
  %393 = vmatprep.subr.bf16.mxu0 0
  %394 = vmatpush1.bf16.msra.mxu0 0
  %395 = vmatprep.subr.bf16.mxu0 0
  %396 = vmatpush1.bf16.msra.mxu0 0
  %397 = vmatprep.subr.bf16.mxu0 0
  %398 = vmatpush1.bf16.msra.mxu0 0
  %399 = vmatprep.subr.bf16.mxu0 0
  %400 = vmatpush1.bf16.msra.mxu0 0
  %401 = vmatprep.subr.bf16.mxu0 0
  %402 = vmatpush1.bf16.msra.mxu0 0
  %403 = vmatprep.subr.bf16.mxu0 0
  %404 = vmatpush1.bf16.msra.mxu0 0
  %405 = vmatprep.mubr.bf16.mxu0 0
  %406 = vmatmul.mubr.bf16.gmra.mrb[0].mxu0 %v77
  %v407 = vpop.f32.mrb[0].mxu0
  %v408 = vadd.f32 0.0, %v407
  %v409 = vpop.f32.mrb[0].mxu0
  %v410 = vpop.f32.mrb[0].mxu0
  %v411 = vadd.f32 0.0, %v410
  %v412 = vpop.f32.mrb[0].mxu0
  %413 = vdwg.mxu0
  %v422 = vunpack.c.l.b16 %v341
  %v423 = vunpack.c.l.b16 %v342
  %v424 = vunpack.c.l.b16 %v343
  %v425 = vunpack.c.l.b16 %v344
  %v426 = vunpack.c.l.b16 %v345
  %v427 = vunpack.c.l.b16 %v346
  %v428 = vunpack.c.l.b16 %v347
  %v429 = vunpack.c.l.b16 %v348
  %v430 = vpack.c.b16 %v423, %v422
  %v431 = vpack.c.b16 %v425, %v424
  %v432 = vpack.c.b16 %v427, %v426
  %v433 = vpack.c.b16 %v429, %v428
  %438 = vmatprep.subr.bf16.mxu0 0
  %439 = vmatpush1.bf16.msra.mxu0 %v430
  %440 = vmatprep.subr.bf16.mxu0 0
  %441 = vmatpush1.bf16.msra.mxu0 %v431
  %442 = vmatprep.subr.bf16.mxu0 0
  %443 = vmatpush1.bf16.msra.mxu0 %v432
  %444 = vmatprep.subr.bf16.mxu0 0
  %445 = vmatpush1.bf16.msra.mxu0 %v433
  %446 = vmatprep.subr.bf16.mxu0 0
  %447 = vmatpush1.bf16.msra.mxu0 0
  %448 = vmatprep.subr.bf16.mxu0 0
  %449 = vmatpush1.bf16.msra.mxu0 0
  %450 = vmatprep.subr.bf16.mxu0 0
  %451 = vmatpush1.bf16.msra.mxu0 0
  %452 = vmatprep.subr.bf16.mxu0 0
  %453 = vmatpush1.bf16.msra.mxu0 0
  %454 = vmatprep.subr.bf16.mxu0 0
  %455 = vmatpush1.bf16.msra.mxu0 0
  %456 = vmatprep.subr.bf16.mxu0 0
  %457 = vmatpush1.bf16.msra.mxu0 0
  %458 = vmatprep.subr.bf16.mxu0 0
  %459 = vmatpush1.bf16.msra.mxu0 0
  %460 = vmatprep.subr.bf16.mxu0 0
  %461 = vmatpush1.bf16.msra.mxu0 0
  %462 = vmatprep.subr.bf16.mxu0 0
  %463 = vmatpush1.bf16.msra.mxu0 0
  %464 = vmatprep.subr.bf16.mxu0 0
  %465 = vmatpush1.bf16.msra.mxu0 0
  %466 = vmatprep.subr.bf16.mxu0 0
  %467 = vmatpush1.bf16.msra.mxu0 0
  %468 = vmatprep.subr.bf16.mxu0 0
  %469 = vmatpush1.bf16.msra.mxu0 0
  %470 = vmatprep.mubr.bf16.mxu0 0
  %471 = vmatmul.mubr.bf16.gmra.mrb[0].mxu0 %v77
  %v472 = vpop.f32.mrb[0].mxu0
  %v473 = vadd.f32 0.0, %v472
  %v474 = vpop.f32.mrb[0].mxu0
  %v475 = vpop.f32.mrb[0].mxu0
  %v476 = vadd.f32 0.0, %v475
  %v477 = vpop.f32.mrb[0].mxu0
  %478 = vdwg.mxu0
  %s479 = scalar_lea.vmem %s2, 192
  %v480 = vld [vmem:[%s479] sm:$0xf]
  %v481 = vld [vmem:[%s479 + $0x4] sm:$0xf]
  %v482 = vld [vmem:[%s479 + $0x8] sm:$0xf]
  %v483 = vld [vmem:[%s479 + $0xc] sm:$0xf]
  %v484 = vld [vmem:[%s479 + $0x10] sm:$0xf]
  %v485 = vld [vmem:[%s479 + $0x14] sm:$0xf]
  %v486 = vld [vmem:[%s479 + $0x18] sm:$0xf]
  %v487 = vld [vmem:[%s479 + $0x1c] sm:$0xf]
  %v488 = vld [vmem:[%s479 + $0x20] sm:$0xf]
  %v489 = vld [vmem:[%s479 + $0x24] sm:$0xf]
  %v490 = vld [vmem:[%s479 + $0x28] sm:$0xf]
  %v491 = vld [vmem:[%s479 + $0x2c] sm:$0xf]
  %v492 = vld [vmem:[%s479 + $0x30] sm:$0xf]
  %v493 = vld [vmem:[%s479 + $0x34] sm:$0xf]
  %v494 = vld [vmem:[%s479 + $0x38] sm:$0xf]
  %v495 = vld [vmem:[%s479 + $0x3c] sm:$0xf]
  %v504 = vunpack.c.l.b16 %v480
  %v505 = vunpack.c.l.b16 %v481
  %v506 = vunpack.c.l.b16 %v482
  %v507 = vunpack.c.l.b16 %v483
  %v508 = vunpack.c.l.b16 %v484
  %v509 = vunpack.c.l.b16 %v485
  %v510 = vunpack.c.l.b16 %v486
  %v511 = vunpack.c.l.b16 %v487
  %v512 = vpack.c.b16 %v505, %v504
  %v513 = vpack.c.b16 %v507, %v506
  %v514 = vpack.c.b16 %v509, %v508
  %v515 = vpack.c.b16 %v511, %v510
  %520 = vmatprep.subr.bf16.mxu0 0
  %521 = vmatpush1.bf16.msra.mxu0 %v512
  %522 = vmatprep.subr.bf16.mxu0 0
  %523 = vmatpush1.bf16.msra.mxu0 %v513
  %524 = vmatprep.subr.bf16.mxu0 0
  %525 = vmatpush1.bf16.msra.mxu0 %v514
  %526 = vmatprep.subr.bf16.mxu0 0
  %527 = vmatpush1.bf16.msra.mxu0 %v515
  %528 = vmatprep.subr.bf16.mxu0 0
  %529 = vmatpush1.bf16.msra.mxu0 0
  %530 = vmatprep.subr.bf16.mxu0 0
  %531 = vmatpush1.bf16.msra.mxu0 0
  %532 = vmatprep.subr.bf16.mxu0 0
  %533 = vmatpush1.bf16.msra.mxu0 0
  %534 = vmatprep.subr.bf16.mxu0 0
  %535 = vmatpush1.bf16.msra.mxu0 0
  %536 = vmatprep.subr.bf16.mxu0 0
  %537 = vmatpush1.bf16.msra.mxu0 0
  %538 = vmatprep.subr.bf16.mxu0 0
  %539 = vmatpush1.bf16.msra.mxu0 0
  %540 = vmatprep.subr.bf16.mxu0 0
  %541 = vmatpush1.bf16.msra.mxu0 0
  %542 = vmatprep.subr.bf16.mxu0 0
  %543 = vmatpush1.bf16.msra.mxu0 0
  %544 = vmatprep.subr.bf16.mxu0 0
  %545 = vmatpush1.bf16.msra.mxu0 0
  %546 = vmatprep.subr.bf16.mxu0 0
  %547 = vmatpush1.bf16.msra.mxu0 0
  %548 = vmatprep.subr.bf16.mxu0 0
  %549 = vmatpush1.bf16.msra.mxu0 0
  %550 = vmatprep.subr.bf16.mxu0 0
  %551 = vmatpush1.bf16.msra.mxu0 0
  %552 = vmatprep.mubr.bf16.mxu0 0
  %553 = vmatmul.mubr.bf16.gmra.mrb[0].mxu0 %v77
  %v554 = vpop.f32.mrb[0].mxu0
  %v555 = vadd.f32 0.0, %v554
  %v556 = vpop.f32.mrb[0].mxu0
  %v557 = vpop.f32.mrb[0].mxu0
  %v558 = vadd.f32 0.0, %v557
  %v559 = vpop.f32.mrb[0].mxu0
  %560 = vdwg.mxu0
  %v569 = vunpack.c.l.b16 %v488
  %v570 = vunpack.c.l.b16 %v489
  %v571 = vunpack.c.l.b16 %v490
  %v572 = vunpack.c.l.b16 %v491
  %v573 = vunpack.c.l.b16 %v492
  %v574 = vunpack.c.l.b16 %v493
  %v575 = vunpack.c.l.b16 %v494
  %v576 = vunpack.c.l.b16 %v495
  %v577 = vpack.c.b16 %v570, %v569
  %v578 = vpack.c.b16 %v572, %v571
  %v579 = vpack.c.b16 %v574, %v573
  %v580 = vpack.c.b16 %v576, %v575
  %585 = vmatprep.subr.bf16.mxu0 0
  %586 = vmatpush1.bf16.msra.mxu0 %v577
  %587 = vmatprep.subr.bf16.mxu0 0
  %588 = vmatpush1.bf16.msra.mxu0 %v578
  %589 = vmatprep.subr.bf16.mxu0 0
  %590 = vmatpush1.bf16.msra.mxu0 %v579
  %591 = vmatprep.subr.bf16.mxu0 0
  %592 = vmatpush1.bf16.msra.mxu0 %v580
  %593 = vmatprep.subr.bf16.mxu0 0
  %594 = vmatpush1.bf16.msra.mxu0 0
  %595 = vmatprep.subr.bf16.mxu0 0
  %596 = vmatpush1.bf16.msra.mxu0 0
  %597 = vmatprep.subr.bf16.mxu0 0
  %598 = vmatpush1.bf16.msra.mxu0 0
  %599 = vmatprep.subr.bf16.mxu0 0
  %600 = vmatpush1.bf16.msra.mxu0 0
  %601 = vmatprep.subr.bf16.mxu0 0
  %602 = vmatpush1.bf16.msra.mxu0 0
  %603 = vmatprep.subr.bf16.mxu0 0
  %604 = vmatpush1.bf16.msra.mxu0 0
  %605 = vmatprep.subr.bf16.mxu0 0
  %606 = vmatpush1.bf16.msra.mxu0 0
  %607 = vmatprep.subr.bf16.mxu0 0
  %608 = vmatpush1.bf16.msra.mxu0 0
  %609 = vmatprep.subr.bf16.mxu0 0
  %610 = vmatpush1.bf16.msra.mxu0 0
  %611 = vmatprep.subr.bf16.mxu0 0
  %612 = vmatpush1.bf16.msra.mxu0 0
  %613 = vmatprep.subr.bf16.mxu0 0
  %614 = vmatpush1.bf16.msra.mxu0 0
  %615 = vmatprep.subr.bf16.mxu0 0
  %616 = vmatpush1.bf16.msra.mxu0 0
  %617 = vmatprep.mubr.bf16.mxu0 0
  %618 = vmatmul.mubr.bf16.gmra.mrb[0].mxu0 %v77
  %v619 = vpop.f32.mrb[0].mxu0
  %v620 = vadd.f32 0.0, %v619
  %v621 = vpop.f32.mrb[0].mxu0
  %v622 = vpop.f32.mrb[0].mxu0
  %v623 = vadd.f32 0.0, %v622
  %v624 = vpop.f32.mrb[0].mxu0
  %625 = vdwg.mxu0
  %s626 = scalar_lea.vmem %s2, 256
  %v627 = vld [vmem:[%s626] sm:$0xf]
  %v628 = vld [vmem:[%s626 + $0x4] sm:$0xf]
  %v629 = vld [vmem:[%s626 + $0x8] sm:$0xf]
  %v630 = vld [vmem:[%s626 + $0xc] sm:$0xf]
  %v631 = vld [vmem:[%s626 + $0x10] sm:$0xf]
  %v632 = vld [vmem:[%s626 + $0x14] sm:$0xf]
  %v633 = vld [vmem:[%s626 + $0x18] sm:$0xf]
  %v634 = vld [vmem:[%s626 + $0x1c] sm:$0xf]
  %v635 = vld [vmem:[%s626 + $0x20] sm:$0xf]
  %v636 = vld [vmem:[%s626 + $0x24] sm:$0xf]
  %v637 = vld [vmem:[%s626 + $0x28] sm:$0xf]
  %v638 = vld [vmem:[%s626 + $0x2c] sm:$0xf]
  %v639 = vld [vmem:[%s626 + $0x30] sm:$0xf]
  %v640 = vld [vmem:[%s626 + $0x34] sm:$0xf]
  %v641 = vld [vmem:[%s626 + $0x38] sm:$0xf]
  %v642 = vld [vmem:[%s626 + $0x3c] sm:$0xf]
  %v651 = vunpack.c.l.b16 %v627
  %v652 = vunpack.c.l.b16 %v628
  %v653 = vunpack.c.l.b16 %v629
  %v654 = vunpack.c.l.b16 %v630
  %v655 = vunpack.c.l.b16 %v631
  %v656 = vunpack.c.l.b16 %v632
  %v657 = vunpack.c.l.b16 %v633
  %v658 = vunpack.c.l.b16 %v634
  %v659 = vpack.c.b16 %v652, %v651
  %v660 = vpack.c.b16 %v654, %v653
  %v661 = vpack.c.b16 %v656, %v655
  %v662 = vpack.c.b16 %v658, %v657
  %667 = vmatprep.subr.bf16.mxu0 0
  %668 = vmatpush1.bf16.msra.mxu0 %v659
  %669 = vmatprep.subr.bf16.mxu0 0
  %670 = vmatpush1.bf16.msra.mxu0 %v660
  %671 = vmatprep.subr.bf16.mxu0 0
  %672 = vmatpush1.bf16.msra.mxu0 %v661
  %673 = vmatprep.subr.bf16.mxu0 0
  %674 = vmatpush1.bf16.msra.mxu0 %v662
  %675 = vmatprep.subr.bf16.mxu0 0
  %676 = vmatpush1.bf16.msra.mxu0 0
  %677 = vmatprep.subr.bf16.mxu0 0
  %678 = vmatpush1.bf16.msra.mxu0 0
  %679 = vmatprep.subr.bf16.mxu0 0
  %680 = vmatpush1.bf16.msra.mxu0 0
  %681 = vmatprep.subr.bf16.mxu0 0
  %682 = vmatpush1.bf16.msra.mxu0 0
  %683 = vmatprep.subr.bf16.mxu0 0
  %684 = vmatpush1.bf16.msra.mxu0 0
  %685 = vmatprep.subr.bf16.mxu0 0
  %686 = vmatpush1.bf16.msra.mxu0 0
  %687 = vmatprep.subr.bf16.mxu0 0
  %688 = vmatpush1.bf16.msra.mxu0 0
  %689 = vmatprep.subr.bf16.mxu0 0
  %690 = vmatpush1.bf16.msra.mxu0 0
  %691 = vmatprep.subr.bf16.mxu0 0
  %692 = vmatpush1.bf16.msra.mxu0 0
  %693 = vmatprep.subr.bf16.mxu0 0
  %694 = vmatpush1.bf16.msra.mxu0 0
  %695 = vmatprep.subr.bf16.mxu0 0
  %696 = vmatpush1.bf16.msra.mxu0 0
  %697 = vmatprep.subr.bf16.mxu0 0
  %698 = vmatpush1.bf16.msra.mxu0 0
  %699 = vmatprep.mubr.bf16.mxu0 0
  %700 = vmatmul.mubr.bf16.gmra.mrb[0].mxu0 %v77
  %v701 = vpop.f32.mrb[0].mxu0
  %v702 = vadd.f32 0.0, %v701
  %v703 = vpop.f32.mrb[0].mxu0
  %v704 = vpop.f32.mrb[0].mxu0
  %v705 = vadd.f32 0.0, %v704
  %v706 = vpop.f32.mrb[0].mxu0
  %707 = vdwg.mxu0
  %v716 = vunpack.c.l.b16 %v635
  %v717 = vunpack.c.l.b16 %v636
  %v718 = vunpack.c.l.b16 %v637
  %v719 = vunpack.c.l.b16 %v638
  %v720 = vunpack.c.l.b16 %v639
  %v721 = vunpack.c.l.b16 %v640
  %v722 = vunpack.c.l.b16 %v641
  %v723 = vunpack.c.l.b16 %v642
  %v724 = vpack.c.b16 %v717, %v716
  %v725 = vpack.c.b16 %v719, %v718
  %v726 = vpack.c.b16 %v721, %v720
  %v727 = vpack.c.b16 %v723, %v722
  %732 = vmatprep.subr.bf16.mxu0 0
  %733 = vmatpush1.bf16.msra.mxu0 %v724
  %734 = vmatprep.subr.bf16.mxu0 0
  %735 = vmatpush1.bf16.msra.mxu0 %v725
  %736 = vmatprep.subr.bf16.mxu0 0
  %737 = vmatpush1.bf16.msra.mxu0 %v726
  %738 = vmatprep.subr.bf16.mxu0 0
  %739 = vmatpush1.bf16.msra.mxu0 %v727
  %740 = vmatprep.subr.bf16.mxu0 0
  %741 = vmatpush1.bf16.msra.mxu0 0
  %742 = vmatprep.subr.bf16.mxu0 0
  %743 = vmatpush1.bf16.msra.mxu0 0
  %744 = vmatprep.subr.bf16.mxu0 0
  %745 = vmatpush1.bf16.msra.mxu0 0
  %746 = vmatprep.subr.bf16.mxu0 0
  %747 = vmatpush1.bf16.msra.mxu0 0
  %748 = vmatprep.subr.bf16.mxu0 0
  %749 = vmatpush1.bf16.msra.mxu0 0
  %750 = vmatprep.subr.bf16.mxu0 0
  %751 = vmatpush1.bf16.msra.mxu0 0
  %752 = vmatprep.subr.bf16.mxu0 0
  %753 = vmatpush1.bf16.msra.mxu0 0
  %754 = vmatprep.subr.bf16.mxu0 0
  %755 = vmatpush1.bf16.msra.mxu0 0
  %756 = vmatprep.subr.bf16.mxu0 0
  %757 = vmatpush1.bf16.msra.mxu0 0
  %758 = vmatprep.subr.bf16.mxu0 0
  %759 = vmatpush1.bf16.msra.mxu0 0
  %760 = vmatprep.subr.bf16.mxu0 0
  %761 = vmatpush1.bf16.msra.mxu0 0
  %762 = vmatprep.subr.bf16.mxu0 0
  %763 = vmatpush1.bf16.msra.mxu0 0
  %764 = vmatprep.mubr.bf16.mxu0 0
  %765 = vmatmul.mubr.bf16.gmra.mrb[0].mxu0 %v77
  %v766 = vpop.f32.mrb[0].mxu0
  %v767 = vadd.f32 0.0, %v766
  %v768 = vpop.f32.mrb[0].mxu0
  %v769 = vpop.f32.mrb[0].mxu0
  %v770 = vadd.f32 0.0, %v769
  %v771 = vpop.f32.mrb[0].mxu0
  %772 = vdwg.mxu0
  %v773 = vld [vmem:[%s4] sm:$0x1]
  %v774 = vld [vmem:[%s4 + $0x1] sm:$0x1]
  %v775 = vlaneseq
  %v776 = vshrl.u32 %v775, 7
  %v777 = vlaneseq
  %v778 = vand.u32 %v777, 127
  %vm779 = vcmp.le.s32.totalorder %v778, %v776
  %v780 = vsel %vm779, 0.0, -1e+30
  %vm781 = vcmask 261120
  %782 = vst.msk [vmem:[#allocation2] sm:$0xff] %vm781, %v408
  %783 = vst.msk [vmem:[#allocation2 + $0x20] sm:$0xff] %vm781, %v473
  %784 = vst.msk [vmem:[#allocation3] sm:$0xff] %vm781, %v555
  %785 = vst.msk [vmem:[#allocation3 + $0x20] sm:$0xff] %vm781, %v620
  %786 = vst.msk [vmem:[#allocation4] sm:$0xff] %vm781, %v702
  %787 = vst.msk [vmem:[#allocation4 + $0x20] sm:$0xff] %vm781, %v767
  %v788 = vld [vmem:[#allocation2] sm:$0xff]
  %v789 = vld [vmem:[#allocation2 + $0x20] sm:$0xff]
  %v790 = vld [vmem:[#allocation3] sm:$0xff]
  %v791 = vld [vmem:[#allocation3 + $0x20] sm:$0xff]
  %v792 = vld [vmem:[#allocation4] sm:$0xff]
  %v793 = vld [vmem:[#allocation4 + $0x20] sm:$0xff]
  %v794 = vmul.f32 %v114, %v33
  %v795 = vmul.f32 %v179, %v33
  %v796 = vmul.f32 %v261, %v34
  %v797 = vmul.f32 %v326, %v34
  %v798 = vadd.f32 %v794, %v796
  %v799 = vadd.f32 %v795, %v797
  %v800 = vmul.f32 %v788, %v33
  %v801 = vmul.f32 %v789, %v33
  %v802 = vmul.f32 %v790, %v34
  %v803 = vmul.f32 %v791, %v34
  %v804 = vadd.f32 %v800, %v802
  %v805 = vadd.f32 %v801, %v803
  %806 = vst.msk [vmem:[#allocation2 + $0x8] sm:$0xff] %vm781, %v804
  %807 = vst.msk [vmem:[#allocation2 + $0x28] sm:$0xff] %vm781, %v805
  %v808 = vmul.f32 %v790, %v33
  %v809 = vmul.f32 %v791, %v33
  %v810 = vmul.f32 %v788, %v34
  %v811 = vmul.f32 %v789, %v34
  %v812 = vsub.f32 %v808, %v810
  %v813 = vsub.f32 %v809, %v811
  %814 = vst.msk [vmem:[#allocation3 + $0x8] sm:$0xff] %vm781, %v812
  %815 = vst.msk [vmem:[#allocation3 + $0x28] sm:$0xff] %vm781, %v813
  %816 = vst.msk [vmem:[#allocation4 + $0x8] sm:$0xff] %vm781, %v792
  %817 = vst.msk [vmem:[#allocation4 + $0x28] sm:$0xff] %vm781, %v793
  %v818 = vpack.c.bf16 %v798, %v798
  %v819 = vpack.c.bf16 %v799, %v799
  %v820 = vpack.c.bf16 %v804, %v804
  %v821 = vpack.c.bf16 %v805, %v805
  %v823 = vsel %vm781, %v818, 0
  %v826 = vsel %vm781, %v820, 0
  %828 = vmatprep.subr.bf16.mxu0 0
  %829 = vmatpush1.bf16.xpose.msra.mxu0 %v826
  %830 = vmatprep.subr.bf16.mxu0 0
  %831 = vmatpush1.bf16.xpose.msra.mxu0 0
  %832 = vmatprep.subr.bf16.mxu0 0
  %833 = vmatpush1.bf16.xpose.msra.mxu0 0
  %834 = vmatprep.subr.bf16.mxu0 0
  %835 = vmatpush1.bf16.xpose.msra.mxu0 0
  %836 = vmatprep.subr.bf16.mxu0 0
  %837 = vmatpush1.bf16.xpose.msra.mxu0 0
  %838 = vmatprep.subr.bf16.mxu0 0
  %839 = vmatpush1.bf16.xpose.msra.mxu0 0
  %840 = vmatprep.subr.bf16.mxu0 0
  %841 = vmatpush1.bf16.xpose.msra.mxu0 0
  %842 = vmatprep.subr.bf16.mxu0 0
  %843 = vmatpush1.bf16.xpose.msra.mxu0 0
  %844 = vmatprep.subr.bf16.mxu0 0
  %845 = vmatpush1.bf16.xpose.msra.mxu0 0
  %846 = vmatprep.subr.bf16.mxu0 0
  %847 = vmatpush1.bf16.xpose.msra.mxu0 0
  %848 = vmatprep.subr.bf16.mxu0 0
  %849 = vmatpush1.bf16.xpose.msra.mxu0 0
  %850 = vmatprep.subr.bf16.mxu0 0
  %851 = vmatpush1.bf16.xpose.msra.mxu0 0
  %852 = vmatprep.subr.bf16.mxu0 0
  %853 = vmatpush1.bf16.xpose.msra.mxu0 0
  %854 = vmatprep.subr.bf16.mxu0 0
  %855 = vmatpush1.bf16.xpose.msra.mxu0 0
  %856 = vmatprep.subr.bf16.mxu0 0
  %857 = vmatpush1.bf16.xpose.msra.mxu0 0
  %858 = vmatprep.subr.bf16.mxu0 0
  %859 = vmatpush1.bf16.xpose.msra.mxu0 0
  %860 = vmatprep.mubr.bf16.mxu0 0
  %861 = vmatmul.mubr.bf16.gmra.mrb[0].mxu0 %v823
  %v862 = vpop.f32.mrb[0].mxu0
  %v863 = vadd.f32 0.0, %v862
  %v864 = vpop.f32.mrb[0].mxu0
  %v865 = vpop.f32.mrb[0].mxu0
  %v866 = vpop.f32.mrb[0].mxu0
  %867 = vdwg.mxu0
  %v869 = vsel %vm781, %v819, 0
  %v872 = vsel %vm781, %v821, 0
  %874 = vmatprep.subr.bf16.mxu0 0
  %875 = vmatpush1.bf16.xpose.msra.mxu0 %v872
  %876 = vmatprep.subr.bf16.mxu0 0
  %877 = vmatpush1.bf16.xpose.msra.mxu0 0
  %878 = vmatprep.subr.bf16.mxu0 0
  %879 = vmatpush1.bf16.xpose.msra.mxu0 0
  %880 = vmatprep.subr.bf16.mxu0 0
  %881 = vmatpush1.bf16.xpose.msra.mxu0 0
  %882 = vmatprep.subr.bf16.mxu0 0
  %883 = vmatpush1.bf16.xpose.msra.mxu0 0
  %884 = vmatprep.subr.bf16.mxu0 0
  %885 = vmatpush1.bf16.xpose.msra.mxu0 0
  %886 = vmatprep.subr.bf16.mxu0 0
  %887 = vmatpush1.bf16.xpose.msra.mxu0 0
  %888 = vmatprep.subr.bf16.mxu0 0
  %889 = vmatpush1.bf16.xpose.msra.mxu0 0
  %890 = vmatprep.subr.bf16.mxu0 0
  %891 = vmatpush1.bf16.xpose.msra.mxu0 0
  %892 = vmatprep.subr.bf16.mxu0 0
  %893 = vmatpush1.bf16.xpose.msra.mxu0 0
  %894 = vmatprep.subr.bf16.mxu0 0
  %895 = vmatpush1.bf16.xpose.msra.mxu0 0
  %896 = vmatprep.subr.bf16.mxu0 0
  %897 = vmatpush1.bf16.xpose.msra.mxu0 0
  %898 = vmatprep.subr.bf16.mxu0 0
  %899 = vmatpush1.bf16.xpose.msra.mxu0 0
  %900 = vmatprep.subr.bf16.mxu0 0
  %901 = vmatpush1.bf16.xpose.msra.mxu0 0
  %902 = vmatprep.subr.bf16.mxu0 0
  %903 = vmatpush1.bf16.xpose.msra.mxu0 0
  %904 = vmatprep.subr.bf16.mxu0 0
  %905 = vmatpush1.bf16.xpose.msra.mxu0 0
  %906 = vmatprep.mubr.bf16.mxu0 0
  %907 = vmatmul.mubr.bf16.gmra.mrb[0].mxu0 %v869
  %v908 = vpop.f32.mrb[0].mxu0
  %v909 = vadd.f32 0.0, %v908
  %v910 = vpop.f32.mrb[0].mxu0
  %v911 = vpop.f32.mrb[0].mxu0
  %v912 = vpop.f32.mrb[0].mxu0
  %913 = vdwg.mxu0
  %v914 = vmul.f32 %v863, 0.17677669
  %v915 = vmul.f32 %v909, 0.17677669
  %v916 = vadd.f32 %v914, %v780
  %v917 = vadd.f32 %v915, %v780
  %vm918 = vcmask 64512
  %v919 = vsel %vm918, %v916, -inf
  %920 = vmax.xlane.f32.xlu0 %v919
  %v921 = vpop.xlane.xlu0 %920
  %v922 = vsel %vm918, %v917, -inf
  %923 = vmax.xlane.f32.xlu0 %v922
  %v924 = vpop.xlane.xlu0 %923
  %v925 = vsub.f32 %v916, %v921
  %v926 = vsub.f32 %v917, %v924
  %v927 = vmul.f32 %v925, 1.442695
  %v928 = vpow.pop %v927
  %v929 = vmul.f32 %v926, 1.442695
  %v930 = vpow.pop %v929
  %v931 = vsel %vm918, %v928, 0.0
  %932 = vadd.xlane.f32.xlu0 %v931
  %v933 = vpop.xlane.xlu0 %932
  %v934 = vsel %vm918, %v930, 0.0
  %935 = vadd.xlane.f32.xlu0 %v934
  %v936 = vpop.xlane.xlu0 %935
  %v937 = vpack.c.bf16 %v928, %v928
  %v938 = vpack.c.bf16 %v930, %v930
  %v939 = vpack.c.bf16 %v792, %v792
  %v940 = vpack.c.bf16 %v793, %v793
  %v942 = vsel %vm918, %v937, 0
  %vm944 = vcmask 1043456
  %v946 = vsel %vm944, %v939, 0
  %948 = vmatprep.subr.bf16.mxu0 0
  %949 = vmatpush1.bf16.msra.mxu0 %v946
  %950 = vmatprep.subr.bf16.mxu0 0
  %951 = vmatpush1.bf16.msra.mxu0 0
  %952 = vmatprep.subr.bf16.mxu0 0
  %953 = vmatpush1.bf16.msra.mxu0 0
  %954 = vmatprep.subr.bf16.mxu0 0
  %955 = vmatpush1.bf16.msra.mxu0 0
  %956 = vmatprep.subr.bf16.mxu0 0
  %957 = vmatpush1.bf16.msra.mxu0 0
  %958 = vmatprep.subr.bf16.mxu0 0
  %959 = vmatpush1.bf16.msra.mxu0 0
  %960 = vmatprep.subr.bf16.mxu0 0
  %961 = vmatpush1.bf16.msra.mxu0 0
  %962 = vmatprep.subr.bf16.mxu0 0
  %963 = vmatpush1.bf16.msra.mxu0 0
  %964 = vmatprep.subr.bf16.mxu0 0
  %965 = vmatpush1.bf16.msra.mxu0 0
  %966 = vmatprep.subr.bf16.mxu0 0
  %967 = vmatpush1.bf16.msra.mxu0 0
  %968 = vmatprep.subr.bf16.mxu0 0
  %969 = vmatpush1.bf16.msra.mxu0 0
  %970 = vmatprep.subr.bf16.mxu0 0
  %971 = vmatpush1.bf16.msra.mxu0 0
  %972 = vmatprep.subr.bf16.mxu0 0
  %973 = vmatpush1.bf16.msra.mxu0 0
  %974 = vmatprep.subr.bf16.mxu0 0
  %975 = vmatpush1.bf16.msra.mxu0 0
  %976 = vmatprep.subr.bf16.mxu0 0
  %977 = vmatpush1.bf16.msra.mxu0 0
  %978 = vmatprep.subr.bf16.mxu0 0
  %979 = vmatpush1.bf16.msra.mxu0 0
  %980 = vmatprep.mubr.bf16.mxu0 0
  %981 = vmatmul.mubr.bf16.gmra.mrb[0].mxu0 %v942
  %v982 = vpop.f32.mrb[0].mxu0
  %v983 = vadd.f32 0.0, %v982
  %v984 = vpop.f32.mrb[0].mxu0
  %v985 = vpop.f32.mrb[0].mxu0
  %v986 = vpop.f32.mrb[0].mxu0
  %987 = vdwg.mxu0
  %v989 = vsel %vm918, %v938, 0
  %v992 = vsel %vm944, %v940, 0
  %994 = vmatprep.subr.bf16.mxu0 0
  %995 = vmatpush1.bf16.msra.mxu0 %v992
  %996 = vmatprep.subr.bf16.mxu0 0
  %997 = vmatpush1.bf16.msra.mxu0 0
  %998 = vmatprep.subr.bf16.mxu0 0
  %999 = vmatpush1.bf16.msra.mxu0 0
  %1000 = vmatprep.subr.bf16.mxu0 0
  %1001 = vmatpush1.bf16.msra.mxu0 0
  %1002 = vmatprep.subr.bf16.mxu0 0
  %1003 = vmatpush1.bf16.msra.mxu0 0
  %1004 = vmatprep.subr.bf16.mxu0 0
  %1005 = vmatpush1.bf16.msra.mxu0 0
  %1006 = vmatprep.subr.bf16.mxu0 0
  %1007 = vmatpush1.bf16.msra.mxu0 0
  %1008 = vmatprep.subr.bf16.mxu0 0
  %1009 = vmatpush1.bf16.msra.mxu0 0
  %1010 = vmatprep.subr.bf16.mxu0 0
  %1011 = vmatpush1.bf16.msra.mxu0 0
  %1012 = vmatprep.subr.bf16.mxu0 0
  %1013 = vmatpush1.bf16.msra.mxu0 0
  %1014 = vmatprep.subr.bf16.mxu0 0
  %1015 = vmatpush1.bf16.msra.mxu0 0
  %1016 = vmatprep.subr.bf16.mxu0 0
  %1017 = vmatpush1.bf16.msra.mxu0 0
  %1018 = vmatprep.subr.bf16.mxu0 0
  %1019 = vmatpush1.bf16.msra.mxu0 0
  %1020 = vmatprep.subr.bf16.mxu0 0
  %1021 = vmatpush1.bf16.msra.mxu0 0
  %1022 = vmatprep.subr.bf16.mxu0 0
  %1023 = vmatpush1.bf16.msra.mxu0 0
  %1024 = vmatprep.subr.bf16.mxu0 0
  %1025 = vmatpush1.bf16.msra.mxu0 0
  %1026 = vmatprep.mubr.bf16.mxu0 0
  %1027 = vmatmul.mubr.bf16.gmra.mrb[0].mxu0 %v989
  %v1028 = vpop.f32.mrb[0].mxu0
  %v1029 = vadd.f32 0.0, %v1028
  %v1030 = vpop.f32.mrb[0].mxu0
  %v1031 = vpop.f32.mrb[0].mxu0
  %v1032 = vpop.f32.mrb[0].mxu0
  %1033 = vdwg.mxu0
  %v1034 = vrcp.pop %v933
  %v1035 = vrcp.pop %v936
  %v1036 = vmul.f32 %v983, %v1034
  %v1037 = vmul.f32 %v1029, %v1035
  %v1038 = vmul.f32 %v1036, %v1036
  %v1039 = vmul.f32 %v1037, %v1037
  %v1040 = vsel %vm781, %v1038, 0.0
  %1041 = vadd.xlane.f32.xlu0 %v1040
  %v1042 = vpop.xlane.xlu0 %1041
  %v1043 = vsel %vm781, %v1039, 0.0
  %1044 = vadd.xlane.f32.xlu0 %v1043
  %v1045 = vpop.xlane.xlu0 %1044
  %v1046 = vadd.f32 %v1042, %v1045
  %v1047 = vrcp.pop 64.0
  %v1048 = vmul.f32 %v1046, %v1047
  %v1049 = vadd.f32 %v1048, 1e-05
  %v1050 = vrsqrt.pop %v1049
  %v1051 = vmul.f32 %v1036, %v1050
  %v1052 = vmul.f32 %v1037, %v1050
  %v1055 = vlaneseq
  %v1056 = vshrl.u32 %v1055, 7
  %v1057 = vsub.s32 0, %v1056
  %v1058 = vrot.slane %v773, %v1057
  %v1059 = vlaneseq
  %v1060 = vshrl.u32 %v1059, 7
  %v1061 = vsub.s32 0, %v1060
  %v1062 = vrot.slane %v774, %v1061
  %v1065 = vmul.f32 %v1051, %v1058
  %v1066 = vmul.f32 %v1052, %v1062
  %v1067 = vadd.f32 %v1065, 0.0
  %v1068 = vadd.f32 %v1066, 0.0
  %s1069 = scalar_lea.vmem [#allocation2], 64
  %1070 = vst.msk [vmem:[%s1069] sm:$0xff] %vm781, %v411
  %1071 = vst.msk [vmem:[%s1069 + $0x20] sm:$0xff] %vm781, %v476
  %s1072 = scalar_lea.vmem [#allocation3], 64
  %1073 = vst.msk [vmem:[%s1072] sm:$0xff] %vm781, %v558
  %1074 = vst.msk [vmem:[%s1072 + $0x20] sm:$0xff] %vm781, %v623
  %s1075 = scalar_lea.vmem [#allocation4], 64
  %1076 = vst.msk [vmem:[%s1075] sm:$0xff] %vm781, %v705
  %1077 = vst.msk [vmem:[%s1075 + $0x20] sm:$0xff] %vm781, %v770
  %v1078 = vld [vmem:[%s1069] sm:$0xff]
  %v1079 = vld [vmem:[%s1069 + $0x20] sm:$0xff]
  %v1080 = vld [vmem:[%s1072] sm:$0xff]
  %v1081 = vld [vmem:[%s1072 + $0x20] sm:$0xff]
  %v1082 = vld [vmem:[%s1075] sm:$0xff]
  %v1083 = vld [vmem:[%s1075 + $0x20] sm:$0xff]
  %v1084 = vmul.f32 %v117, %v33
  %v1085 = vmul.f32 %v182, %v33
  %v1086 = vmul.f32 %v264, %v34
  %v1087 = vmul.f32 %v329, %v34
  %v1088 = vadd.f32 %v1084, %v1086
  %v1089 = vadd.f32 %v1085, %v1087
  %v1090 = vmul.f32 %v1078, %v33
  %v1091 = vmul.f32 %v1079, %v33
  %v1092 = vmul.f32 %v1080, %v34
  %v1093 = vmul.f32 %v1081, %v34
  %v1094 = vadd.f32 %v1090, %v1092
  %v1095 = vadd.f32 %v1091, %v1093
  %1096 = vst.msk [vmem:[%s1069 + $0x8] sm:$0xff] %vm781, %v1094
  %1097 = vst.msk [vmem:[%s1069 + $0x28] sm:$0xff] %vm781, %v1095
  %v1098 = vmul.f32 %v1080, %v33
  %v1099 = vmul.f32 %v1081, %v33
  %v1100 = vmul.f32 %v1078, %v34
  %v1101 = vmul.f32 %v1079, %v34
  %v1102 = vsub.f32 %v1098, %v1100
  %v1103 = vsub.f32 %v1099, %v1101
  %1104 = vst.msk [vmem:[%s1072 + $0x8] sm:$0xff] %vm781, %v1102
  %1105 = vst.msk [vmem:[%s1072 + $0x28] sm:$0xff] %vm781, %v1103
  %1106 = vst.msk [vmem:[%s1075 + $0x8] sm:$0xff] %vm781, %v1082
  %1107 = vst.msk [vmem:[%s1075 + $0x28] sm:$0xff] %vm781, %v1083
  %v1108 = vpack.c.bf16 %v1088, %v1088
  %v1109 = vpack.c.bf16 %v1089, %v1089
  %v1110 = vpack.c.bf16 %v1094, %v1094
  %v1111 = vpack.c.bf16 %v1095, %v1095
  %v1113 = vsel %vm781, %v1108, 0
  %v1116 = vsel %vm781, %v1110, 0
  %1118 = vmatprep.subr.bf16.mxu0 0
  %1119 = vmatpush1.bf16.xpose.msra.mxu0 %v1116
  %1120 = vmatprep.subr.bf16.mxu0 0
  %1121 = vmatpush1.bf16.xpose.msra.mxu0 0
  %1122 = vmatprep.subr.bf16.mxu0 0
  %1123 = vmatpush1.bf16.xpose.msra.mxu0 0
  %1124 = vmatprep.subr.bf16.mxu0 0
  %1125 = vmatpush1.bf16.xpose.msra.mxu0 0
  %1126 = vmatprep.subr.bf16.mxu0 0
  %1127 = vmatpush1.bf16.xpose.msra.mxu0 0
  %1128 = vmatprep.subr.bf16.mxu0 0
  %1129 = vmatpush1.bf16.xpose.msra.mxu0 0
  %1130 = vmatprep.subr.bf16.mxu0 0
  %1131 = vmatpush1.bf16.xpose.msra.mxu0 0
  %1132 = vmatprep.subr.bf16.mxu0 0
  %1133 = vmatpush1.bf16.xpose.msra.mxu0 0
  %1134 = vmatprep.subr.bf16.mxu0 0
  %1135 = vmatpush1.bf16.xpose.msra.mxu0 0
  %1136 = vmatprep.subr.bf16.mxu0 0
  %1137 = vmatpush1.bf16.xpose.msra.mxu0 0
  %1138 = vmatprep.subr.bf16.mxu0 0
  %1139 = vmatpush1.bf16.xpose.msra.mxu0 0
  %1140 = vmatprep.subr.bf16.mxu0 0
  %1141 = vmatpush1.bf16.xpose.msra.mxu0 0
  %1142 = vmatprep.subr.bf16.mxu0 0
  %1143 = vmatpush1.bf16.xpose.msra.mxu0 0
  %1144 = vmatprep.subr.bf16.mxu0 0
  %1145 = vmatpush1.bf16.xpose.msra.mxu0 0
  %1146 = vmatprep.subr.bf16.mxu0 0
  %1147 = vmatpush1.bf16.xpose.msra.mxu0 0
  %1148 = vmatprep.subr.bf16.mxu0 0
  %1149 = vmatpush1.bf16.xpose.msra.mxu0 0
  %1150 = vmatprep.mubr.bf16.mxu0 0
  %1151 = vmatmul.mubr.bf16.gmra.mrb[0].mxu0 %v1113
  %v1152 = vpop.f32.mrb[0].mxu0
  %v1153 = vadd.f32 0.0, %v1152
  %v1154 = vpop.f32.mrb[0].mxu0
  %v1155 = vpop.f32.mrb[0].mxu0
  %v1156 = vpop.f32.mrb[0].mxu0
  %1157 = vdwg.mxu0
  %v1159 = vsel %vm781, %v1109, 0
  %v1162 = vsel %vm781, %v1111, 0
  %1164 = vmatprep.subr.bf16.mxu0 0
  %1165 = vmatpush1.bf16.xpose.msra.mxu0 %v1162
  %1166 = vmatprep.subr.bf16.mxu0 0
  %1167 = vmatpush1.bf16.xpose.msra.mxu0 0
  %1168 = vmatprep.subr.bf16.mxu0 0
  %1169 = vmatpush1.bf16.xpose.msra.mxu0 0
  %1170 = vmatprep.subr.bf16.mxu0 0
  %1171 = vmatpush1.bf16.xpose.msra.mxu0 0
  %1172 = vmatprep.subr.bf16.mxu0 0
  %1173 = vmatpush1.bf16.xpose.msra.mxu0 0
  %1174 = vmatprep.subr.bf16.mxu0 0
  %1175 = vmatpush1.bf16.xpose.msra.mxu0 0
  %1176 = vmatprep.subr.bf16.mxu0 0
  %1177 = vmatpush1.bf16.xpose.msra.mxu0 0
  %1178 = vmatprep.subr.bf16.mxu0 0
  %1179 = vmatpush1.bf16.xpose.msra.mxu0 0
  %1180 = vmatprep.subr.bf16.mxu0 0
  %1181 = vmatpush1.bf16.xpose.msra.mxu0 0
  %1182 = vmatprep.subr.bf16.mxu0 0
  %1183 = vmatpush1.bf16.xpose.msra.mxu0 0
  %1184 = vmatprep.subr.bf16.mxu0 0
  %1185 = vmatpush1.bf16.xpose.msra.mxu0 0
  %1186 = vmatprep.subr.bf16.mxu0 0
  %1187 = vmatpush1.bf16.xpose.msra.mxu0 0
  %1188 = vmatprep.subr.bf16.mxu0 0
  %1189 = vmatpush1.bf16.xpose.msra.mxu0 0
  %1190 = vmatprep.subr.bf16.mxu0 0
  %1191 = vmatpush1.bf16.xpose.msra.mxu0 0
  %1192 = vmatprep.subr.bf16.mxu0 0
  %1193 = vmatpush1.bf16.xpose.msra.mxu0 0
  %1194 = vmatprep.subr.bf16.mxu0 0
  %1195 = vmatpush1.bf16.xpose.msra.mxu0 0
  %1196 = vmatprep.mubr.bf16.mxu0 0
  %1197 = vmatmul.mubr.bf16.gmra.mrb[0].mxu0 %v1159
  %v1198 = vpop.f32.mrb[0].mxu0
  %v1199 = vadd.f32 0.0, %v1198
  %v1200 = vpop.f32.mrb[0].mxu0
  %v1201 = vpop.f32.mrb[0].mxu0
  %v1202 = vpop.f32.mrb[0].mxu0
  %1203 = vdwg.mxu0
  %v1204 = vmul.f32 %v1153, 0.17677669
  %v1205 = vmul.f32 %v1199, 0.17677669
  %v1206 = vadd.f32 %v1204, %v780
  %v1207 = vadd.f32 %v1205, %v780
  %v1208 = vsel %vm918, %v1206, -inf
  %1209 = vmax.xlane.f32.xlu0 %v1208
  %v1210 = vpop.xlane.xlu0 %1209
  %v1211 = vsel %vm918, %v1207, -inf
  %1212 = vmax.xlane.f32.xlu0 %v1211
  %v1213 = vpop.xlane.xlu0 %1212
  %v1214 = vsub.f32 %v1206, %v1210
  %v1215 = vsub.f32 %v1207, %v1213
  %v1216 = vmul.f32 %v1214, 1.442695
  %v1217 = vpow.pop %v1216
  %v1218 = vmul.f32 %v1215, 1.442695
  %v1219 = vpow.pop %v1218
  %v1220 = vsel %vm918, %v1217, 0.0
  %1221 = vadd.xlane.f32.xlu0 %v1220
  %v1222 = vpop.xlane.xlu0 %1221
  %v1223 = vsel %vm918, %v1219, 0.0
  %1224 = vadd.xlane.f32.xlu0 %v1223
  %v1225 = vpop.xlane.xlu0 %1224
  %v1226 = vpack.c.bf16 %v1217, %v1217
  %v1227 = vpack.c.bf16 %v1219, %v1219
  %v1228 = vpack.c.bf16 %v1082, %v1082
  %v1229 = vpack.c.bf16 %v1083, %v1083
  %v1231 = vsel %vm918, %v1226, 0
  %v1234 = vsel %vm944, %v1228, 0
  %1236 = vmatprep.subr.bf16.mxu0 0
  %1237 = vmatpush1.bf16.msra.mxu0 %v1234
  %1238 = vmatprep.subr.bf16.mxu0 0
  %1239 = vmatpush1.bf16.msra.mxu0 0
  %1240 = vmatprep.subr.bf16.mxu0 0
  %1241 = vmatpush1.bf16.msra.mxu0 0
  %1242 = vmatprep.subr.bf16.mxu0 0
  %1243 = vmatpush1.bf16.msra.mxu0 0
  %1244 = vmatprep.subr.bf16.mxu0 0
  %1245 = vmatpush1.bf16.msra.mxu0 0
  %1246 = vmatprep.subr.bf16.mxu0 0
  %1247 = vmatpush1.bf16.msra.mxu0 0
  %1248 = vmatprep.subr.bf16.mxu0 0
  %1249 = vmatpush1.bf16.msra.mxu0 0
  %1250 = vmatprep.subr.bf16.mxu0 0
  %1251 = vmatpush1.bf16.msra.mxu0 0
  %1252 = vmatprep.subr.bf16.mxu0 0
  %1253 = vmatpush1.bf16.msra.mxu0 0
  %1254 = vmatprep.subr.bf16.mxu0 0
  %1255 = vmatpush1.bf16.msra.mxu0 0
  %1256 = vmatprep.subr.bf16.mxu0 0
  %1257 = vmatpush1.bf16.msra.mxu0 0
  %1258 = vmatprep.subr.bf16.mxu0 0
  %1259 = vmatpush1.bf16.msra.mxu0 0
  %1260 = vmatprep.subr.bf16.mxu0 0
  %1261 = vmatpush1.bf16.msra.mxu0 0
  %1262 = vmatprep.subr.bf16.mxu0 0
  %1263 = vmatpush1.bf16.msra.mxu0 0
  %1264 = vmatprep.subr.bf16.mxu0 0
  %1265 = vmatpush1.bf16.msra.mxu0 0
  %1266 = vmatprep.subr.bf16.mxu0 0
  %1267 = vmatpush1.bf16.msra.mxu0 0
  %1268 = vmatprep.mubr.bf16.mxu0 0
  %1269 = vmatmul.mubr.bf16.gmra.mrb[0].mxu0 %v1231
  %v1270 = vpop.f32.mrb[0].mxu0
  %v1271 = vadd.f32 0.0, %v1270
  %v1272 = vpop.f32.mrb[0].mxu0
  %v1273 = vpop.f32.mrb[0].mxu0
  %v1274 = vpop.f32.mrb[0].mxu0
  %1275 = vdwg.mxu0
  %v1277 = vsel %vm918, %v1227, 0
  %v1280 = vsel %vm944, %v1229, 0
  %1282 = vmatprep.subr.bf16.mxu0 0
  %1283 = vmatpush1.bf16.msra.mxu0 %v1280
  %1284 = vmatprep.subr.bf16.mxu0 0
  %1285 = vmatpush1.bf16.msra.mxu0 0
  %1286 = vmatprep.subr.bf16.mxu0 0
  %1287 = vmatpush1.bf16.msra.mxu0 0
  %1288 = vmatprep.subr.bf16.mxu0 0
  %1289 = vmatpush1.bf16.msra.mxu0 0
  %1290 = vmatprep.subr.bf16.mxu0 0
  %1291 = vmatpush1.bf16.msra.mxu0 0
  %1292 = vmatprep.subr.bf16.mxu0 0
  %1293 = vmatpush1.bf16.msra.mxu0 0
  %1294 = vmatprep.subr.bf16.mxu0 0
  %1295 = vmatpush1.bf16.msra.mxu0 0
  %1296 = vmatprep.subr.bf16.mxu0 0
  %1297 = vmatpush1.bf16.msra.mxu0 0
  %1298 = vmatprep.subr.bf16.mxu0 0
  %1299 = vmatpush1.bf16.msra.mxu0 0
  %1300 = vmatprep.subr.bf16.mxu0 0
  %1301 = vmatpush1.bf16.msra.mxu0 0
  %1302 = vmatprep.subr.bf16.mxu0 0
  %1303 = vmatpush1.bf16.msra.mxu0 0
  %1304 = vmatprep.subr.bf16.mxu0 0
  %1305 = vmatpush1.bf16.msra.mxu0 0
  %1306 = vmatprep.subr.bf16.mxu0 0
  %1307 = vmatpush1.bf16.msra.mxu0 0
  %1308 = vmatprep.subr.bf16.mxu0 0
  %1309 = vmatpush1.bf16.msra.mxu0 0
  %1310 = vmatprep.subr.bf16.mxu0 0
  %1311 = vmatpush1.bf16.msra.mxu0 0
  %1312 = vmatprep.subr.bf16.mxu0 0
  %1313 = vmatpush1.bf16.msra.mxu0 0
  %1314 = vmatprep.mubr.bf16.mxu0 0
  %1315 = vmatmul.mubr.bf16.gmra.mrb[0].mxu0 %v1277
  %v1316 = vpop.f32.mrb[0].mxu0
  %v1317 = vadd.f32 0.0, %v1316
  %v1318 = vpop.f32.mrb[0].mxu0
  %v1319 = vpop.f32.mrb[0].mxu0
  %v1320 = vpop.f32.mrb[0].mxu0
  %1321 = vdwg.mxu0
  %v1322 = vrcp.pop %v1222
  %v1323 = vrcp.pop %v1225
  %v1324 = vmul.f32 %v1271, %v1322
  %v1325 = vmul.f32 %v1317, %v1323
  %v1326 = vmul.f32 %v1324, %v1324
  %v1327 = vmul.f32 %v1325, %v1325
  %v1328 = vsel %vm781, %v1326, 0.0
  %1329 = vadd.xlane.f32.xlu0 %v1328
  %v1330 = vpop.xlane.xlu0 %1329
  %v1331 = vsel %vm781, %v1327, 0.0
  %1332 = vadd.xlane.f32.xlu0 %v1331
  %v1333 = vpop.xlane.xlu0 %1332
  %v1334 = vadd.f32 %v1330, %v1333
  %v1335 = vmul.f32 %v1334, %v1047
  %v1336 = vadd.f32 %v1335, 1e-05
  %v1337 = vrsqrt.pop %v1336
  %v1338 = vmul.f32 %v1324, %v1337
  %v1339 = vmul.f32 %v1325, %v1337
  %v1340 = vmul.f32 %v1338, %v1058
  %v1341 = vmul.f32 %v1339, %v1062
  %v1342 = vadd.f32 %v1340, 0.0
  %v1343 = vadd.f32 %v1341, 0.0
  %s1344 = scalar_lea.vmem %s2, 320
  %v1345 = vld [vmem:[%s1344] sm:$0xf]
  %v1346 = vld [vmem:[%s1344 + $0x4] sm:$0xf]
  %v1347 = vld [vmem:[%s1344 + $0x8] sm:$0xf]
  %v1348 = vld [vmem:[%s1344 + $0xc] sm:$0xf]
  %v1349 = vld [vmem:[%s1344 + $0x10] sm:$0xf]
  %v1350 = vld [vmem:[%s1344 + $0x14] sm:$0xf]
  %v1351 = vld [vmem:[%s1344 + $0x18] sm:$0xf]
  %v1352 = vld [vmem:[%s1344 + $0x1c] sm:$0xf]
  %v1353 = vld [vmem:[%s1344 + $0x20] sm:$0xf]
  %v1354 = vld [vmem:[%s1344 + $0x24] sm:$0xf]
  %v1355 = vld [vmem:[%s1344 + $0x28] sm:$0xf]
  %v1356 = vld [vmem:[%s1344 + $0x2c] sm:$0xf]
  %v1357 = vld [vmem:[%s1344 + $0x30] sm:$0xf]
  %v1358 = vld [vmem:[%s1344 + $0x34] sm:$0xf]
  %v1359 = vld [vmem:[%s1344 + $0x38] sm:$0xf]
  %v1360 = vld [vmem:[%s1344 + $0x3c] sm:$0xf]
  %v1369 = vunpack.c.l.b16 %v1345
  %v1370 = vunpack.c.l.b16 %v1346
  %v1371 = vunpack.c.l.b16 %v1347
  %v1372 = vunpack.c.l.b16 %v1348
  %v1373 = vunpack.c.l.b16 %v1349
  %v1374 = vunpack.c.l.b16 %v1350
  %v1375 = vunpack.c.l.b16 %v1351
  %v1376 = vunpack.c.l.b16 %v1352
  %v1377 = vpack.c.b16 %v1370, %v1369
  %v1378 = vpack.c.b16 %v1372, %v1371
  %v1379 = vpack.c.b16 %v1374, %v1373
  %v1380 = vpack.c.b16 %v1376, %v1375
  %1385 = vmatprep.subr.bf16.mxu0 0
  %1386 = vmatpush1.bf16.msra.mxu0 %v1377
  %1387 = vmatprep.subr.bf16.mxu0 0
  %1388 = vmatpush1.bf16.msra.mxu0 %v1378
  %1389 = vmatprep.subr.bf16.mxu0 0
  %1390 = vmatpush1.bf16.msra.mxu0 %v1379
  %1391 = vmatprep.subr.bf16.mxu0 0
  %1392 = vmatpush1.bf16.msra.mxu0 %v1380
  %1393 = vmatprep.subr.bf16.mxu0 0
  %1394 = vmatpush1.bf16.msra.mxu0 0
  %1395 = vmatprep.subr.bf16.mxu0 0
  %1396 = vmatpush1.bf16.msra.mxu0 0
  %1397 = vmatprep.subr.bf16.mxu0 0
  %1398 = vmatpush1.bf16.msra.mxu0 0
  %1399 = vmatprep.subr.bf16.mxu0 0
  %1400 = vmatpush1.bf16.msra.mxu0 0
  %1401 = vmatprep.subr.bf16.mxu0 0
  %1402 = vmatpush1.bf16.msra.mxu0 0
  %1403 = vmatprep.subr.bf16.mxu0 0
  %1404 = vmatpush1.bf16.msra.mxu0 0
  %1405 = vmatprep.subr.bf16.mxu0 0
  %1406 = vmatpush1.bf16.msra.mxu0 0
  %1407 = vmatprep.subr.bf16.mxu0 0
  %1408 = vmatpush1.bf16.msra.mxu0 0
  %1409 = vmatprep.subr.bf16.mxu0 0
  %1410 = vmatpush1.bf16.msra.mxu0 0
  %1411 = vmatprep.subr.bf16.mxu0 0
  %1412 = vmatpush1.bf16.msra.mxu0 0
  %1413 = vmatprep.subr.bf16.mxu0 0
  %1414 = vmatpush1.bf16.msra.mxu0 0
  %1415 = vmatprep.subr.bf16.mxu0 0
  %1416 = vmatpush1.bf16.msra.mxu0 0
  %1417 = vmatprep.mubr.bf16.mxu0 0
  %1418 = vmatmul.mubr.bf16.gmra.mrb[0].mxu0 %v77
  %v1419 = vpop.f32.mrb[0].mxu0
  %v1420 = vadd.f32 0.0, %v1419
  %v1421 = vpop.f32.mrb[0].mxu0
  %v1422 = vpop.f32.mrb[0].mxu0
  %v1423 = vadd.f32 0.0, %v1422
  %v1424 = vpop.f32.mrb[0].mxu0
  %1425 = vdwg.mxu0
  %v1434 = vunpack.c.l.b16 %v1353
  %v1435 = vunpack.c.l.b16 %v1354
  %v1436 = vunpack.c.l.b16 %v1355
  %v1437 = vunpack.c.l.b16 %v1356
  %v1438 = vunpack.c.l.b16 %v1357
  %v1439 = vunpack.c.l.b16 %v1358
  %v1440 = vunpack.c.l.b16 %v1359
  %v1441 = vunpack.c.l.b16 %v1360
  %v1442 = vpack.c.b16 %v1435, %v1434
  %v1443 = vpack.c.b16 %v1437, %v1436
  %v1444 = vpack.c.b16 %v1439, %v1438
  %v1445 = vpack.c.b16 %v1441, %v1440
  %1450 = vmatprep.subr.bf16.mxu0 0
  %1451 = vmatpush1.bf16.msra.mxu0 %v1442
  %1452 = vmatprep.subr.bf16.mxu0 0
  %1453 = vmatpush1.bf16.msra.mxu0 %v1443
  %1454 = vmatprep.subr.bf16.mxu0 0
  %1455 = vmatpush1.bf16.msra.mxu0 %v1444
  %1456 = vmatprep.subr.bf16.mxu0 0
  %1457 = vmatpush1.bf16.msra.mxu0 %v1445
  %1458 = vmatprep.subr.bf16.mxu0 0
  %1459 = vmatpush1.bf16.msra.mxu0 0
  %1460 = vmatprep.subr.bf16.mxu0 0
  %1461 = vmatpush1.bf16.msra.mxu0 0
  %1462 = vmatprep.subr.bf16.mxu0 0
  %1463 = vmatpush1.bf16.msra.mxu0 0
  %1464 = vmatprep.subr.bf16.mxu0 0
  %1465 = vmatpush1.bf16.msra.mxu0 0
  %1466 = vmatprep.subr.bf16.mxu0 0
  %1467 = vmatpush1.bf16.msra.mxu0 0
  %1468 = vmatprep.subr.bf16.mxu0 0
  %1469 = vmatpush1.bf16.msra.mxu0 0
  %1470 = vmatprep.subr.bf16.mxu0 0
  %1471 = vmatpush1.bf16.msra.mxu0 0
  %1472 = vmatprep.subr.bf16.mxu0 0
  %1473 = vmatpush1.bf16.msra.mxu0 0
  %1474 = vmatprep.subr.bf16.mxu0 0
  %1475 = vmatpush1.bf16.msra.mxu0 0
  %1476 = vmatprep.subr.bf16.mxu0 0
  %1477 = vmatpush1.bf16.msra.mxu0 0
  %1478 = vmatprep.subr.bf16.mxu0 0
  %1479 = vmatpush1.bf16.msra.mxu0 0
  %1480 = vmatprep.subr.bf16.mxu0 0
  %1481 = vmatpush1.bf16.msra.mxu0 0
  %1482 = vmatprep.mubr.bf16.mxu0 0
  %1483 = vmatmul.mubr.bf16.gmra.mrb[0].mxu0 %v77
  %v1484 = vpop.f32.mrb[0].mxu0
  %v1485 = vadd.f32 0.0, %v1484
  %v1486 = vpop.f32.mrb[0].mxu0
  %v1487 = vpop.f32.mrb[0].mxu0
  %v1488 = vadd.f32 0.0, %v1487
  %v1489 = vpop.f32.mrb[0].mxu0
  %1490 = vdwg.mxu0
  %s1491 = scalar_lea.vmem %s2, 384
  %v1492 = vld [vmem:[%s1491] sm:$0xf]
  %v1493 = vld [vmem:[%s1491 + $0x4] sm:$0xf]
  %v1494 = vld [vmem:[%s1491 + $0x8] sm:$0xf]
  %v1495 = vld [vmem:[%s1491 + $0xc] sm:$0xf]
  %v1496 = vld [vmem:[%s1491 + $0x10] sm:$0xf]
  %v1497 = vld [vmem:[%s1491 + $0x14] sm:$0xf]
  %v1498 = vld [vmem:[%s1491 + $0x18] sm:$0xf]
  %v1499 = vld [vmem:[%s1491 + $0x1c] sm:$0xf]
  %v1500 = vld [vmem:[%s1491 + $0x20] sm:$0xf]
  %v1501 = vld [vmem:[%s1491 + $0x24] sm:$0xf]
  %v1502 = vld [vmem:[%s1491 + $0x28] sm:$0xf]
  %v1503 = vld [vmem:[%s1491 + $0x2c] sm:$0xf]
  %v1504 = vld [vmem:[%s1491 + $0x30] sm:$0xf]
  %v1505 = vld [vmem:[%s1491 + $0x34] sm:$0xf]
  %v1506 = vld [vmem:[%s1491 + $0x38] sm:$0xf]
  %v1507 = vld [vmem:[%s1491 + $0x3c] sm:$0xf]
  %v1516 = vunpack.c.l.b16 %v1492
  %v1517 = vunpack.c.l.b16 %v1493
  %v1518 = vunpack.c.l.b16 %v1494
  %v1519 = vunpack.c.l.b16 %v1495
  %v1520 = vunpack.c.l.b16 %v1496
  %v1521 = vunpack.c.l.b16 %v1497
  %v1522 = vunpack.c.l.b16 %v1498
  %v1523 = vunpack.c.l.b16 %v1499
  %v1524 = vpack.c.b16 %v1517, %v1516
  %v1525 = vpack.c.b16 %v1519, %v1518
  %v1526 = vpack.c.b16 %v1521, %v1520
  %v1527 = vpack.c.b16 %v1523, %v1522
  %1532 = vmatprep.subr.bf16.mxu0 0
  %1533 = vmatpush1.bf16.msra.mxu0 %v1524
  %1534 = vmatprep.subr.bf16.mxu0 0
  %1535 = vmatpush1.bf16.msra.mxu0 %v1525
  %1536 = vmatprep.subr.bf16.mxu0 0
  %1537 = vmatpush1.bf16.msra.mxu0 %v1526
  %1538 = vmatprep.subr.bf16.mxu0 0
  %1539 = vmatpush1.bf16.msra.mxu0 %v1527
  %1540 = vmatprep.subr.bf16.mxu0 0
  %1541 = vmatpush1.bf16.msra.mxu0 0
  %1542 = vmatprep.subr.bf16.mxu0 0
  %1543 = vmatpush1.bf16.msra.mxu0 0
  %1544 = vmatprep.subr.bf16.mxu0 0
  %1545 = vmatpush1.bf16.msra.mxu0 0
  %1546 = vmatprep.subr.bf16.mxu0 0
  %1547 = vmatpush1.bf16.msra.mxu0 0
  %1548 = vmatprep.subr.bf16.mxu0 0
  %1549 = vmatpush1.bf16.msra.mxu0 0
  %1550 = vmatprep.subr.bf16.mxu0 0
  %1551 = vmatpush1.bf16.msra.mxu0 0
  %1552 = vmatprep.subr.bf16.mxu0 0
  %1553 = vmatpush1.bf16.msra.mxu0 0
  %1554 = vmatprep.subr.bf16.mxu0 0
  %1555 = vmatpush1.bf16.msra.mxu0 0
  %1556 = vmatprep.subr.bf16.mxu0 0
  %1557 = vmatpush1.bf16.msra.mxu0 0
  %1558 = vmatprep.subr.bf16.mxu0 0
  %1559 = vmatpush1.bf16.msra.mxu0 0
  %1560 = vmatprep.subr.bf16.mxu0 0
  %1561 = vmatpush1.bf16.msra.mxu0 0
  %1562 = vmatprep.subr.bf16.mxu0 0
  %1563 = vmatpush1.bf16.msra.mxu0 0
  %1564 = vmatprep.mubr.bf16.mxu0 0
  %1565 = vmatmul.mubr.bf16.gmra.mrb[0].mxu0 %v77
  %v1566 = vpop.f32.mrb[0].mxu0
  %v1567 = vadd.f32 0.0, %v1566
  %v1568 = vpop.f32.mrb[0].mxu0
  %v1569 = vpop.f32.mrb[0].mxu0
  %v1570 = vadd.f32 0.0, %v1569
  %v1571 = vpop.f32.mrb[0].mxu0
  %1572 = vdwg.mxu0
  %v1581 = vunpack.c.l.b16 %v1500
  %v1582 = vunpack.c.l.b16 %v1501
  %v1583 = vunpack.c.l.b16 %v1502
  %v1584 = vunpack.c.l.b16 %v1503
  %v1585 = vunpack.c.l.b16 %v1504
  %v1586 = vunpack.c.l.b16 %v1505
  %v1587 = vunpack.c.l.b16 %v1506
  %v1588 = vunpack.c.l.b16 %v1507
  %v1589 = vpack.c.b16 %v1582, %v1581
  %v1590 = vpack.c.b16 %v1584, %v1583
  %v1591 = vpack.c.b16 %v1586, %v1585
  %v1592 = vpack.c.b16 %v1588, %v1587
  %1597 = vmatprep.subr.bf16.mxu0 0
  %1598 = vmatpush1.bf16.msra.mxu0 %v1589
  %1599 = vmatprep.subr.bf16.mxu0 0
  %1600 = vmatpush1.bf16.msra.mxu0 %v1590
  %1601 = vmatprep.subr.bf16.mxu0 0
  %1602 = vmatpush1.bf16.msra.mxu0 %v1591
  %1603 = vmatprep.subr.bf16.mxu0 0
  %1604 = vmatpush1.bf16.msra.mxu0 %v1592
  %1605 = vmatprep.subr.bf16.mxu0 0
  %1606 = vmatpush1.bf16.msra.mxu0 0
  %1607 = vmatprep.subr.bf16.mxu0 0
  %1608 = vmatpush1.bf16.msra.mxu0 0
  %1609 = vmatprep.subr.bf16.mxu0 0
  %1610 = vmatpush1.bf16.msra.mxu0 0
  %1611 = vmatprep.subr.bf16.mxu0 0
  %1612 = vmatpush1.bf16.msra.mxu0 0
  %1613 = vmatprep.subr.bf16.mxu0 0
  %1614 = vmatpush1.bf16.msra.mxu0 0
  %1615 = vmatprep.subr.bf16.mxu0 0
  %1616 = vmatpush1.bf16.msra.mxu0 0
  %1617 = vmatprep.subr.bf16.mxu0 0
  %1618 = vmatpush1.bf16.msra.mxu0 0
  %1619 = vmatprep.subr.bf16.mxu0 0
  %1620 = vmatpush1.bf16.msra.mxu0 0
  %1621 = vmatprep.subr.bf16.mxu0 0
  %1622 = vmatpush1.bf16.msra.mxu0 0
  %1623 = vmatprep.subr.bf16.mxu0 0
  %1624 = vmatpush1.bf16.msra.mxu0 0
  %1625 = vmatprep.subr.bf16.mxu0 0
  %1626 = vmatpush1.bf16.msra.mxu0 0
  %1627 = vmatprep.subr.bf16.mxu0 0
  %1628 = vmatpush1.bf16.msra.mxu0 0
  %1629 = vmatprep.mubr.bf16.mxu0 0
  %1630 = vmatmul.mubr.bf16.gmra.mrb[0].mxu0 %v77
  %v1631 = vpop.f32.mrb[0].mxu0
  %v1632 = vadd.f32 0.0, %v1631
  %v1633 = vpop.f32.mrb[0].mxu0
  %v1634 = vpop.f32.mrb[0].mxu0
  %v1635 = vadd.f32 0.0, %v1634
  %v1636 = vpop.f32.mrb[0].mxu0
  %1637 = vdwg.mxu0
  %s1638 = scalar_lea.vmem %s2, 448
  %v1639 = vld [vmem:[%s1638] sm:$0xf]
  %v1640 = vld [vmem:[%s1638 + $0x4] sm:$0xf]
  %v1641 = vld [vmem:[%s1638 + $0x8] sm:$0xf]
  %v1642 = vld [vmem:[%s1638 + $0xc] sm:$0xf]
  %v1643 = vld [vmem:[%s1638 + $0x10] sm:$0xf]
  %v1644 = vld [vmem:[%s1638 + $0x14] sm:$0xf]
  %v1645 = vld [vmem:[%s1638 + $0x18] sm:$0xf]
  %v1646 = vld [vmem:[%s1638 + $0x1c] sm:$0xf]
  %v1647 = vld [vmem:[%s1638 + $0x20] sm:$0xf]
  %v1648 = vld [vmem:[%s1638 + $0x24] sm:$0xf]
  %v1649 = vld [vmem:[%s1638 + $0x28] sm:$0xf]
  %v1650 = vld [vmem:[%s1638 + $0x2c] sm:$0xf]
  %v1651 = vld [vmem:[%s1638 + $0x30] sm:$0xf]
  %v1652 = vld [vmem:[%s1638 + $0x34] sm:$0xf]
  %v1653 = vld [vmem:[%s1638 + $0x38] sm:$0xf]
  %v1654 = vld [vmem:[%s1638 + $0x3c] sm:$0xf]
  %v1663 = vunpack.c.l.b16 %v1639
  %v1664 = vunpack.c.l.b16 %v1640
  %v1665 = vunpack.c.l.b16 %v1641
  %v1666 = vunpack.c.l.b16 %v1642
  %v1667 = vunpack.c.l.b16 %v1643
  %v1668 = vunpack.c.l.b16 %v1644
  %v1669 = vunpack.c.l.b16 %v1645
  %v1670 = vunpack.c.l.b16 %v1646
  %v1671 = vpack.c.b16 %v1664, %v1663
  %v1672 = vpack.c.b16 %v1666, %v1665
  %v1673 = vpack.c.b16 %v1668, %v1667
  %v1674 = vpack.c.b16 %v1670, %v1669
  %1679 = vmatprep.subr.bf16.mxu0 0
  %1680 = vmatpush1.bf16.msra.mxu0 %v1671
  %1681 = vmatprep.subr.bf16.mxu0 0
  %1682 = vmatpush1.bf16.msra.mxu0 %v1672
  %1683 = vmatprep.subr.bf16.mxu0 0
  %1684 = vmatpush1.bf16.msra.mxu0 %v1673
  %1685 = vmatprep.subr.bf16.mxu0 0
  %1686 = vmatpush1.bf16.msra.mxu0 %v1674
  %1687 = vmatprep.subr.bf16.mxu0 0
  %1688 = vmatpush1.bf16.msra.mxu0 0
  %1689 = vmatprep.subr.bf16.mxu0 0
  %1690 = vmatpush1.bf16.msra.mxu0 0
  %1691 = vmatprep.subr.bf16.mxu0 0
  %1692 = vmatpush1.bf16.msra.mxu0 0
  %1693 = vmatprep.subr.bf16.mxu0 0
  %1694 = vmatpush1.bf16.msra.mxu0 0
  %1695 = vmatprep.subr.bf16.mxu0 0
  %1696 = vmatpush1.bf16.msra.mxu0 0
  %1697 = vmatprep.subr.bf16.mxu0 0
  %1698 = vmatpush1.bf16.msra.mxu0 0
  %1699 = vmatprep.subr.bf16.mxu0 0
  %1700 = vmatpush1.bf16.msra.mxu0 0
  %1701 = vmatprep.subr.bf16.mxu0 0
  %1702 = vmatpush1.bf16.msra.mxu0 0
  %1703 = vmatprep.subr.bf16.mxu0 0
  %1704 = vmatpush1.bf16.msra.mxu0 0
  %1705 = vmatprep.subr.bf16.mxu0 0
  %1706 = vmatpush1.bf16.msra.mxu0 0
  %1707 = vmatprep.subr.bf16.mxu0 0
  %1708 = vmatpush1.bf16.msra.mxu0 0
  %1709 = vmatprep.subr.bf16.mxu0 0
  %1710 = vmatpush1.bf16.msra.mxu0 0
  %1711 = vmatprep.mubr.bf16.mxu0 0
  %1712 = vmatmul.mubr.bf16.gmra.mrb[0].mxu0 %v77
  %v1713 = vpop.f32.mrb[0].mxu0
  %v1714 = vadd.f32 0.0, %v1713
  %v1715 = vpop.f32.mrb[0].mxu0
  %v1716 = vpop.f32.mrb[0].mxu0
  %v1717 = vadd.f32 0.0, %v1716
  %v1718 = vpop.f32.mrb[0].mxu0
  %1719 = vdwg.mxu0
  %v1728 = vunpack.c.l.b16 %v1647
  %v1729 = vunpack.c.l.b16 %v1648
  %v1730 = vunpack.c.l.b16 %v1649
  %v1731 = vunpack.c.l.b16 %v1650
  %v1732 = vunpack.c.l.b16 %v1651
  %v1733 = vunpack.c.l.b16 %v1652
  %v1734 = vunpack.c.l.b16 %v1653
  %v1735 = vunpack.c.l.b16 %v1654
  %v1736 = vpack.c.b16 %v1729, %v1728
  %v1737 = vpack.c.b16 %v1731, %v1730
  %v1738 = vpack.c.b16 %v1733, %v1732
  %v1739 = vpack.c.b16 %v1735, %v1734
  %1744 = vmatprep.subr.bf16.mxu0 0
  %1745 = vmatpush1.bf16.msra.mxu0 %v1736
  %1746 = vmatprep.subr.bf16.mxu0 0
  %1747 = vmatpush1.bf16.msra.mxu0 %v1737
  %1748 = vmatprep.subr.bf16.mxu0 0
  %1749 = vmatpush1.bf16.msra.mxu0 %v1738
  %1750 = vmatprep.subr.bf16.mxu0 0
  %1751 = vmatpush1.bf16.msra.mxu0 %v1739
  %1752 = vmatprep.subr.bf16.mxu0 0
  %1753 = vmatpush1.bf16.msra.mxu0 0
  %1754 = vmatprep.subr.bf16.mxu0 0
  %1755 = vmatpush1.bf16.msra.mxu0 0
  %1756 = vmatprep.subr.bf16.mxu0 0
  %1757 = vmatpush1.bf16.msra.mxu0 0
  %1758 = vmatprep.subr.bf16.mxu0 0
  %1759 = vmatpush1.bf16.msra.mxu0 0
  %1760 = vmatprep.subr.bf16.mxu0 0
  %1761 = vmatpush1.bf16.msra.mxu0 0
  %1762 = vmatprep.subr.bf16.mxu0 0
  %1763 = vmatpush1.bf16.msra.mxu0 0
  %1764 = vmatprep.subr.bf16.mxu0 0
  %1765 = vmatpush1.bf16.msra.mxu0 0
  %1766 = vmatprep.subr.bf16.mxu0 0
  %1767 = vmatpush1.bf16.msra.mxu0 0
  %1768 = vmatprep.subr.bf16.mxu0 0
  %1769 = vmatpush1.bf16.msra.mxu0 0
  %1770 = vmatprep.subr.bf16.mxu0 0
  %1771 = vmatpush1.bf16.msra.mxu0 0
  %1772 = vmatprep.subr.bf16.mxu0 0
  %1773 = vmatpush1.bf16.msra.mxu0 0
  %1774 = vmatprep.subr.bf16.mxu0 0
  %1775 = vmatpush1.bf16.msra.mxu0 0
  %1776 = vmatprep.mubr.bf16.mxu0 0
  %1777 = vmatmul.mubr.bf16.gmra.mrb[0].mxu0 %v77
  %v1778 = vpop.f32.mrb[0].mxu0
  %v1779 = vadd.f32 0.0, %v1778
  %v1780 = vpop.f32.mrb[0].mxu0
  %v1781 = vpop.f32.mrb[0].mxu0
  %v1782 = vadd.f32 0.0, %v1781
  %v1783 = vpop.f32.mrb[0].mxu0
  %1784 = vdwg.mxu0
  %s1785 = scalar_lea.vmem %s2, 512
  %v1786 = vld [vmem:[%s1785] sm:$0xf]
  %v1787 = vld [vmem:[%s1785 + $0x4] sm:$0xf]
  %v1788 = vld [vmem:[%s1785 + $0x8] sm:$0xf]
  %v1789 = vld [vmem:[%s1785 + $0xc] sm:$0xf]
  %v1790 = vld [vmem:[%s1785 + $0x10] sm:$0xf]
  %v1791 = vld [vmem:[%s1785 + $0x14] sm:$0xf]
  %v1792 = vld [vmem:[%s1785 + $0x18] sm:$0xf]
  %v1793 = vld [vmem:[%s1785 + $0x1c] sm:$0xf]
  %v1794 = vld [vmem:[%s1785 + $0x20] sm:$0xf]
  %v1795 = vld [vmem:[%s1785 + $0x24] sm:$0xf]
  %v1796 = vld [vmem:[%s1785 + $0x28] sm:$0xf]
  %v1797 = vld [vmem:[%s1785 + $0x2c] sm:$0xf]
  %v1798 = vld [vmem:[%s1785 + $0x30] sm:$0xf]
  %v1799 = vld [vmem:[%s1785 + $0x34] sm:$0xf]
  %v1800 = vld [vmem:[%s1785 + $0x38] sm:$0xf]
  %v1801 = vld [vmem:[%s1785 + $0x3c] sm:$0xf]
  %v1810 = vunpack.c.l.b16 %v1786
  %v1811 = vunpack.c.l.b16 %v1787
  %v1812 = vunpack.c.l.b16 %v1788
  %v1813 = vunpack.c.l.b16 %v1789
  %v1814 = vunpack.c.l.b16 %v1790
  %v1815 = vunpack.c.l.b16 %v1791
  %v1816 = vunpack.c.l.b16 %v1792
  %v1817 = vunpack.c.l.b16 %v1793
  %v1818 = vpack.c.b16 %v1811, %v1810
  %v1819 = vpack.c.b16 %v1813, %v1812
  %v1820 = vpack.c.b16 %v1815, %v1814
  %v1821 = vpack.c.b16 %v1817, %v1816
  %1826 = vmatprep.subr.bf16.mxu0 0
  %1827 = vmatpush1.bf16.msra.mxu0 %v1818
  %1828 = vmatprep.subr.bf16.mxu0 0
  %1829 = vmatpush1.bf16.msra.mxu0 %v1819
  %1830 = vmatprep.subr.bf16.mxu0 0
  %1831 = vmatpush1.bf16.msra.mxu0 %v1820
  %1832 = vmatprep.subr.bf16.mxu0 0
  %1833 = vmatpush1.bf16.msra.mxu0 %v1821
  %1834 = vmatprep.subr.bf16.mxu0 0
  %1835 = vmatpush1.bf16.msra.mxu0 0
  %1836 = vmatprep.subr.bf16.mxu0 0
  %1837 = vmatpush1.bf16.msra.mxu0 0
  %1838 = vmatprep.subr.bf16.mxu0 0
  %1839 = vmatpush1.bf16.msra.mxu0 0
  %1840 = vmatprep.subr.bf16.mxu0 0
  %1841 = vmatpush1.bf16.msra.mxu0 0
  %1842 = vmatprep.subr.bf16.mxu0 0
  %1843 = vmatpush1.bf16.msra.mxu0 0
  %1844 = vmatprep.subr.bf16.mxu0 0
  %1845 = vmatpush1.bf16.msra.mxu0 0
  %1846 = vmatprep.subr.bf16.mxu0 0
  %1847 = vmatpush1.bf16.msra.mxu0 0
  %1848 = vmatprep.subr.bf16.mxu0 0
  %1849 = vmatpush1.bf16.msra.mxu0 0
  %1850 = vmatprep.subr.bf16.mxu0 0
  %1851 = vmatpush1.bf16.msra.mxu0 0
  %1852 = vmatprep.subr.bf16.mxu0 0
  %1853 = vmatpush1.bf16.msra.mxu0 0
  %1854 = vmatprep.subr.bf16.mxu0 0
  %1855 = vmatpush1.bf16.msra.mxu0 0
  %1856 = vmatprep.subr.bf16.mxu0 0
  %1857 = vmatpush1.bf16.msra.mxu0 0
  %1858 = vmatprep.mubr.bf16.mxu0 0
  %1859 = vmatmul.mubr.bf16.gmra.mrb[0].mxu0 %v77
  %v1860 = vpop.f32.mrb[0].mxu0
  %v1861 = vadd.f32 0.0, %v1860
  %v1862 = vpop.f32.mrb[0].mxu0
  %v1863 = vpop.f32.mrb[0].mxu0
  %v1864 = vadd.f32 0.0, %v1863
  %v1865 = vpop.f32.mrb[0].mxu0
  %1866 = vdwg.mxu0
  %v1875 = vunpack.c.l.b16 %v1794
  %v1876 = vunpack.c.l.b16 %v1795
  %v1877 = vunpack.c.l.b16 %v1796
  %v1878 = vunpack.c.l.b16 %v1797
  %v1879 = vunpack.c.l.b16 %v1798
  %v1880 = vunpack.c.l.b16 %v1799
  %v1881 = vunpack.c.l.b16 %v1800
  %v1882 = vunpack.c.l.b16 %v1801
  %v1883 = vpack.c.b16 %v1876, %v1875
  %v1884 = vpack.c.b16 %v1878, %v1877
  %v1885 = vpack.c.b16 %v1880, %v1879
  %v1886 = vpack.c.b16 %v1882, %v1881
  %1891 = vmatprep.subr.bf16.mxu0 0
  %1892 = vmatpush1.bf16.msra.mxu0 %v1883
  %1893 = vmatprep.subr.bf16.mxu0 0
  %1894 = vmatpush1.bf16.msra.mxu0 %v1884
  %1895 = vmatprep.subr.bf16.mxu0 0
  %1896 = vmatpush1.bf16.msra.mxu0 %v1885
  %1897 = vmatprep.subr.bf16.mxu0 0
  %1898 = vmatpush1.bf16.msra.mxu0 %v1886
  %1899 = vmatprep.subr.bf16.mxu0 0
  %1900 = vmatpush1.bf16.msra.mxu0 0
  %1901 = vmatprep.subr.bf16.mxu0 0
  %1902 = vmatpush1.bf16.msra.mxu0 0
  %1903 = vmatprep.subr.bf16.mxu0 0
  %1904 = vmatpush1.bf16.msra.mxu0 0
  %1905 = vmatprep.subr.bf16.mxu0 0
  %1906 = vmatpush1.bf16.msra.mxu0 0
  %1907 = vmatprep.subr.bf16.mxu0 0
  %1908 = vmatpush1.bf16.msra.mxu0 0
  %1909 = vmatprep.subr.bf16.mxu0 0
  %1910 = vmatpush1.bf16.msra.mxu0 0
  %1911 = vmatprep.subr.bf16.mxu0 0
  %1912 = vmatpush1.bf16.msra.mxu0 0
  %1913 = vmatprep.subr.bf16.mxu0 0
  %1914 = vmatpush1.bf16.msra.mxu0 0
  %1915 = vmatprep.subr.bf16.mxu0 0
  %1916 = vmatpush1.bf16.msra.mxu0 0
  %1917 = vmatprep.subr.bf16.mxu0 0
  %1918 = vmatpush1.bf16.msra.mxu0 0
  %1919 = vmatprep.subr.bf16.mxu0 0
  %1920 = vmatpush1.bf16.msra.mxu0 0
  %1921 = vmatprep.subr.bf16.mxu0 0
  %1922 = vmatpush1.bf16.msra.mxu0 0
  %1923 = vmatprep.mubr.bf16.mxu0 0
  %1924 = vmatmul.mubr.bf16.gmra.mrb[0].mxu0 %v77
  %v1925 = vpop.f32.mrb[0].mxu0
  %v1926 = vadd.f32 0.0, %v1925
  %v1927 = vpop.f32.mrb[0].mxu0
  %v1928 = vpop.f32.mrb[0].mxu0
  %v1929 = vadd.f32 0.0, %v1928
  %v1930 = vpop.f32.mrb[0].mxu0
  %1931 = vdwg.mxu0
  %s1932 = scalar_lea.vmem %s2, 576
  %v1933 = vld [vmem:[%s1932] sm:$0xf]
  %v1934 = vld [vmem:[%s1932 + $0x4] sm:$0xf]
  %v1935 = vld [vmem:[%s1932 + $0x8] sm:$0xf]
  %v1936 = vld [vmem:[%s1932 + $0xc] sm:$0xf]
  %v1937 = vld [vmem:[%s1932 + $0x10] sm:$0xf]
  %v1938 = vld [vmem:[%s1932 + $0x14] sm:$0xf]
  %v1939 = vld [vmem:[%s1932 + $0x18] sm:$0xf]
  %v1940 = vld [vmem:[%s1932 + $0x1c] sm:$0xf]
  %v1941 = vld [vmem:[%s1932 + $0x20] sm:$0xf]
  %v1942 = vld [vmem:[%s1932 + $0x24] sm:$0xf]
  %v1943 = vld [vmem:[%s1932 + $0x28] sm:$0xf]
  %v1944 = vld [vmem:[%s1932 + $0x2c] sm:$0xf]
  %v1945 = vld [vmem:[%s1932 + $0x30] sm:$0xf]
  %v1946 = vld [vmem:[%s1932 + $0x34] sm:$0xf]
  %v1947 = vld [vmem:[%s1932 + $0x38] sm:$0xf]
  %v1948 = vld [vmem:[%s1932 + $0x3c] sm:$0xf]
  %v1957 = vunpack.c.l.b16 %v1933
  %v1958 = vunpack.c.l.b16 %v1934
  %v1959 = vunpack.c.l.b16 %v1935
  %v1960 = vunpack.c.l.b16 %v1936
  %v1961 = vunpack.c.l.b16 %v1937
  %v1962 = vunpack.c.l.b16 %v1938
  %v1963 = vunpack.c.l.b16 %v1939
  %v1964 = vunpack.c.l.b16 %v1940
  %v1965 = vpack.c.b16 %v1958, %v1957
  %v1966 = vpack.c.b16 %v1960, %v1959
  %v1967 = vpack.c.b16 %v1962, %v1961
  %v1968 = vpack.c.b16 %v1964, %v1963
  %1973 = vmatprep.subr.bf16.mxu0 0
  %1974 = vmatpush1.bf16.msra.mxu0 %v1965
  %1975 = vmatprep.subr.bf16.mxu0 0
  %1976 = vmatpush1.bf16.msra.mxu0 %v1966
  %1977 = vmatprep.subr.bf16.mxu0 0
  %1978 = vmatpush1.bf16.msra.mxu0 %v1967
  %1979 = vmatprep.subr.bf16.mxu0 0
  %1980 = vmatpush1.bf16.msra.mxu0 %v1968
  %1981 = vmatprep.subr.bf16.mxu0 0
  %1982 = vmatpush1.bf16.msra.mxu0 0
  %1983 = vmatprep.subr.bf16.mxu0 0
  %1984 = vmatpush1.bf16.msra.mxu0 0
  %1985 = vmatprep.subr.bf16.mxu0 0
  %1986 = vmatpush1.bf16.msra.mxu0 0
  %1987 = vmatprep.subr.bf16.mxu0 0
  %1988 = vmatpush1.bf16.msra.mxu0 0
  %1989 = vmatprep.subr.bf16.mxu0 0
  %1990 = vmatpush1.bf16.msra.mxu0 0
  %1991 = vmatprep.subr.bf16.mxu0 0
  %1992 = vmatpush1.bf16.msra.mxu0 0
  %1993 = vmatprep.subr.bf16.mxu0 0
  %1994 = vmatpush1.bf16.msra.mxu0 0
  %1995 = vmatprep.subr.bf16.mxu0 0
  %1996 = vmatpush1.bf16.msra.mxu0 0
  %1997 = vmatprep.subr.bf16.mxu0 0
  %1998 = vmatpush1.bf16.msra.mxu0 0
  %1999 = vmatprep.subr.bf16.mxu0 0
  %2000 = vmatpush1.bf16.msra.mxu0 0
  %2001 = vmatprep.subr.bf16.mxu0 0
  %2002 = vmatpush1.bf16.msra.mxu0 0
  %2003 = vmatprep.subr.bf16.mxu0 0
  %2004 = vmatpush1.bf16.msra.mxu0 0
  %2005 = vmatprep.mubr.bf16.mxu0 0
  %2006 = vmatmul.mubr.bf16.gmra.mrb[0].mxu0 %v77
  %v2007 = vpop.f32.mrb[0].mxu0
  %v2008 = vadd.f32 0.0, %v2007
  %v2009 = vpop.f32.mrb[0].mxu0
  %v2010 = vpop.f32.mrb[0].mxu0
  %v2011 = vadd.f32 0.0, %v2010
  %v2012 = vpop.f32.mrb[0].mxu0
  %2013 = vdwg.mxu0
  %v2022 = vunpack.c.l.b16 %v1941
  %v2023 = vunpack.c.l.b16 %v1942
  %v2024 = vunpack.c.l.b16 %v1943
  %v2025 = vunpack.c.l.b16 %v1944
  %v2026 = vunpack.c.l.b16 %v1945
  %v2027 = vunpack.c.l.b16 %v1946
  %v2028 = vunpack.c.l.b16 %v1947
  %v2029 = vunpack.c.l.b16 %v1948
  %v2030 = vpack.c.b16 %v2023, %v2022
  %v2031 = vpack.c.b16 %v2025, %v2024
  %v2032 = vpack.c.b16 %v2027, %v2026
  %v2033 = vpack.c.b16 %v2029, %v2028
  %2038 = vmatprep.subr.bf16.mxu0 0
  %2039 = vmatpush1.bf16.msra.mxu0 %v2030
  %2040 = vmatprep.subr.bf16.mxu0 0
  %2041 = vmatpush1.bf16.msra.mxu0 %v2031
  %2042 = vmatprep.subr.bf16.mxu0 0
  %2043 = vmatpush1.bf16.msra.mxu0 %v2032
  %2044 = vmatprep.subr.bf16.mxu0 0
  %2045 = vmatpush1.bf16.msra.mxu0 %v2033
  %2046 = vmatprep.subr.bf16.mxu0 0
  %2047 = vmatpush1.bf16.msra.mxu0 0
  %2048 = vmatprep.subr.bf16.mxu0 0
  %2049 = vmatpush1.bf16.msra.mxu0 0
  %2050 = vmatprep.subr.bf16.mxu0 0
  %2051 = vmatpush1.bf16.msra.mxu0 0
  %2052 = vmatprep.subr.bf16.mxu0 0
  %2053 = vmatpush1.bf16.msra.mxu0 0
  %2054 = vmatprep.subr.bf16.mxu0 0
  %2055 = vmatpush1.bf16.msra.mxu0 0
  %2056 = vmatprep.subr.bf16.mxu0 0
  %2057 = vmatpush1.bf16.msra.mxu0 0
  %2058 = vmatprep.subr.bf16.mxu0 0
  %2059 = vmatpush1.bf16.msra.mxu0 0
  %2060 = vmatprep.subr.bf16.mxu0 0
  %2061 = vmatpush1.bf16.msra.mxu0 0
  %2062 = vmatprep.subr.bf16.mxu0 0
  %2063 = vmatpush1.bf16.msra.mxu0 0
  %2064 = vmatprep.subr.bf16.mxu0 0
  %2065 = vmatpush1.bf16.msra.mxu0 0
  %2066 = vmatprep.subr.bf16.mxu0 0
  %2067 = vmatpush1.bf16.msra.mxu0 0
  %2068 = vmatprep.subr.bf16.mxu0 0
  %2069 = vmatpush1.bf16.msra.mxu0 0
  %2070 = vmatprep.mubr.bf16.mxu0 0
  %2071 = vmatmul.mubr.bf16.gmra.mrb[0].mxu0 %v77
  %v2072 = vpop.f32.mrb[0].mxu0
  %v2073 = vadd.f32 0.0, %v2072
  %v2074 = vpop.f32.mrb[0].mxu0
  %v2075 = vpop.f32.mrb[0].mxu0
  %v2076 = vadd.f32 0.0, %v2075
  %v2077 = vpop.f32.mrb[0].mxu0
  %2078 = vdwg.mxu0
  %v2079 = vld [vmem:[%s6] sm:$0xff]
  %v2080 = vld [vmem:[%s6 + $0x8] sm:$0xff]
  %v2081 = vld [vmem:[%s7] sm:$0xff]
  %v2082 = vld [vmem:[%s7 + $0x8] sm:$0xff]
  %s2083 = scalar_lea.vmem %s4, 2
  %v2084 = vld [vmem:[%s2083] sm:$0x1]
  %v2085 = vld [vmem:[%s2083 + $0x1] sm:$0x1]
  %v2086 = vadd.s32 %v776, 8
  %vm2087 = vcmp.le.s32.totalorder %v778, %v2086
  %v2088 = vsel %vm2087, 0.0, -1e+30
  %2089 = vst.msk [vmem:[#allocation2] sm:$0xff] %vm781, %v1714
  %2090 = vst.msk [vmem:[#allocation2 + $0x20] sm:$0xff] %vm781, %v1779
  %2091 = vst.msk [vmem:[#allocation3] sm:$0xff] %vm781, %v1861
  %2092 = vst.msk [vmem:[#allocation3 + $0x20] sm:$0xff] %vm781, %v1926
  %2093 = vst.msk [vmem:[#allocation4] sm:$0xff] %vm781, %v2008
  %2094 = vst.msk [vmem:[#allocation4 + $0x20] sm:$0xff] %vm781, %v2073
  %v2095 = vld [vmem:[#allocation2] sm:$0xff]
  %v2096 = vld [vmem:[#allocation2 + $0x8] sm:$0xff]
  %v2097 = vld [vmem:[#allocation2 + $0x20] sm:$0xff]
  %v2098 = vld [vmem:[#allocation2 + $0x28] sm:$0xff]
  %v2099 = vld [vmem:[#allocation3] sm:$0xff]
  %v2100 = vld [vmem:[#allocation3 + $0x8] sm:$0xff]
  %v2101 = vld [vmem:[#allocation3 + $0x20] sm:$0xff]
  %v2102 = vld [vmem:[#allocation3 + $0x28] sm:$0xff]
  %v2103 = vld [vmem:[#allocation4] sm:$0xff]
  %v2104 = vld [vmem:[#allocation4 + $0x8] sm:$0xff]
  %v2105 = vld [vmem:[#allocation4 + $0x20] sm:$0xff]
  %v2106 = vld [vmem:[#allocation4 + $0x28] sm:$0xff]
  %v2107 = vmul.f32 %v1420, %v33
  %v2108 = vmul.f32 %v1485, %v33
  %v2109 = vmul.f32 %v1567, %v34
  %v2110 = vmul.f32 %v1632, %v34
  %v2111 = vadd.f32 %v2107, %v2109
  %v2112 = vadd.f32 %v2108, %v2110
  %v2113 = vmul.f32 %v2095, %v2079
  %v2114 = vmul.f32 %v2096, %v2080
  %v2115 = vmul.f32 %v2097, %v2079
  %v2116 = vmul.f32 %v2098, %v2080
  %v2117 = vmul.f32 %v2099, %v2081
  %v2118 = vmul.f32 %v2100, %v2082
  %v2119 = vmul.f32 %v2101, %v2081
  %v2120 = vmul.f32 %v2102, %v2082
  %v2121 = vadd.f32 %v2113, %v2117
  %v2122 = vadd.f32 %v2114, %v2118
  %v2123 = vadd.f32 %v2115, %v2119
  %v2124 = vadd.f32 %v2116, %v2120
  %2125 = vst.msk [vmem:[#allocation2 + $0x10] sm:$0xff] %vm781, %v2121
  %2126 = vst.msk [vmem:[#allocation2 + $0x18] sm:$0xff] %vm781, %v2122
  %2127 = vst.msk [vmem:[#allocation2 + $0x30] sm:$0xff] %vm781, %v2123
  %2128 = vst.msk [vmem:[#allocation2 + $0x38] sm:$0xff] %vm781, %v2124
  %v2129 = vmul.f32 %v2099, %v2079
  %v2130 = vmul.f32 %v2100, %v2080
  %v2131 = vmul.f32 %v2101, %v2079
  %v2132 = vmul.f32 %v2102, %v2080
  %v2133 = vmul.f32 %v2095, %v2081
  %v2134 = vmul.f32 %v2096, %v2082
  %v2135 = vmul.f32 %v2097, %v2081
  %v2136 = vmul.f32 %v2098, %v2082
  %v2137 = vsub.f32 %v2129, %v2133
  %v2138 = vsub.f32 %v2130, %v2134
  %v2139 = vsub.f32 %v2131, %v2135
  %v2140 = vsub.f32 %v2132, %v2136
  %2141 = vst.msk [vmem:[#allocation3 + $0x10] sm:$0xff] %vm781, %v2137
  %2142 = vst.msk [vmem:[#allocation3 + $0x18] sm:$0xff] %vm781, %v2138
  %2143 = vst.msk [vmem:[#allocation3 + $0x30] sm:$0xff] %vm781, %v2139
  %2144 = vst.msk [vmem:[#allocation3 + $0x38] sm:$0xff] %vm781, %v2140
  %2145 = vst.msk [vmem:[#allocation4 + $0x10] sm:$0xff] %vm781, %v2103
  %2146 = vst.msk [vmem:[#allocation4 + $0x18] sm:$0xff] %vm781, %v2104
  %2147 = vst.msk [vmem:[#allocation4 + $0x30] sm:$0xff] %vm781, %v2105
  %2148 = vst.msk [vmem:[#allocation4 + $0x38] sm:$0xff] %vm781, %v2106
  %v2149 = vpack.c.bf16 %v2111, %v2111
  %v2150 = vpack.c.bf16 %v2112, %v2112
  %v2151 = vpack.c.bf16 %v2122, %v2121
  %v2152 = vpack.c.bf16 %v2124, %v2123
  %v2154 = vsel %vm781, %v2149, 0
  %v2157 = vsel %vm781, %v2151, 0
  %2159 = vmatprep.subr.bf16.mxu0 0
  %2160 = vmatpush1.bf16.xpose.msra.mxu0 %v2157
  %2161 = vmatprep.subr.bf16.mxu0 0
  %2162 = vmatpush1.bf16.xpose.msra.mxu0 0
  %2163 = vmatprep.subr.bf16.mxu0 0
  %2164 = vmatpush1.bf16.xpose.msra.mxu0 0
  %2165 = vmatprep.subr.bf16.mxu0 0
  %2166 = vmatpush1.bf16.xpose.msra.mxu0 0
  %2167 = vmatprep.subr.bf16.mxu0 0
  %2168 = vmatpush1.bf16.xpose.msra.mxu0 0
  %2169 = vmatprep.subr.bf16.mxu0 0
  %2170 = vmatpush1.bf16.xpose.msra.mxu0 0
  %2171 = vmatprep.subr.bf16.mxu0 0
  %2172 = vmatpush1.bf16.xpose.msra.mxu0 0
  %2173 = vmatprep.subr.bf16.mxu0 0
  %2174 = vmatpush1.bf16.xpose.msra.mxu0 0
  %2175 = vmatprep.subr.bf16.mxu0 0
  %2176 = vmatpush1.bf16.xpose.msra.mxu0 0
  %2177 = vmatprep.subr.bf16.mxu0 0
  %2178 = vmatpush1.bf16.xpose.msra.mxu0 0
  %2179 = vmatprep.subr.bf16.mxu0 0
  %2180 = vmatpush1.bf16.xpose.msra.mxu0 0
  %2181 = vmatprep.subr.bf16.mxu0 0
  %2182 = vmatpush1.bf16.xpose.msra.mxu0 0
  %2183 = vmatprep.subr.bf16.mxu0 0
  %2184 = vmatpush1.bf16.xpose.msra.mxu0 0
  %2185 = vmatprep.subr.bf16.mxu0 0
  %2186 = vmatpush1.bf16.xpose.msra.mxu0 0
  %2187 = vmatprep.subr.bf16.mxu0 0
  %2188 = vmatpush1.bf16.xpose.msra.mxu0 0
  %2189 = vmatprep.subr.bf16.mxu0 0
  %2190 = vmatpush1.bf16.xpose.msra.mxu0 0
  %2191 = vmatprep.mubr.bf16.mxu0 0
  %2192 = vmatmul.mubr.bf16.gmra.mrb[0].mxu0 %v2154
  %v2193 = vpop.f32.mrb[0].mxu0
  %v2194 = vadd.f32 0.0, %v2193
  %v2195 = vpop.f32.mrb[0].mxu0
  %v2196 = vpop.f32.mrb[0].mxu0
  %v2197 = vpop.f32.mrb[0].mxu0
  %2198 = vdwg.mxu0
  %v2200 = vsel %vm781, %v2150, 0
  %v2203 = vsel %vm781, %v2152, 0
  %2205 = vmatprep.subr.bf16.mxu0 0
  %2206 = vmatpush1.bf16.xpose.msra.mxu0 %v2203
  %2207 = vmatprep.subr.bf16.mxu0 0
  %2208 = vmatpush1.bf16.xpose.msra.mxu0 0
  %2209 = vmatprep.subr.bf16.mxu0 0
  %2210 = vmatpush1.bf16.xpose.msra.mxu0 0
  %2211 = vmatprep.subr.bf16.mxu0 0
  %2212 = vmatpush1.bf16.xpose.msra.mxu0 0
  %2213 = vmatprep.subr.bf16.mxu0 0
  %2214 = vmatpush1.bf16.xpose.msra.mxu0 0
  %2215 = vmatprep.subr.bf16.mxu0 0
  %2216 = vmatpush1.bf16.xpose.msra.mxu0 0
  %2217 = vmatprep.subr.bf16.mxu0 0
  %2218 = vmatpush1.bf16.xpose.msra.mxu0 0
  %2219 = vmatprep.subr.bf16.mxu0 0
  %2220 = vmatpush1.bf16.xpose.msra.mxu0 0
  %2221 = vmatprep.subr.bf16.mxu0 0
  %2222 = vmatpush1.bf16.xpose.msra.mxu0 0
  %2223 = vmatprep.subr.bf16.mxu0 0
  %2224 = vmatpush1.bf16.xpose.msra.mxu0 0
  %2225 = vmatprep.subr.bf16.mxu0 0
  %2226 = vmatpush1.bf16.xpose.msra.mxu0 0
  %2227 = vmatprep.subr.bf16.mxu0 0
  %2228 = vmatpush1.bf16.xpose.msra.mxu0 0
  %2229 = vmatprep.subr.bf16.mxu0 0
  %2230 = vmatpush1.bf16.xpose.msra.mxu0 0
  %2231 = vmatprep.subr.bf16.mxu0 0
  %2232 = vmatpush1.bf16.xpose.msra.mxu0 0
  %2233 = vmatprep.subr.bf16.mxu0 0
  %2234 = vmatpush1.bf16.xpose.msra.mxu0 0
  %2235 = vmatprep.subr.bf16.mxu0 0
  %2236 = vmatpush1.bf16.xpose.msra.mxu0 0
  %2237 = vmatprep.mubr.bf16.mxu0 0
  %2238 = vmatmul.mubr.bf16.gmra.mrb[0].mxu0 %v2200
  %v2239 = vpop.f32.mrb[0].mxu0
  %v2240 = vadd.f32 0.0, %v2239
  %v2241 = vpop.f32.mrb[0].mxu0
  %v2242 = vpop.f32.mrb[0].mxu0
  %v2243 = vpop.f32.mrb[0].mxu0
  %2244 = vdwg.mxu0
  %v2245 = vmul.f32 %v2194, 0.17677669
  %v2246 = vmul.f32 %v2240, 0.17677669
  %v2247 = vadd.f32 %v2245, %v2088
  %v2248 = vadd.f32 %v2246, %v2088
  %vm2249 = vcmask 130048
  %v2250 = vsel %vm2249, %v2247, -inf
  %2251 = vmax.xlane.f32.xlu0 %v2250
  %v2252 = vpop.xlane.xlu0 %2251
  %v2253 = vsel %vm2249, %v2248, -inf
  %2254 = vmax.xlane.f32.xlu0 %v2253
  %v2255 = vpop.xlane.xlu0 %2254
  %v2256 = vsub.f32 %v2247, %v2252
  %v2257 = vsub.f32 %v2248, %v2255
  %v2258 = vmul.f32 %v2256, 1.442695
  %v2259 = vpow.pop %v2258
  %v2260 = vmul.f32 %v2257, 1.442695
  %v2261 = vpow.pop %v2260
  %v2262 = vsel %vm2249, %v2259, 0.0
  %2263 = vadd.xlane.f32.xlu0 %v2262
  %v2264 = vpop.xlane.xlu0 %2263
  %v2265 = vsel %vm2249, %v2261, 0.0
  %2266 = vadd.xlane.f32.xlu0 %v2265
  %v2267 = vpop.xlane.xlu0 %2266
  %v2268 = vpack.c.bf16 %v2259, %v2259
  %v2269 = vpack.c.bf16 %v2261, %v2261
  %v2270 = vpack.c.bf16 %v2104, %v2103
  %v2271 = vpack.c.bf16 %v2106, %v2105
  %v2273 = vsel %vm2249, %v2268, 0
  %2275 = vmatprep.subr.bf16.mxu0 0
  %2276 = vmatpush1.bf16.msra.mxu0 %v2270
  %2277 = vmatprep.subr.bf16.mxu0 0
  %2278 = vmatpush1.bf16.msra.mxu0 0
  %2279 = vmatprep.subr.bf16.mxu0 0
  %2280 = vmatpush1.bf16.msra.mxu0 0
  %2281 = vmatprep.subr.bf16.mxu0 0
  %2282 = vmatpush1.bf16.msra.mxu0 0
  %2283 = vmatprep.subr.bf16.mxu0 0
  %2284 = vmatpush1.bf16.msra.mxu0 0
  %2285 = vmatprep.subr.bf16.mxu0 0
  %2286 = vmatpush1.bf16.msra.mxu0 0
  %2287 = vmatprep.subr.bf16.mxu0 0
  %2288 = vmatpush1.bf16.msra.mxu0 0
  %2289 = vmatprep.subr.bf16.mxu0 0
  %2290 = vmatpush1.bf16.msra.mxu0 0
  %2291 = vmatprep.subr.bf16.mxu0 0
  %2292 = vmatpush1.bf16.msra.mxu0 0
  %2293 = vmatprep.subr.bf16.mxu0 0
  %2294 = vmatpush1.bf16.msra.mxu0 0
  %2295 = vmatprep.subr.bf16.mxu0 0
  %2296 = vmatpush1.bf16.msra.mxu0 0
  %2297 = vmatprep.subr.bf16.mxu0 0
  %2298 = vmatpush1.bf16.msra.mxu0 0
  %2299 = vmatprep.subr.bf16.mxu0 0
  %2300 = vmatpush1.bf16.msra.mxu0 0
  %2301 = vmatprep.subr.bf16.mxu0 0
  %2302 = vmatpush1.bf16.msra.mxu0 0
  %2303 = vmatprep.subr.bf16.mxu0 0
  %2304 = vmatpush1.bf16.msra.mxu0 0
  %2305 = vmatprep.subr.bf16.mxu0 0
  %2306 = vmatpush1.bf16.msra.mxu0 0
  %2307 = vmatprep.mubr.bf16.mxu0 0
  %2308 = vmatmul.mubr.bf16.gmra.mrb[0].mxu0 %v2273
  %v2309 = vpop.f32.mrb[0].mxu0
  %v2310 = vadd.f32 0.0, %v2309
  %v2311 = vpop.f32.mrb[0].mxu0
  %v2312 = vpop.f32.mrb[0].mxu0
  %v2313 = vpop.f32.mrb[0].mxu0
  %2314 = vdwg.mxu0
  %v2316 = vsel %vm2249, %v2269, 0
  %2318 = vmatprep.subr.bf16.mxu0 0
  %2319 = vmatpush1.bf16.msra.mxu0 %v2271
  %2320 = vmatprep.subr.bf16.mxu0 0
  %2321 = vmatpush1.bf16.msra.mxu0 0
  %2322 = vmatprep.subr.bf16.mxu0 0
  %2323 = vmatpush1.bf16.msra.mxu0 0
  %2324 = vmatprep.subr.bf16.mxu0 0
  %2325 = vmatpush1.bf16.msra.mxu0 0
  %2326 = vmatprep.subr.bf16.mxu0 0
  %2327 = vmatpush1.bf16.msra.mxu0 0
  %2328 = vmatprep.subr.bf16.mxu0 0
  %2329 = vmatpush1.bf16.msra.mxu0 0
  %2330 = vmatprep.subr.bf16.mxu0 0
  %2331 = vmatpush1.bf16.msra.mxu0 0
  %2332 = vmatprep.subr.bf16.mxu0 0
  %2333 = vmatpush1.bf16.msra.mxu0 0
  %2334 = vmatprep.subr.bf16.mxu0 0
  %2335 = vmatpush1.bf16.msra.mxu0 0
  %2336 = vmatprep.subr.bf16.mxu0 0
  %2337 = vmatpush1.bf16.msra.mxu0 0
  %2338 = vmatprep.subr.bf16.mxu0 0
  %2339 = vmatpush1.bf16.msra.mxu0 0
  %2340 = vmatprep.subr.bf16.mxu0 0
  %2341 = vmatpush1.bf16.msra.mxu0 0
  %2342 = vmatprep.subr.bf16.mxu0 0
  %2343 = vmatpush1.bf16.msra.mxu0 0
  %2344 = vmatprep.subr.bf16.mxu0 0
  %2345 = vmatpush1.bf16.msra.mxu0 0
  %2346 = vmatprep.subr.bf16.mxu0 0
  %2347 = vmatpush1.bf16.msra.mxu0 0
  %2348 = vmatprep.subr.bf16.mxu0 0
  %2349 = vmatpush1.bf16.msra.mxu0 0
  %2350 = vmatprep.mubr.bf16.mxu0 0
  %2351 = vmatmul.mubr.bf16.gmra.mrb[0].mxu0 %v2316
  %v2352 = vpop.f32.mrb[0].mxu0
  %v2353 = vadd.f32 0.0, %v2352
  %v2354 = vpop.f32.mrb[0].mxu0
  %v2355 = vpop.f32.mrb[0].mxu0
  %v2356 = vpop.f32.mrb[0].mxu0
  %2357 = vdwg.mxu0
  %v2358 = vrcp.pop %v2264
  %v2359 = vrcp.pop %v2267
  %v2360 = vmul.f32 %v2310, %v2358
  %v2361 = vmul.f32 %v2353, %v2359
  %v2362 = vmul.f32 %v2360, %v2360
  %v2363 = vmul.f32 %v2361, %v2361
  %v2364 = vsel %vm781, %v2362, 0.0
  %2365 = vadd.xlane.f32.xlu0 %v2364
  %v2366 = vpop.xlane.xlu0 %2365
  %v2367 = vsel %vm781, %v2363, 0.0
  %2368 = vadd.xlane.f32.xlu0 %v2367
  %v2369 = vpop.xlane.xlu0 %2368
  %v2370 = vadd.f32 %v2366, %v2369
  %v2371 = vmul.f32 %v2370, %v1047
  %v2372 = vadd.f32 %v2371, 1e-05
  %v2373 = vrsqrt.pop %v2372
  %v2374 = vmul.f32 %v2360, %v2373
  %v2375 = vmul.f32 %v2361, %v2373
  %v2378 = vlaneseq
  %v2379 = vshrl.u32 %v2378, 7
  %v2380 = vsub.s32 0, %v2379
  %v2381 = vrot.slane %v2084, %v2380
  %v2382 = vlaneseq
  %v2383 = vshrl.u32 %v2382, 7
  %v2384 = vsub.s32 0, %v2383
  %v2385 = vrot.slane %v2085, %v2384
  %v2388 = vmul.f32 %v2374, %v2381
  %v2389 = vmul.f32 %v2375, %v2385
  %v2390 = vadd.f32 %v1067, %v2388
  %v2391 = vadd.f32 %v1068, %v2389
  %2392 = vst.msk [vmem:[%s1069] sm:$0xff] %vm781, %v1717
  %2393 = vst.msk [vmem:[%s1069 + $0x20] sm:$0xff] %vm781, %v1782
  %2394 = vst.msk [vmem:[%s1072] sm:$0xff] %vm781, %v1864
  %2395 = vst.msk [vmem:[%s1072 + $0x20] sm:$0xff] %vm781, %v1929
  %2396 = vst.msk [vmem:[%s1075] sm:$0xff] %vm781, %v2011
  %2397 = vst.msk [vmem:[%s1075 + $0x20] sm:$0xff] %vm781, %v2076
  %v2398 = vld [vmem:[%s1069] sm:$0xff]
  %v2399 = vld [vmem:[%s1069 + $0x8] sm:$0xff]
  %v2400 = vld [vmem:[%s1069 + $0x20] sm:$0xff]
  %v2401 = vld [vmem:[%s1069 + $0x28] sm:$0xff]
  %v2402 = vld [vmem:[%s1072] sm:$0xff]
  %v2403 = vld [vmem:[%s1072 + $0x8] sm:$0xff]
  %v2404 = vld [vmem:[%s1072 + $0x20] sm:$0xff]
  %v2405 = vld [vmem:[%s1072 + $0x28] sm:$0xff]
  %v2406 = vld [vmem:[%s1075] sm:$0xff]
  %v2407 = vld [vmem:[%s1075 + $0x8] sm:$0xff]
  %v2408 = vld [vmem:[%s1075 + $0x20] sm:$0xff]
  %v2409 = vld [vmem:[%s1075 + $0x28] sm:$0xff]
  %v2410 = vmul.f32 %v1423, %v33
  %v2411 = vmul.f32 %v1488, %v33
  %v2412 = vmul.f32 %v1570, %v34
  %v2413 = vmul.f32 %v1635, %v34
  %v2414 = vadd.f32 %v2410, %v2412
  %v2415 = vadd.f32 %v2411, %v2413
  %v2416 = vmul.f32 %v2398, %v2079
  %v2417 = vmul.f32 %v2399, %v2080
  %v2418 = vmul.f32 %v2400, %v2079
  %v2419 = vmul.f32 %v2401, %v2080
  %v2420 = vmul.f32 %v2402, %v2081
  %v2421 = vmul.f32 %v2403, %v2082
  %v2422 = vmul.f32 %v2404, %v2081
  %v2423 = vmul.f32 %v2405, %v2082
  %v2424 = vadd.f32 %v2416, %v2420
  %v2425 = vadd.f32 %v2417, %v2421
  %v2426 = vadd.f32 %v2418, %v2422
  %v2427 = vadd.f32 %v2419, %v2423
  %2428 = vst.msk [vmem:[%s1069 + $0x10] sm:$0xff] %vm781, %v2424
  %2429 = vst.msk [vmem:[%s1069 + $0x18] sm:$0xff] %vm781, %v2425
  %2430 = vst.msk [vmem:[%s1069 + $0x30] sm:$0xff] %vm781, %v2426
  %2431 = vst.msk [vmem:[%s1069 + $0x38] sm:$0xff] %vm781, %v2427
  %v2432 = vmul.f32 %v2402, %v2079
  %v2433 = vmul.f32 %v2403, %v2080
  %v2434 = vmul.f32 %v2404, %v2079
  %v2435 = vmul.f32 %v2405, %v2080
  %v2436 = vmul.f32 %v2398, %v2081
  %v2437 = vmul.f32 %v2399, %v2082
  %v2438 = vmul.f32 %v2400, %v2081
  %v2439 = vmul.f32 %v2401, %v2082
  %v2440 = vsub.f32 %v2432, %v2436
  %v2441 = vsub.f32 %v2433, %v2437
  %v2442 = vsub.f32 %v2434, %v2438
  %v2443 = vsub.f32 %v2435, %v2439
  %2444 = vst.msk [vmem:[%s1072 + $0x10] sm:$0xff] %vm781, %v2440
  %2445 = vst.msk [vmem:[%s1072 + $0x18] sm:$0xff] %vm781, %v2441
  %2446 = vst.msk [vmem:[%s1072 + $0x30] sm:$0xff] %vm781, %v2442
  %2447 = vst.msk [vmem:[%s1072 + $0x38] sm:$0xff] %vm781, %v2443
  %2448 = vst.msk [vmem:[%s1075 + $0x10] sm:$0xff] %vm781, %v2406
  %2449 = vst.msk [vmem:[%s1075 + $0x18] sm:$0xff] %vm781, %v2407
  %2450 = vst.msk [vmem:[%s1075 + $0x30] sm:$0xff] %vm781, %v2408
  %2451 = vst.msk [vmem:[%s1075 + $0x38] sm:$0xff] %vm781, %v2409
  %v2452 = vpack.c.bf16 %v2414, %v2414
  %v2453 = vpack.c.bf16 %v2415, %v2415
  %v2454 = vpack.c.bf16 %v2425, %v2424
  %v2455 = vpack.c.bf16 %v2427, %v2426
  %v2457 = vsel %vm781, %v2452, 0
  %v2460 = vsel %vm781, %v2454, 0
  %2462 = vmatprep.subr.bf16.mxu0 0
  %2463 = vmatpush1.bf16.xpose.msra.mxu0 %v2460
  %2464 = vmatprep.subr.bf16.mxu0 0
  %2465 = vmatpush1.bf16.xpose.msra.mxu0 0
  %2466 = vmatprep.subr.bf16.mxu0 0
  %2467 = vmatpush1.bf16.xpose.msra.mxu0 0
  %2468 = vmatprep.subr.bf16.mxu0 0
  %2469 = vmatpush1.bf16.xpose.msra.mxu0 0
  %2470 = vmatprep.subr.bf16.mxu0 0
  %2471 = vmatpush1.bf16.xpose.msra.mxu0 0
  %2472 = vmatprep.subr.bf16.mxu0 0
  %2473 = vmatpush1.bf16.xpose.msra.mxu0 0
  %2474 = vmatprep.subr.bf16.mxu0 0
  %2475 = vmatpush1.bf16.xpose.msra.mxu0 0
  %2476 = vmatprep.subr.bf16.mxu0 0
  %2477 = vmatpush1.bf16.xpose.msra.mxu0 0
  %2478 = vmatprep.subr.bf16.mxu0 0
  %2479 = vmatpush1.bf16.xpose.msra.mxu0 0
  %2480 = vmatprep.subr.bf16.mxu0 0
  %2481 = vmatpush1.bf16.xpose.msra.mxu0 0
  %2482 = vmatprep.subr.bf16.mxu0 0
  %2483 = vmatpush1.bf16.xpose.msra.mxu0 0
  %2484 = vmatprep.subr.bf16.mxu0 0
  %2485 = vmatpush1.bf16.xpose.msra.mxu0 0
  %2486 = vmatprep.subr.bf16.mxu0 0
  %2487 = vmatpush1.bf16.xpose.msra.mxu0 0
  %2488 = vmatprep.subr.bf16.mxu0 0
  %2489 = vmatpush1.bf16.xpose.msra.mxu0 0
  %2490 = vmatprep.subr.bf16.mxu0 0
  %2491 = vmatpush1.bf16.xpose.msra.mxu0 0
  %2492 = vmatprep.subr.bf16.mxu0 0
  %2493 = vmatpush1.bf16.xpose.msra.mxu0 0
  %2494 = vmatprep.mubr.bf16.mxu0 0
  %2495 = vmatmul.mubr.bf16.gmra.mrb[0].mxu0 %v2457
  %v2496 = vpop.f32.mrb[0].mxu0
  %v2497 = vadd.f32 0.0, %v2496
  %v2498 = vpop.f32.mrb[0].mxu0
  %v2499 = vpop.f32.mrb[0].mxu0
  %v2500 = vpop.f32.mrb[0].mxu0
  %2501 = vdwg.mxu0
  %v2503 = vsel %vm781, %v2453, 0
  %v2506 = vsel %vm781, %v2455, 0
  %2508 = vmatprep.subr.bf16.mxu0 0
  %2509 = vmatpush1.bf16.xpose.msra.mxu0 %v2506
  %2510 = vmatprep.subr.bf16.mxu0 0
  %2511 = vmatpush1.bf16.xpose.msra.mxu0 0
  %2512 = vmatprep.subr.bf16.mxu0 0
  %2513 = vmatpush1.bf16.xpose.msra.mxu0 0
  %2514 = vmatprep.subr.bf16.mxu0 0
  %2515 = vmatpush1.bf16.xpose.msra.mxu0 0
  %2516 = vmatprep.subr.bf16.mxu0 0
  %2517 = vmatpush1.bf16.xpose.msra.mxu0 0
  %2518 = vmatprep.subr.bf16.mxu0 0
  %2519 = vmatpush1.bf16.xpose.msra.mxu0 0
  %2520 = vmatprep.subr.bf16.mxu0 0
  %2521 = vmatpush1.bf16.xpose.msra.mxu0 0
  %2522 = vmatprep.subr.bf16.mxu0 0
  %2523 = vmatpush1.bf16.xpose.msra.mxu0 0
  %2524 = vmatprep.subr.bf16.mxu0 0
  %2525 = vmatpush1.bf16.xpose.msra.mxu0 0
  %2526 = vmatprep.subr.bf16.mxu0 0
  %2527 = vmatpush1.bf16.xpose.msra.mxu0 0
  %2528 = vmatprep.subr.bf16.mxu0 0
  %2529 = vmatpush1.bf16.xpose.msra.mxu0 0
  %2530 = vmatprep.subr.bf16.mxu0 0
  %2531 = vmatpush1.bf16.xpose.msra.mxu0 0
  %2532 = vmatprep.subr.bf16.mxu0 0
  %2533 = vmatpush1.bf16.xpose.msra.mxu0 0
  %2534 = vmatprep.subr.bf16.mxu0 0
  %2535 = vmatpush1.bf16.xpose.msra.mxu0 0
  %2536 = vmatprep.subr.bf16.mxu0 0
  %2537 = vmatpush1.bf16.xpose.msra.mxu0 0
  %2538 = vmatprep.subr.bf16.mxu0 0
  %2539 = vmatpush1.bf16.xpose.msra.mxu0 0
  %2540 = vmatprep.mubr.bf16.mxu0 0
  %2541 = vmatmul.mubr.bf16.gmra.mrb[0].mxu0 %v2503
  %v2542 = vpop.f32.mrb[0].mxu0
  %v2543 = vadd.f32 0.0, %v2542
  %v2544 = vpop.f32.mrb[0].mxu0
  %v2545 = vpop.f32.mrb[0].mxu0
  %v2546 = vpop.f32.mrb[0].mxu0
  %2547 = vdwg.mxu0
  %v2548 = vmul.f32 %v2497, 0.17677669
  %v2549 = vmul.f32 %v2543, 0.17677669
  %v2550 = vadd.f32 %v2548, %v2088
  %v2551 = vadd.f32 %v2549, %v2088
  %v2552 = vsel %vm2249, %v2550, -inf
  %2553 = vmax.xlane.f32.xlu0 %v2552
  %v2554 = vpop.xlane.xlu0 %2553
  %v2555 = vsel %vm2249, %v2551, -inf
  %2556 = vmax.xlane.f32.xlu0 %v2555
  %v2557 = vpop.xlane.xlu0 %2556
  %v2558 = vsub.f32 %v2550, %v2554
  %v2559 = vsub.f32 %v2551, %v2557
  %v2560 = vmul.f32 %v2558, 1.442695
  %v2561 = vpow.pop %v2560
  %v2562 = vmul.f32 %v2559, 1.442695
  %v2563 = vpow.pop %v2562
  %v2564 = vsel %vm2249, %v2561, 0.0
  %2565 = vadd.xlane.f32.xlu0 %v2564
  %v2566 = vpop.xlane.xlu0 %2565
  %v2567 = vsel %vm2249, %v2563, 0.0
  %2568 = vadd.xlane.f32.xlu0 %v2567
  %v2569 = vpop.xlane.xlu0 %2568
  %v2570 = vpack.c.bf16 %v2561, %v2561
  %v2571 = vpack.c.bf16 %v2563, %v2563
  %v2572 = vpack.c.bf16 %v2407, %v2406
  %v2573 = vpack.c.bf16 %v2409, %v2408
  %v2575 = vsel %vm2249, %v2570, 0
  %2577 = vmatprep.subr.bf16.mxu0 0
  %2578 = vmatpush1.bf16.msra.mxu0 %v2572
  %2579 = vmatprep.subr.bf16.mxu0 0
  %2580 = vmatpush1.bf16.msra.mxu0 0
  %2581 = vmatprep.subr.bf16.mxu0 0
  %2582 = vmatpush1.bf16.msra.mxu0 0
  %2583 = vmatprep.subr.bf16.mxu0 0
  %2584 = vmatpush1.bf16.msra.mxu0 0
  %2585 = vmatprep.subr.bf16.mxu0 0
  %2586 = vmatpush1.bf16.msra.mxu0 0
  %2587 = vmatprep.subr.bf16.mxu0 0
  %2588 = vmatpush1.bf16.msra.mxu0 0
  %2589 = vmatprep.subr.bf16.mxu0 0
  %2590 = vmatpush1.bf16.msra.mxu0 0
  %2591 = vmatprep.subr.bf16.mxu0 0
  %2592 = vmatpush1.bf16.msra.mxu0 0
  %2593 = vmatprep.subr.bf16.mxu0 0
  %2594 = vmatpush1.bf16.msra.mxu0 0
  %2595 = vmatprep.subr.bf16.mxu0 0
  %2596 = vmatpush1.bf16.msra.mxu0 0
  %2597 = vmatprep.subr.bf16.mxu0 0
  %2598 = vmatpush1.bf16.msra.mxu0 0
  %2599 = vmatprep.subr.bf16.mxu0 0
  %2600 = vmatpush1.bf16.msra.mxu0 0
  %2601 = vmatprep.subr.bf16.mxu0 0
  %2602 = vmatpush1.bf16.msra.mxu0 0
  %2603 = vmatprep.subr.bf16.mxu0 0
  %2604 = vmatpush1.bf16.msra.mxu0 0
  %2605 = vmatprep.subr.bf16.mxu0 0
  %2606 = vmatpush1.bf16.msra.mxu0 0
  %2607 = vmatprep.subr.bf16.mxu0 0
  %2608 = vmatpush1.bf16.msra.mxu0 0
  %2609 = vmatprep.mubr.bf16.mxu0 0
  %2610 = vmatmul.mubr.bf16.gmra.mrb[0].mxu0 %v2575
  %v2611 = vpop.f32.mrb[0].mxu0
  %v2612 = vadd.f32 0.0, %v2611
  %v2613 = vpop.f32.mrb[0].mxu0
  %v2614 = vpop.f32.mrb[0].mxu0
  %v2615 = vpop.f32.mrb[0].mxu0
  %2616 = vdwg.mxu0
  %v2618 = vsel %vm2249, %v2571, 0
  %2620 = vmatprep.subr.bf16.mxu0 0
  %2621 = vmatpush1.bf16.msra.mxu0 %v2573
  %2622 = vmatprep.subr.bf16.mxu0 0
  %2623 = vmatpush1.bf16.msra.mxu0 0
  %2624 = vmatprep.subr.bf16.mxu0 0
  %2625 = vmatpush1.bf16.msra.mxu0 0
  %2626 = vmatprep.subr.bf16.mxu0 0
  %2627 = vmatpush1.bf16.msra.mxu0 0
  %2628 = vmatprep.subr.bf16.mxu0 0
  %2629 = vmatpush1.bf16.msra.mxu0 0
  %2630 = vmatprep.subr.bf16.mxu0 0
  %2631 = vmatpush1.bf16.msra.mxu0 0
  %2632 = vmatprep.subr.bf16.mxu0 0
  %2633 = vmatpush1.bf16.msra.mxu0 0
  %2634 = vmatprep.subr.bf16.mxu0 0
  %2635 = vmatpush1.bf16.msra.mxu0 0
  %2636 = vmatprep.subr.bf16.mxu0 0
  %2637 = vmatpush1.bf16.msra.mxu0 0
  %2638 = vmatprep.subr.bf16.mxu0 0
  %2639 = vmatpush1.bf16.msra.mxu0 0
  %2640 = vmatprep.subr.bf16.mxu0 0
  %2641 = vmatpush1.bf16.msra.mxu0 0
  %2642 = vmatprep.subr.bf16.mxu0 0
  %2643 = vmatpush1.bf16.msra.mxu0 0
  %2644 = vmatprep.subr.bf16.mxu0 0
  %2645 = vmatpush1.bf16.msra.mxu0 0
  %2646 = vmatprep.subr.bf16.mxu0 0
  %2647 = vmatpush1.bf16.msra.mxu0 0
  %2648 = vmatprep.subr.bf16.mxu0 0
  %2649 = vmatpush1.bf16.msra.mxu0 0
  %2650 = vmatprep.subr.bf16.mxu0 0
  %2651 = vmatpush1.bf16.msra.mxu0 0
  %2652 = vmatprep.mubr.bf16.mxu0 0
  %2653 = vmatmul.mubr.bf16.gmra.mrb[0].mxu0 %v2618
  %v2654 = vpop.f32.mrb[0].mxu0
  %v2655 = vadd.f32 0.0, %v2654
  %v2656 = vpop.f32.mrb[0].mxu0
  %v2657 = vpop.f32.mrb[0].mxu0
  %v2658 = vpop.f32.mrb[0].mxu0
  %2659 = vdwg.mxu0
  %v2660 = vrcp.pop %v2566
  %v2661 = vrcp.pop %v2569
  %v2662 = vmul.f32 %v2612, %v2660
  %v2663 = vmul.f32 %v2655, %v2661
  %v2664 = vmul.f32 %v2662, %v2662
  %v2665 = vmul.f32 %v2663, %v2663
  %v2666 = vsel %vm781, %v2664, 0.0
  %2667 = vadd.xlane.f32.xlu0 %v2666
  %v2668 = vpop.xlane.xlu0 %2667
  %v2669 = vsel %vm781, %v2665, 0.0
  %2670 = vadd.xlane.f32.xlu0 %v2669
  %v2671 = vpop.xlane.xlu0 %2670
  %v2672 = vadd.f32 %v2668, %v2671
  %v2673 = vmul.f32 %v2672, %v1047
  %v2674 = vadd.f32 %v2673, 1e-05
  %v2675 = vrsqrt.pop %v2674
  %v2676 = vmul.f32 %v2662, %v2675
  %v2677 = vmul.f32 %v2663, %v2675
  %v2678 = vmul.f32 %v2676, %v2381
  %v2679 = vmul.f32 %v2677, %v2385
  %v2680 = vadd.f32 %v1342, %v2678
  %v2681 = vadd.f32 %v1343, %v2679
  %s2682 = scalar_lea.vmem %s2, 640
  %v2683 = vld [vmem:[%s2682] sm:$0xf]
  %v2684 = vld [vmem:[%s2682 + $0x4] sm:$0xf]
  %v2685 = vld [vmem:[%s2682 + $0x8] sm:$0xf]
  %v2686 = vld [vmem:[%s2682 + $0xc] sm:$0xf]
  %v2687 = vld [vmem:[%s2682 + $0x10] sm:$0xf]
  %v2688 = vld [vmem:[%s2682 + $0x14] sm:$0xf]
  %v2689 = vld [vmem:[%s2682 + $0x18] sm:$0xf]
  %v2690 = vld [vmem:[%s2682 + $0x1c] sm:$0xf]
  %v2691 = vld [vmem:[%s2682 + $0x20] sm:$0xf]
  %v2692 = vld [vmem:[%s2682 + $0x24] sm:$0xf]
  %v2693 = vld [vmem:[%s2682 + $0x28] sm:$0xf]
  %v2694 = vld [vmem:[%s2682 + $0x2c] sm:$0xf]
  %v2695 = vld [vmem:[%s2682 + $0x30] sm:$0xf]
  %v2696 = vld [vmem:[%s2682 + $0x34] sm:$0xf]
  %v2697 = vld [vmem:[%s2682 + $0x38] sm:$0xf]
  %v2698 = vld [vmem:[%s2682 + $0x3c] sm:$0xf]
  %v2707 = vunpack.c.l.b16 %v2683
  %v2708 = vunpack.c.l.b16 %v2684
  %v2709 = vunpack.c.l.b16 %v2685
  %v2710 = vunpack.c.l.b16 %v2686
  %v2711 = vunpack.c.l.b16 %v2687
  %v2712 = vunpack.c.l.b16 %v2688
  %v2713 = vunpack.c.l.b16 %v2689
  %v2714 = vunpack.c.l.b16 %v2690
  %v2715 = vpack.c.b16 %v2708, %v2707
  %v2716 = vpack.c.b16 %v2710, %v2709
  %v2717 = vpack.c.b16 %v2712, %v2711
  %v2718 = vpack.c.b16 %v2714, %v2713
  %2723 = vmatprep.subr.bf16.mxu0 0
  %2724 = vmatpush1.bf16.msra.mxu0 %v2715
  %2725 = vmatprep.subr.bf16.mxu0 0
  %2726 = vmatpush1.bf16.msra.mxu0 %v2716
  %2727 = vmatprep.subr.bf16.mxu0 0
  %2728 = vmatpush1.bf16.msra.mxu0 %v2717
  %2729 = vmatprep.subr.bf16.mxu0 0
  %2730 = vmatpush1.bf16.msra.mxu0 %v2718
  %2731 = vmatprep.subr.bf16.mxu0 0
  %2732 = vmatpush1.bf16.msra.mxu0 0
  %2733 = vmatprep.subr.bf16.mxu0 0
  %2734 = vmatpush1.bf16.msra.mxu0 0
  %2735 = vmatprep.subr.bf16.mxu0 0
  %2736 = vmatpush1.bf16.msra.mxu0 0
  %2737 = vmatprep.subr.bf16.mxu0 0
  %2738 = vmatpush1.bf16.msra.mxu0 0
  %2739 = vmatprep.subr.bf16.mxu0 0
  %2740 = vmatpush1.bf16.msra.mxu0 0
  %2741 = vmatprep.subr.bf16.mxu0 0
  %2742 = vmatpush1.bf16.msra.mxu0 0
  %2743 = vmatprep.subr.bf16.mxu0 0
  %2744 = vmatpush1.bf16.msra.mxu0 0
  %2745 = vmatprep.subr.bf16.mxu0 0
  %2746 = vmatpush1.bf16.msra.mxu0 0
  %2747 = vmatprep.subr.bf16.mxu0 0
  %2748 = vmatpush1.bf16.msra.mxu0 0
  %2749 = vmatprep.subr.bf16.mxu0 0
  %2750 = vmatpush1.bf16.msra.mxu0 0
  %2751 = vmatprep.subr.bf16.mxu0 0
  %2752 = vmatpush1.bf16.msra.mxu0 0
  %2753 = vmatprep.subr.bf16.mxu0 0
  %2754 = vmatpush1.bf16.msra.mxu0 0
  %2755 = vmatprep.mubr.bf16.mxu0 0
  %2756 = vmatmul.mubr.bf16.gmra.mrb[0].mxu0 %v77
  %v2757 = vpop.f32.mrb[0].mxu0
  %v2758 = vadd.f32 0.0, %v2757
  %v2759 = vpop.f32.mrb[0].mxu0
  %v2760 = vpop.f32.mrb[0].mxu0
  %v2761 = vadd.f32 0.0, %v2760
  %v2762 = vpop.f32.mrb[0].mxu0
  %2763 = vdwg.mxu0
  %v2772 = vunpack.c.l.b16 %v2691
  %v2773 = vunpack.c.l.b16 %v2692
  %v2774 = vunpack.c.l.b16 %v2693
  %v2775 = vunpack.c.l.b16 %v2694
  %v2776 = vunpack.c.l.b16 %v2695
  %v2777 = vunpack.c.l.b16 %v2696
  %v2778 = vunpack.c.l.b16 %v2697
  %v2779 = vunpack.c.l.b16 %v2698
  %v2780 = vpack.c.b16 %v2773, %v2772
  %v2781 = vpack.c.b16 %v2775, %v2774
  %v2782 = vpack.c.b16 %v2777, %v2776
  %v2783 = vpack.c.b16 %v2779, %v2778
  %2788 = vmatprep.subr.bf16.mxu0 0
  %2789 = vmatpush1.bf16.msra.mxu0 %v2780
  %2790 = vmatprep.subr.bf16.mxu0 0
  %2791 = vmatpush1.bf16.msra.mxu0 %v2781
  %2792 = vmatprep.subr.bf16.mxu0 0
  %2793 = vmatpush1.bf16.msra.mxu0 %v2782
  %2794 = vmatprep.subr.bf16.mxu0 0
  %2795 = vmatpush1.bf16.msra.mxu0 %v2783
  %2796 = vmatprep.subr.bf16.mxu0 0
  %2797 = vmatpush1.bf16.msra.mxu0 0
  %2798 = vmatprep.subr.bf16.mxu0 0
  %2799 = vmatpush1.bf16.msra.mxu0 0
  %2800 = vmatprep.subr.bf16.mxu0 0
  %2801 = vmatpush1.bf16.msra.mxu0 0
  %2802 = vmatprep.subr.bf16.mxu0 0
  %2803 = vmatpush1.bf16.msra.mxu0 0
  %2804 = vmatprep.subr.bf16.mxu0 0
  %2805 = vmatpush1.bf16.msra.mxu0 0
  %2806 = vmatprep.subr.bf16.mxu0 0
  %2807 = vmatpush1.bf16.msra.mxu0 0
  %2808 = vmatprep.subr.bf16.mxu0 0
  %2809 = vmatpush1.bf16.msra.mxu0 0
  %2810 = vmatprep.subr.bf16.mxu0 0
  %2811 = vmatpush1.bf16.msra.mxu0 0
  %2812 = vmatprep.subr.bf16.mxu0 0
  %2813 = vmatpush1.bf16.msra.mxu0 0
  %2814 = vmatprep.subr.bf16.mxu0 0
  %2815 = vmatpush1.bf16.msra.mxu0 0
  %2816 = vmatprep.subr.bf16.mxu0 0
  %2817 = vmatpush1.bf16.msra.mxu0 0
  %2818 = vmatprep.subr.bf16.mxu0 0
  %2819 = vmatpush1.bf16.msra.mxu0 0
  %2820 = vmatprep.mubr.bf16.mxu0 0
  %2821 = vmatmul.mubr.bf16.gmra.mrb[0].mxu0 %v77
  %v2822 = vpop.f32.mrb[0].mxu0
  %v2823 = vadd.f32 0.0, %v2822
  %v2824 = vpop.f32.mrb[0].mxu0
  %v2825 = vpop.f32.mrb[0].mxu0
  %v2826 = vadd.f32 0.0, %v2825
  %v2827 = vpop.f32.mrb[0].mxu0
  %2828 = vdwg.mxu0
  %s2829 = scalar_lea.vmem %s2, 704
  %v2830 = vld [vmem:[%s2829] sm:$0xf]
  %v2831 = vld [vmem:[%s2829 + $0x4] sm:$0xf]
  %v2832 = vld [vmem:[%s2829 + $0x8] sm:$0xf]
  %v2833 = vld [vmem:[%s2829 + $0xc] sm:$0xf]
  %v2834 = vld [vmem:[%s2829 + $0x10] sm:$0xf]
  %v2835 = vld [vmem:[%s2829 + $0x14] sm:$0xf]
  %v2836 = vld [vmem:[%s2829 + $0x18] sm:$0xf]
  %v2837 = vld [vmem:[%s2829 + $0x1c] sm:$0xf]
  %v2838 = vld [vmem:[%s2829 + $0x20] sm:$0xf]
  %v2839 = vld [vmem:[%s2829 + $0x24] sm:$0xf]
  %v2840 = vld [vmem:[%s2829 + $0x28] sm:$0xf]
  %v2841 = vld [vmem:[%s2829 + $0x2c] sm:$0xf]
  %v2842 = vld [vmem:[%s2829 + $0x30] sm:$0xf]
  %v2843 = vld [vmem:[%s2829 + $0x34] sm:$0xf]
  %v2844 = vld [vmem:[%s2829 + $0x38] sm:$0xf]
  %v2845 = vld [vmem:[%s2829 + $0x3c] sm:$0xf]
  %v2854 = vunpack.c.l.b16 %v2830
  %v2855 = vunpack.c.l.b16 %v2831
  %v2856 = vunpack.c.l.b16 %v2832
  %v2857 = vunpack.c.l.b16 %v2833
  %v2858 = vunpack.c.l.b16 %v2834
  %v2859 = vunpack.c.l.b16 %v2835
  %v2860 = vunpack.c.l.b16 %v2836
  %v2861 = vunpack.c.l.b16 %v2837
  %v2862 = vpack.c.b16 %v2855, %v2854
  %v2863 = vpack.c.b16 %v2857, %v2856
  %v2864 = vpack.c.b16 %v2859, %v2858
  %v2865 = vpack.c.b16 %v2861, %v2860
  %2870 = vmatprep.subr.bf16.mxu0 0
  %2871 = vmatpush1.bf16.msra.mxu0 %v2862
  %2872 = vmatprep.subr.bf16.mxu0 0
  %2873 = vmatpush1.bf16.msra.mxu0 %v2863
  %2874 = vmatprep.subr.bf16.mxu0 0
  %2875 = vmatpush1.bf16.msra.mxu0 %v2864
  %2876 = vmatprep.subr.bf16.mxu0 0
  %2877 = vmatpush1.bf16.msra.mxu0 %v2865
  %2878 = vmatprep.subr.bf16.mxu0 0
  %2879 = vmatpush1.bf16.msra.mxu0 0
  %2880 = vmatprep.subr.bf16.mxu0 0
  %2881 = vmatpush1.bf16.msra.mxu0 0
  %2882 = vmatprep.subr.bf16.mxu0 0
  %2883 = vmatpush1.bf16.msra.mxu0 0
  %2884 = vmatprep.subr.bf16.mxu0 0
  %2885 = vmatpush1.bf16.msra.mxu0 0
  %2886 = vmatprep.subr.bf16.mxu0 0
  %2887 = vmatpush1.bf16.msra.mxu0 0
  %2888 = vmatprep.subr.bf16.mxu0 0
  %2889 = vmatpush1.bf16.msra.mxu0 0
  %2890 = vmatprep.subr.bf16.mxu0 0
  %2891 = vmatpush1.bf16.msra.mxu0 0
  %2892 = vmatprep.subr.bf16.mxu0 0
  %2893 = vmatpush1.bf16.msra.mxu0 0
  %2894 = vmatprep.subr.bf16.mxu0 0
  %2895 = vmatpush1.bf16.msra.mxu0 0
  %2896 = vmatprep.subr.bf16.mxu0 0
  %2897 = vmatpush1.bf16.msra.mxu0 0
  %2898 = vmatprep.subr.bf16.mxu0 0
  %2899 = vmatpush1.bf16.msra.mxu0 0
  %2900 = vmatprep.subr.bf16.mxu0 0
  %2901 = vmatpush1.bf16.msra.mxu0 0
  %2902 = vmatprep.mubr.bf16.mxu0 0
  %2903 = vmatmul.mubr.bf16.gmra.mrb[0].mxu0 %v77
  %v2904 = vpop.f32.mrb[0].mxu0
  %v2905 = vadd.f32 0.0, %v2904
  %v2906 = vpop.f32.mrb[0].mxu0
  %v2907 = vpop.f32.mrb[0].mxu0
  %v2908 = vadd.f32 0.0, %v2907
  %v2909 = vpop.f32.mrb[0].mxu0
  %2910 = vdwg.mxu0
  %v2919 = vunpack.c.l.b16 %v2838
  %v2920 = vunpack.c.l.b16 %v2839
  %v2921 = vunpack.c.l.b16 %v2840
  %v2922 = vunpack.c.l.b16 %v2841
  %v2923 = vunpack.c.l.b16 %v2842
  %v2924 = vunpack.c.l.b16 %v2843
  %v2925 = vunpack.c.l.b16 %v2844
  %v2926 = vunpack.c.l.b16 %v2845
  %v2927 = vpack.c.b16 %v2920, %v2919
  %v2928 = vpack.c.b16 %v2922, %v2921
  %v2929 = vpack.c.b16 %v2924, %v2923
  %v2930 = vpack.c.b16 %v2926, %v2925
  %2935 = vmatprep.subr.bf16.mxu0 0
  %2936 = vmatpush1.bf16.msra.mxu0 %v2927
  %2937 = vmatprep.subr.bf16.mxu0 0
  %2938 = vmatpush1.bf16.msra.mxu0 %v2928
  %2939 = vmatprep.subr.bf16.mxu0 0
  %2940 = vmatpush1.bf16.msra.mxu0 %v2929
  %2941 = vmatprep.subr.bf16.mxu0 0
  %2942 = vmatpush1.bf16.msra.mxu0 %v2930
  %2943 = vmatprep.subr.bf16.mxu0 0
  %2944 = vmatpush1.bf16.msra.mxu0 0
  %2945 = vmatprep.subr.bf16.mxu0 0
  %2946 = vmatpush1.bf16.msra.mxu0 0
  %2947 = vmatprep.subr.bf16.mxu0 0
  %2948 = vmatpush1.bf16.msra.mxu0 0
  %2949 = vmatprep.subr.bf16.mxu0 0
  %2950 = vmatpush1.bf16.msra.mxu0 0
  %2951 = vmatprep.subr.bf16.mxu0 0
  %2952 = vmatpush1.bf16.msra.mxu0 0
  %2953 = vmatprep.subr.bf16.mxu0 0
  %2954 = vmatpush1.bf16.msra.mxu0 0
  %2955 = vmatprep.subr.bf16.mxu0 0
  %2956 = vmatpush1.bf16.msra.mxu0 0
  %2957 = vmatprep.subr.bf16.mxu0 0
  %2958 = vmatpush1.bf16.msra.mxu0 0
  %2959 = vmatprep.subr.bf16.mxu0 0
  %2960 = vmatpush1.bf16.msra.mxu0 0
  %2961 = vmatprep.subr.bf16.mxu0 0
  %2962 = vmatpush1.bf16.msra.mxu0 0
  %2963 = vmatprep.subr.bf16.mxu0 0
  %2964 = vmatpush1.bf16.msra.mxu0 0
  %2965 = vmatprep.subr.bf16.mxu0 0
  %2966 = vmatpush1.bf16.msra.mxu0 0
  %2967 = vmatprep.mubr.bf16.mxu0 0
  %2968 = vmatmul.mubr.bf16.gmra.mrb[0].mxu0 %v77
  %v2969 = vpop.f32.mrb[0].mxu0
  %v2970 = vadd.f32 0.0, %v2969
  %v2971 = vpop.f32.mrb[0].mxu0
  %v2972 = vpop.f32.mrb[0].mxu0
  %v2973 = vadd.f32 0.0, %v2972
  %v2974 = vpop.f32.mrb[0].mxu0
  %2975 = vdwg.mxu0
  %s2976 = scalar_lea.vmem %s2, 768
  %v2977 = vld [vmem:[%s2976] sm:$0xf]
  %v2978 = vld [vmem:[%s2976 + $0x4] sm:$0xf]
  %v2979 = vld [vmem:[%s2976 + $0x8] sm:$0xf]
  %v2980 = vld [vmem:[%s2976 + $0xc] sm:$0xf]
  %v2981 = vld [vmem:[%s2976 + $0x10] sm:$0xf]
  %v2982 = vld [vmem:[%s2976 + $0x14] sm:$0xf]
  %v2983 = vld [vmem:[%s2976 + $0x18] sm:$0xf]
  %v2984 = vld [vmem:[%s2976 + $0x1c] sm:$0xf]
  %v2985 = vld [vmem:[%s2976 + $0x20] sm:$0xf]
  %v2986 = vld [vmem:[%s2976 + $0x24] sm:$0xf]
  %v2987 = vld [vmem:[%s2976 + $0x28] sm:$0xf]
  %v2988 = vld [vmem:[%s2976 + $0x2c] sm:$0xf]
  %v2989 = vld [vmem:[%s2976 + $0x30] sm:$0xf]
  %v2990 = vld [vmem:[%s2976 + $0x34] sm:$0xf]
  %v2991 = vld [vmem:[%s2976 + $0x38] sm:$0xf]
  %v2992 = vld [vmem:[%s2976 + $0x3c] sm:$0xf]
  %v3001 = vunpack.c.l.b16 %v2977
  %v3002 = vunpack.c.l.b16 %v2978
  %v3003 = vunpack.c.l.b16 %v2979
  %v3004 = vunpack.c.l.b16 %v2980
  %v3005 = vunpack.c.l.b16 %v2981
  %v3006 = vunpack.c.l.b16 %v2982
  %v3007 = vunpack.c.l.b16 %v2983
  %v3008 = vunpack.c.l.b16 %v2984
  %v3009 = vpack.c.b16 %v3002, %v3001
  %v3010 = vpack.c.b16 %v3004, %v3003
  %v3011 = vpack.c.b16 %v3006, %v3005
  %v3012 = vpack.c.b16 %v3008, %v3007
  %3017 = vmatprep.subr.bf16.mxu0 0
  %3018 = vmatpush1.bf16.msra.mxu0 %v3009
  %3019 = vmatprep.subr.bf16.mxu0 0
  %3020 = vmatpush1.bf16.msra.mxu0 %v3010
  %3021 = vmatprep.subr.bf16.mxu0 0
  %3022 = vmatpush1.bf16.msra.mxu0 %v3011
  %3023 = vmatprep.subr.bf16.mxu0 0
  %3024 = vmatpush1.bf16.msra.mxu0 %v3012
  %3025 = vmatprep.subr.bf16.mxu0 0
  %3026 = vmatpush1.bf16.msra.mxu0 0
  %3027 = vmatprep.subr.bf16.mxu0 0
  %3028 = vmatpush1.bf16.msra.mxu0 0
  %3029 = vmatprep.subr.bf16.mxu0 0
  %3030 = vmatpush1.bf16.msra.mxu0 0
  %3031 = vmatprep.subr.bf16.mxu0 0
  %3032 = vmatpush1.bf16.msra.mxu0 0
  %3033 = vmatprep.subr.bf16.mxu0 0
  %3034 = vmatpush1.bf16.msra.mxu0 0
  %3035 = vmatprep.subr.bf16.mxu0 0
  %3036 = vmatpush1.bf16.msra.mxu0 0
  %3037 = vmatprep.subr.bf16.mxu0 0
  %3038 = vmatpush1.bf16.msra.mxu0 0
  %3039 = vmatprep.subr.bf16.mxu0 0
  %3040 = vmatpush1.bf16.msra.mxu0 0
  %3041 = vmatprep.subr.bf16.mxu0 0
  %3042 = vmatpush1.bf16.msra.mxu0 0
  %3043 = vmatprep.subr.bf16.mxu0 0
  %3044 = vmatpush1.bf16.msra.mxu0 0
  %3045 = vmatprep.subr.bf16.mxu0 0
  %3046 = vmatpush1.bf16.msra.mxu0 0
  %3047 = vmatprep.subr.bf16.mxu0 0
  %3048 = vmatpush1.bf16.msra.mxu0 0
  %3049 = vmatprep.mubr.bf16.mxu0 0
  %3050 = vmatmul.mubr.bf16.gmra.mrb[0].mxu0 %v77
  %v3051 = vpop.f32.mrb[0].mxu0
  %v3052 = vadd.f32 0.0, %v3051
  %v3053 = vpop.f32.mrb[0].mxu0
  %v3054 = vpop.f32.mrb[0].mxu0
  %v3055 = vadd.f32 0.0, %v3054
  %v3056 = vpop.f32.mrb[0].mxu0
  %3057 = vdwg.mxu0
  %v3066 = vunpack.c.l.b16 %v2985
  %v3067 = vunpack.c.l.b16 %v2986
  %v3068 = vunpack.c.l.b16 %v2987
  %v3069 = vunpack.c.l.b16 %v2988
  %v3070 = vunpack.c.l.b16 %v2989
  %v3071 = vunpack.c.l.b16 %v2990
  %v3072 = vunpack.c.l.b16 %v2991
  %v3073 = vunpack.c.l.b16 %v2992
  %v3074 = vpack.c.b16 %v3067, %v3066
  %v3075 = vpack.c.b16 %v3069, %v3068
  %v3076 = vpack.c.b16 %v3071, %v3070
  %v3077 = vpack.c.b16 %v3073, %v3072
  %3082 = vmatprep.subr.bf16.mxu0 0
  %3083 = vmatpush1.bf16.msra.mxu0 %v3074
  %3084 = vmatprep.subr.bf16.mxu0 0
  %3085 = vmatpush1.bf16.msra.mxu0 %v3075
  %3086 = vmatprep.subr.bf16.mxu0 0
  %3087 = vmatpush1.bf16.msra.mxu0 %v3076
  %3088 = vmatprep.subr.bf16.mxu0 0
  %3089 = vmatpush1.bf16.msra.mxu0 %v3077
  %3090 = vmatprep.subr.bf16.mxu0 0
  %3091 = vmatpush1.bf16.msra.mxu0 0
  %3092 = vmatprep.subr.bf16.mxu0 0
  %3093 = vmatpush1.bf16.msra.mxu0 0
  %3094 = vmatprep.subr.bf16.mxu0 0
  %3095 = vmatpush1.bf16.msra.mxu0 0
  %3096 = vmatprep.subr.bf16.mxu0 0
  %3097 = vmatpush1.bf16.msra.mxu0 0
  %3098 = vmatprep.subr.bf16.mxu0 0
  %3099 = vmatpush1.bf16.msra.mxu0 0
  %3100 = vmatprep.subr.bf16.mxu0 0
  %3101 = vmatpush1.bf16.msra.mxu0 0
  %3102 = vmatprep.subr.bf16.mxu0 0
  %3103 = vmatpush1.bf16.msra.mxu0 0
  %3104 = vmatprep.subr.bf16.mxu0 0
  %3105 = vmatpush1.bf16.msra.mxu0 0
  %3106 = vmatprep.subr.bf16.mxu0 0
  %3107 = vmatpush1.bf16.msra.mxu0 0
  %3108 = vmatprep.subr.bf16.mxu0 0
  %3109 = vmatpush1.bf16.msra.mxu0 0
  %3110 = vmatprep.subr.bf16.mxu0 0
  %3111 = vmatpush1.bf16.msra.mxu0 0
  %3112 = vmatprep.subr.bf16.mxu0 0
  %3113 = vmatpush1.bf16.msra.mxu0 0
  %3114 = vmatprep.mubr.bf16.mxu0 0
  %3115 = vmatmul.mubr.bf16.gmra.mrb[0].mxu0 %v77
  %v3116 = vpop.f32.mrb[0].mxu0
  %v3117 = vadd.f32 0.0, %v3116
  %v3118 = vpop.f32.mrb[0].mxu0
  %v3119 = vpop.f32.mrb[0].mxu0
  %v3120 = vadd.f32 0.0, %v3119
  %v3121 = vpop.f32.mrb[0].mxu0
  %3122 = vdwg.mxu0
  %s3123 = scalar_lea.vmem %s2, 832
  %v3124 = vld [vmem:[%s3123] sm:$0xf]
  %v3125 = vld [vmem:[%s3123 + $0x4] sm:$0xf]
  %v3126 = vld [vmem:[%s3123 + $0x8] sm:$0xf]
  %v3127 = vld [vmem:[%s3123 + $0xc] sm:$0xf]
  %v3128 = vld [vmem:[%s3123 + $0x10] sm:$0xf]
  %v3129 = vld [vmem:[%s3123 + $0x14] sm:$0xf]
  %v3130 = vld [vmem:[%s3123 + $0x18] sm:$0xf]
  %v3131 = vld [vmem:[%s3123 + $0x1c] sm:$0xf]
  %v3132 = vld [vmem:[%s3123 + $0x20] sm:$0xf]
  %v3133 = vld [vmem:[%s3123 + $0x24] sm:$0xf]
  %v3134 = vld [vmem:[%s3123 + $0x28] sm:$0xf]
  %v3135 = vld [vmem:[%s3123 + $0x2c] sm:$0xf]
  %v3136 = vld [vmem:[%s3123 + $0x30] sm:$0xf]
  %v3137 = vld [vmem:[%s3123 + $0x34] sm:$0xf]
  %v3138 = vld [vmem:[%s3123 + $0x38] sm:$0xf]
  %v3139 = vld [vmem:[%s3123 + $0x3c] sm:$0xf]
  %v3148 = vunpack.c.l.b16 %v3124
  %v3149 = vunpack.c.l.b16 %v3125
  %v3150 = vunpack.c.l.b16 %v3126
  %v3151 = vunpack.c.l.b16 %v3127
  %v3152 = vunpack.c.l.b16 %v3128
  %v3153 = vunpack.c.l.b16 %v3129
  %v3154 = vunpack.c.l.b16 %v3130
  %v3155 = vunpack.c.l.b16 %v3131
  %v3156 = vpack.c.b16 %v3149, %v3148
  %v3157 = vpack.c.b16 %v3151, %v3150
  %v3158 = vpack.c.b16 %v3153, %v3152
  %v3159 = vpack.c.b16 %v3155, %v3154
  %3164 = vmatprep.subr.bf16.mxu0 0
  %3165 = vmatpush1.bf16.msra.mxu0 %v3156
  %3166 = vmatprep.subr.bf16.mxu0 0
  %3167 = vmatpush1.bf16.msra.mxu0 %v3157
  %3168 = vmatprep.subr.bf16.mxu0 0
  %3169 = vmatpush1.bf16.msra.mxu0 %v3158
  %3170 = vmatprep.subr.bf16.mxu0 0
  %3171 = vmatpush1.bf16.msra.mxu0 %v3159
  %3172 = vmatprep.subr.bf16.mxu0 0
  %3173 = vmatpush1.bf16.msra.mxu0 0
  %3174 = vmatprep.subr.bf16.mxu0 0
  %3175 = vmatpush1.bf16.msra.mxu0 0
  %3176 = vmatprep.subr.bf16.mxu0 0
  %3177 = vmatpush1.bf16.msra.mxu0 0
  %3178 = vmatprep.subr.bf16.mxu0 0
  %3179 = vmatpush1.bf16.msra.mxu0 0
  %3180 = vmatprep.subr.bf16.mxu0 0
  %3181 = vmatpush1.bf16.msra.mxu0 0
  %3182 = vmatprep.subr.bf16.mxu0 0
  %3183 = vmatpush1.bf16.msra.mxu0 0
  %3184 = vmatprep.subr.bf16.mxu0 0
  %3185 = vmatpush1.bf16.msra.mxu0 0
  %3186 = vmatprep.subr.bf16.mxu0 0
  %3187 = vmatpush1.bf16.msra.mxu0 0
  %3188 = vmatprep.subr.bf16.mxu0 0
  %3189 = vmatpush1.bf16.msra.mxu0 0
  %3190 = vmatprep.subr.bf16.mxu0 0
  %3191 = vmatpush1.bf16.msra.mxu0 0
  %3192 = vmatprep.subr.bf16.mxu0 0
  %3193 = vmatpush1.bf16.msra.mxu0 0
  %3194 = vmatprep.subr.bf16.mxu0 0
  %3195 = vmatpush1.bf16.msra.mxu0 0
  %3196 = vmatprep.mubr.bf16.mxu0 0
  %3197 = vmatmul.mubr.bf16.gmra.mrb[0].mxu0 %v77
  %v3198 = vpop.f32.mrb[0].mxu0
  %v3199 = vadd.f32 0.0, %v3198
  %v3200 = vpop.f32.mrb[0].mxu0
  %v3201 = vpop.f32.mrb[0].mxu0
  %v3202 = vadd.f32 0.0, %v3201
  %v3203 = vpop.f32.mrb[0].mxu0
  %3204 = vdwg.mxu0
  %v3213 = vunpack.c.l.b16 %v3132
  %v3214 = vunpack.c.l.b16 %v3133
  %v3215 = vunpack.c.l.b16 %v3134
  %v3216 = vunpack.c.l.b16 %v3135
  %v3217 = vunpack.c.l.b16 %v3136
  %v3218 = vunpack.c.l.b16 %v3137
  %v3219 = vunpack.c.l.b16 %v3138
  %v3220 = vunpack.c.l.b16 %v3139
  %v3221 = vpack.c.b16 %v3214, %v3213
  %v3222 = vpack.c.b16 %v3216, %v3215
  %v3223 = vpack.c.b16 %v3218, %v3217
  %v3224 = vpack.c.b16 %v3220, %v3219
  %3229 = vmatprep.subr.bf16.mxu0 0
  %3230 = vmatpush1.bf16.msra.mxu0 %v3221
  %3231 = vmatprep.subr.bf16.mxu0 0
  %3232 = vmatpush1.bf16.msra.mxu0 %v3222
  %3233 = vmatprep.subr.bf16.mxu0 0
  %3234 = vmatpush1.bf16.msra.mxu0 %v3223
  %3235 = vmatprep.subr.bf16.mxu0 0
  %3236 = vmatpush1.bf16.msra.mxu0 %v3224
  %3237 = vmatprep.subr.bf16.mxu0 0
  %3238 = vmatpush1.bf16.msra.mxu0 0
  %3239 = vmatprep.subr.bf16.mxu0 0
  %3240 = vmatpush1.bf16.msra.mxu0 0
  %3241 = vmatprep.subr.bf16.mxu0 0
  %3242 = vmatpush1.bf16.msra.mxu0 0
  %3243 = vmatprep.subr.bf16.mxu0 0
  %3244 = vmatpush1.bf16.msra.mxu0 0
  %3245 = vmatprep.subr.bf16.mxu0 0
  %3246 = vmatpush1.bf16.msra.mxu0 0
  %3247 = vmatprep.subr.bf16.mxu0 0
  %3248 = vmatpush1.bf16.msra.mxu0 0
  %3249 = vmatprep.subr.bf16.mxu0 0
  %3250 = vmatpush1.bf16.msra.mxu0 0
  %3251 = vmatprep.subr.bf16.mxu0 0
  %3252 = vmatpush1.bf16.msra.mxu0 0
  %3253 = vmatprep.subr.bf16.mxu0 0
  %3254 = vmatpush1.bf16.msra.mxu0 0
  %3255 = vmatprep.subr.bf16.mxu0 0
  %3256 = vmatpush1.bf16.msra.mxu0 0
  %3257 = vmatprep.subr.bf16.mxu0 0
  %3258 = vmatpush1.bf16.msra.mxu0 0
  %3259 = vmatprep.subr.bf16.mxu0 0
  %3260 = vmatpush1.bf16.msra.mxu0 0
  %3261 = vmatprep.mubr.bf16.mxu0 0
  %3262 = vmatmul.mubr.bf16.gmra.mrb[0].mxu0 %v77
  %v3263 = vpop.f32.mrb[0].mxu0
  %v3264 = vadd.f32 0.0, %v3263
  %v3265 = vpop.f32.mrb[0].mxu0
  %v3266 = vpop.f32.mrb[0].mxu0
  %v3267 = vadd.f32 0.0, %v3266
  %v3268 = vpop.f32.mrb[0].mxu0
  %3269 = vdwg.mxu0
  %s3270 = scalar_lea.vmem %s2, 896
  %v3271 = vld [vmem:[%s3270] sm:$0xf]
  %v3272 = vld [vmem:[%s3270 + $0x4] sm:$0xf]
  %v3273 = vld [vmem:[%s3270 + $0x8] sm:$0xf]
  %v3274 = vld [vmem:[%s3270 + $0xc] sm:$0xf]
  %v3275 = vld [vmem:[%s3270 + $0x10] sm:$0xf]
  %v3276 = vld [vmem:[%s3270 + $0x14] sm:$0xf]
  %v3277 = vld [vmem:[%s3270 + $0x18] sm:$0xf]
  %v3278 = vld [vmem:[%s3270 + $0x1c] sm:$0xf]
  %v3279 = vld [vmem:[%s3270 + $0x20] sm:$0xf]
  %v3280 = vld [vmem:[%s3270 + $0x24] sm:$0xf]
  %v3281 = vld [vmem:[%s3270 + $0x28] sm:$0xf]
  %v3282 = vld [vmem:[%s3270 + $0x2c] sm:$0xf]
  %v3283 = vld [vmem:[%s3270 + $0x30] sm:$0xf]
  %v3284 = vld [vmem:[%s3270 + $0x34] sm:$0xf]
  %v3285 = vld [vmem:[%s3270 + $0x38] sm:$0xf]
  %v3286 = vld [vmem:[%s3270 + $0x3c] sm:$0xf]
  %v3295 = vunpack.c.l.b16 %v3271
  %v3296 = vunpack.c.l.b16 %v3272
  %v3297 = vunpack.c.l.b16 %v3273
  %v3298 = vunpack.c.l.b16 %v3274
  %v3299 = vunpack.c.l.b16 %v3275
  %v3300 = vunpack.c.l.b16 %v3276
  %v3301 = vunpack.c.l.b16 %v3277
  %v3302 = vunpack.c.l.b16 %v3278
  %v3303 = vpack.c.b16 %v3296, %v3295
  %v3304 = vpack.c.b16 %v3298, %v3297
  %v3305 = vpack.c.b16 %v3300, %v3299
  %v3306 = vpack.c.b16 %v3302, %v3301
  %3311 = vmatprep.subr.bf16.mxu0 0
  %3312 = vmatpush1.bf16.msra.mxu0 %v3303
  %3313 = vmatprep.subr.bf16.mxu0 0
  %3314 = vmatpush1.bf16.msra.mxu0 %v3304
  %3315 = vmatprep.subr.bf16.mxu0 0
  %3316 = vmatpush1.bf16.msra.mxu0 %v3305
  %3317 = vmatprep.subr.bf16.mxu0 0
  %3318 = vmatpush1.bf16.msra.mxu0 %v3306
  %3319 = vmatprep.subr.bf16.mxu0 0
  %3320 = vmatpush1.bf16.msra.mxu0 0
  %3321 = vmatprep.subr.bf16.mxu0 0
  %3322 = vmatpush1.bf16.msra.mxu0 0
  %3323 = vmatprep.subr.bf16.mxu0 0
  %3324 = vmatpush1.bf16.msra.mxu0 0
  %3325 = vmatprep.subr.bf16.mxu0 0
  %3326 = vmatpush1.bf16.msra.mxu0 0
  %3327 = vmatprep.subr.bf16.mxu0 0
  %3328 = vmatpush1.bf16.msra.mxu0 0
  %3329 = vmatprep.subr.bf16.mxu0 0
  %3330 = vmatpush1.bf16.msra.mxu0 0
  %3331 = vmatprep.subr.bf16.mxu0 0
  %3332 = vmatpush1.bf16.msra.mxu0 0
  %3333 = vmatprep.subr.bf16.mxu0 0
  %3334 = vmatpush1.bf16.msra.mxu0 0
  %3335 = vmatprep.subr.bf16.mxu0 0
  %3336 = vmatpush1.bf16.msra.mxu0 0
  %3337 = vmatprep.subr.bf16.mxu0 0
  %3338 = vmatpush1.bf16.msra.mxu0 0
  %3339 = vmatprep.subr.bf16.mxu0 0
  %3340 = vmatpush1.bf16.msra.mxu0 0
  %3341 = vmatprep.subr.bf16.mxu0 0
  %3342 = vmatpush1.bf16.msra.mxu0 0
  %3343 = vmatprep.mubr.bf16.mxu0 0
  %3344 = vmatmul.mubr.bf16.gmra.mrb[0].mxu0 %v77
  %v3345 = vpop.f32.mrb[0].mxu0
  %v3346 = vadd.f32 0.0, %v3345
  %v3347 = vpop.f32.mrb[0].mxu0
  %v3348 = vpop.f32.mrb[0].mxu0
  %v3349 = vadd.f32 0.0, %v3348
  %v3350 = vpop.f32.mrb[0].mxu0
  %3351 = vdwg.mxu0
  %v3360 = vunpack.c.l.b16 %v3279
  %v3361 = vunpack.c.l.b16 %v3280
  %v3362 = vunpack.c.l.b16 %v3281
  %v3363 = vunpack.c.l.b16 %v3282
  %v3364 = vunpack.c.l.b16 %v3283
  %v3365 = vunpack.c.l.b16 %v3284
  %v3366 = vunpack.c.l.b16 %v3285
  %v3367 = vunpack.c.l.b16 %v3286
  %v3368 = vpack.c.b16 %v3361, %v3360
  %v3369 = vpack.c.b16 %v3363, %v3362
  %v3370 = vpack.c.b16 %v3365, %v3364
  %v3371 = vpack.c.b16 %v3367, %v3366
  %3376 = vmatprep.subr.bf16.mxu0 0
  %3377 = vmatpush1.bf16.msra.mxu0 %v3368
  %3378 = vmatprep.subr.bf16.mxu0 0
  %3379 = vmatpush1.bf16.msra.mxu0 %v3369
  %3380 = vmatprep.subr.bf16.mxu0 0
  %3381 = vmatpush1.bf16.msra.mxu0 %v3370
  %3382 = vmatprep.subr.bf16.mxu0 0
  %3383 = vmatpush1.bf16.msra.mxu0 %v3371
  %3384 = vmatprep.subr.bf16.mxu0 0
  %3385 = vmatpush1.bf16.msra.mxu0 0
  %3386 = vmatprep.subr.bf16.mxu0 0
  %3387 = vmatpush1.bf16.msra.mxu0 0
  %3388 = vmatprep.subr.bf16.mxu0 0
  %3389 = vmatpush1.bf16.msra.mxu0 0
  %3390 = vmatprep.subr.bf16.mxu0 0
  %3391 = vmatpush1.bf16.msra.mxu0 0
  %3392 = vmatprep.subr.bf16.mxu0 0
  %3393 = vmatpush1.bf16.msra.mxu0 0
  %3394 = vmatprep.subr.bf16.mxu0 0
  %3395 = vmatpush1.bf16.msra.mxu0 0
  %3396 = vmatprep.subr.bf16.mxu0 0
  %3397 = vmatpush1.bf16.msra.mxu0 0
  %3398 = vmatprep.subr.bf16.mxu0 0
  %3399 = vmatpush1.bf16.msra.mxu0 0
  %3400 = vmatprep.subr.bf16.mxu0 0
  %3401 = vmatpush1.bf16.msra.mxu0 0
  %3402 = vmatprep.subr.bf16.mxu0 0
  %3403 = vmatpush1.bf16.msra.mxu0 0
  %3404 = vmatprep.subr.bf16.mxu0 0
  %3405 = vmatpush1.bf16.msra.mxu0 0
  %3406 = vmatprep.subr.bf16.mxu0 0
  %3407 = vmatpush1.bf16.msra.mxu0 0
  %3408 = vmatprep.mubr.bf16.mxu0 0
  %3409 = vmatmul.mubr.bf16.gmra.mrb[0].mxu0 %v77
  %v3410 = vpop.f32.mrb[0].mxu0
  %v3411 = vadd.f32 0.0, %v3410
  %v3412 = vpop.f32.mrb[0].mxu0
  %v3413 = vpop.f32.mrb[0].mxu0
  %v3414 = vadd.f32 0.0, %v3413
  %v3415 = vpop.f32.mrb[0].mxu0
  %3416 = vdwg.mxu0
  %v3417 = vld [vmem:[%s6] sm:$0xff]
  %v3418 = vld [vmem:[%s6 + $0x8] sm:$0xff]
  %v3419 = vld [vmem:[%s6 + $0x10] sm:$0xff]
  %v3420 = vld [vmem:[%s6 + $0x18] sm:$0xff]
  %v3421 = vld [vmem:[%s7] sm:$0xff]
  %v3422 = vld [vmem:[%s7 + $0x8] sm:$0xff]
  %v3423 = vld [vmem:[%s7 + $0x10] sm:$0xff]
  %v3424 = vld [vmem:[%s7 + $0x18] sm:$0xff]
  %s3425 = scalar_lea.vmem %s4, 4
  %v3426 = vld [vmem:[%s3425] sm:$0x1]
  %v3427 = vld [vmem:[%s3425 + $0x1] sm:$0x1]
  %v3428 = vadd.s32 %v776, 24
  %vm3429 = vcmp.le.s32.totalorder %v778, %v3428
  %v3430 = vsel %vm3429, 0.0, -1e+30
  %3431 = vst.msk [vmem:[#allocation2] sm:$0xff] %vm781, %v3052
  %3432 = vst.msk [vmem:[#allocation2 + $0x20] sm:$0xff] %vm781, %v3117
  %3433 = vst.msk [vmem:[#allocation3] sm:$0xff] %vm781, %v3199
  %3434 = vst.msk [vmem:[#allocation3 + $0x20] sm:$0xff] %vm781, %v3264
  %3435 = vst.msk [vmem:[#allocation4] sm:$0xff] %vm781, %v3346
  %3436 = vst.msk [vmem:[#allocation4 + $0x20] sm:$0xff] %vm781, %v3411
  %v3437 = vld [vmem:[#allocation2] sm:$0xff]
  %v3438 = vld [vmem:[#allocation2 + $0x8] sm:$0xff]
  %v3439 = vld [vmem:[#allocation2 + $0x10] sm:$0xff]
  %v3440 = vld [vmem:[#allocation2 + $0x18] sm:$0xff]
  %v3441 = vld [vmem:[#allocation2 + $0x20] sm:$0xff]
  %v3442 = vld [vmem:[#allocation2 + $0x28] sm:$0xff]
  %v3443 = vld [vmem:[#allocation2 + $0x30] sm:$0xff]
  %v3444 = vld [vmem:[#allocation2 + $0x38] sm:$0xff]
  %v3445 = vld [vmem:[#allocation3] sm:$0xff]
  %v3446 = vld [vmem:[#allocation3 + $0x8] sm:$0xff]
  %v3447 = vld [vmem:[#allocation3 + $0x10] sm:$0xff]
  %v3448 = vld [vmem:[#allocation3 + $0x18] sm:$0xff]
  %v3449 = vld [vmem:[#allocation3 + $0x20] sm:$0xff]
  %v3450 = vld [vmem:[#allocation3 + $0x28] sm:$0xff]
  %v3451 = vld [vmem:[#allocation3 + $0x30] sm:$0xff]
  %v3452 = vld [vmem:[#allocation3 + $0x38] sm:$0xff]
  %v3453 = vld [vmem:[#allocation4] sm:$0xff]
  %v3454 = vld [vmem:[#allocation4 + $0x8] sm:$0xff]
  %v3455 = vld [vmem:[#allocation4 + $0x10] sm:$0xff]
  %v3456 = vld [vmem:[#allocation4 + $0x18] sm:$0xff]
  %v3457 = vld [vmem:[#allocation4 + $0x20] sm:$0xff]
  %v3458 = vld [vmem:[#allocation4 + $0x28] sm:$0xff]
  %v3459 = vld [vmem:[#allocation4 + $0x30] sm:$0xff]
  %v3460 = vld [vmem:[#allocation4 + $0x38] sm:$0xff]
  %v3461 = vmul.f32 %v2758, %v33
  %v3462 = vmul.f32 %v2823, %v33
  %v3463 = vmul.f32 %v2905, %v34
  %v3464 = vmul.f32 %v2970, %v34
  %v3465 = vadd.f32 %v3461, %v3463
  %v3466 = vadd.f32 %v3462, %v3464
  %v3467 = vmul.f32 %v3437, %v3417
  %v3468 = vmul.f32 %v3438, %v3418
  %v3469 = vmul.f32 %v3439, %v3419
  %v3470 = vmul.f32 %v3440, %v3420
  %v3471 = vmul.f32 %v3441, %v3417
  %v3472 = vmul.f32 %v3442, %v3418
  %v3473 = vmul.f32 %v3443, %v3419
  %v3474 = vmul.f32 %v3444, %v3420
  %v3475 = vmul.f32 %v3445, %v3421
  %v3476 = vmul.f32 %v3446, %v3422
  %v3477 = vmul.f32 %v3447, %v3423
  %v3478 = vmul.f32 %v3448, %v3424
  %v3479 = vmul.f32 %v3449, %v3421
  %v3480 = vmul.f32 %v3450, %v3422
  %v3481 = vmul.f32 %v3451, %v3423
  %v3482 = vmul.f32 %v3452, %v3424
  %v3483 = vadd.f32 %v3467, %v3475
  %v3484 = vadd.f32 %v3468, %v3476
  %v3485 = vadd.f32 %v3469, %v3477
  %v3486 = vadd.f32 %v3470, %v3478
  %v3487 = vadd.f32 %v3471, %v3479
  %v3488 = vadd.f32 %v3472, %v3480
  %v3489 = vadd.f32 %v3473, %v3481
  %v3490 = vadd.f32 %v3474, %v3482
  %v3491 = vpack.c.bf16 %v3465, %v3465
  %v3492 = vpack.c.bf16 %v3466, %v3466
  %v3493 = vpack.c.bf16 %v3484, %v3483
  %v3494 = vpack.c.bf16 %v3486, %v3485
  %v3495 = vpack.c.bf16 %v3488, %v3487
  %v3496 = vpack.c.bf16 %v3490, %v3489
  %v3498 = vsel %vm781, %v3491, 0
  %v3501 = vsel %vm781, %v3493, 0
  %v3504 = vsel %vm781, %v3494, 0
  %3506 = vmatprep.subr.bf16.mxu0 0
  %3507 = vmatpush1.bf16.xpose.msra.mxu0 %v3501
  %3508 = vmatprep.subr.bf16.mxu0 0
  %3509 = vmatpush1.bf16.xpose.msra.mxu0 %v3504
  %3510 = vmatprep.subr.bf16.mxu0 0
  %3511 = vmatpush1.bf16.xpose.msra.mxu0 0
  %3512 = vmatprep.subr.bf16.mxu0 0
  %3513 = vmatpush1.bf16.xpose.msra.mxu0 0
  %3514 = vmatprep.subr.bf16.mxu0 0
  %3515 = vmatpush1.bf16.xpose.msra.mxu0 0
  %3516 = vmatprep.subr.bf16.mxu0 0
  %3517 = vmatpush1.bf16.xpose.msra.mxu0 0
  %3518 = vmatprep.subr.bf16.mxu0 0
  %3519 = vmatpush1.bf16.xpose.msra.mxu0 0
  %3520 = vmatprep.subr.bf16.mxu0 0
  %3521 = vmatpush1.bf16.xpose.msra.mxu0 0
  %3522 = vmatprep.subr.bf16.mxu0 0
  %3523 = vmatpush1.bf16.xpose.msra.mxu0 0
  %3524 = vmatprep.subr.bf16.mxu0 0
  %3525 = vmatpush1.bf16.xpose.msra.mxu0 0
  %3526 = vmatprep.subr.bf16.mxu0 0
  %3527 = vmatpush1.bf16.xpose.msra.mxu0 0
  %3528 = vmatprep.subr.bf16.mxu0 0
  %3529 = vmatpush1.bf16.xpose.msra.mxu0 0
  %3530 = vmatprep.subr.bf16.mxu0 0
  %3531 = vmatpush1.bf16.xpose.msra.mxu0 0
  %3532 = vmatprep.subr.bf16.mxu0 0
  %3533 = vmatpush1.bf16.xpose.msra.mxu0 0
  %3534 = vmatprep.subr.bf16.mxu0 0
  %3535 = vmatpush1.bf16.xpose.msra.mxu0 0
  %3536 = vmatprep.subr.bf16.mxu0 0
  %3537 = vmatpush1.bf16.xpose.msra.mxu0 0
  %3538 = vmatprep.mubr.bf16.mxu0 0
  %3539 = vmatmul.mubr.bf16.gmra.mrb[0].mxu0 %v3498
  %v3540 = vpop.f32.mrb[0].mxu0
  %v3541 = vadd.f32 0.0, %v3540
  %v3542 = vpop.f32.mrb[0].mxu0
  %v3543 = vpop.f32.mrb[0].mxu0
  %v3544 = vpop.f32.mrb[0].mxu0
  %3545 = vdwg.mxu0
  %v3547 = vsel %vm781, %v3492, 0
  %v3550 = vsel %vm781, %v3495, 0
  %v3553 = vsel %vm781, %v3496, 0
  %3555 = vmatprep.subr.bf16.mxu0 0
  %3556 = vmatpush1.bf16.xpose.msra.mxu0 %v3550
  %3557 = vmatprep.subr.bf16.mxu0 0
  %3558 = vmatpush1.bf16.xpose.msra.mxu0 %v3553
  %3559 = vmatprep.subr.bf16.mxu0 0
  %3560 = vmatpush1.bf16.xpose.msra.mxu0 0
  %3561 = vmatprep.subr.bf16.mxu0 0
  %3562 = vmatpush1.bf16.xpose.msra.mxu0 0
  %3563 = vmatprep.subr.bf16.mxu0 0
  %3564 = vmatpush1.bf16.xpose.msra.mxu0 0
  %3565 = vmatprep.subr.bf16.mxu0 0
  %3566 = vmatpush1.bf16.xpose.msra.mxu0 0
  %3567 = vmatprep.subr.bf16.mxu0 0
  %3568 = vmatpush1.bf16.xpose.msra.mxu0 0
  %3569 = vmatprep.subr.bf16.mxu0 0
  %3570 = vmatpush1.bf16.xpose.msra.mxu0 0
  %3571 = vmatprep.subr.bf16.mxu0 0
  %3572 = vmatpush1.bf16.xpose.msra.mxu0 0
  %3573 = vmatprep.subr.bf16.mxu0 0
  %3574 = vmatpush1.bf16.xpose.msra.mxu0 0
  %3575 = vmatprep.subr.bf16.mxu0 0
  %3576 = vmatpush1.bf16.xpose.msra.mxu0 0
  %3577 = vmatprep.subr.bf16.mxu0 0
  %3578 = vmatpush1.bf16.xpose.msra.mxu0 0
  %3579 = vmatprep.subr.bf16.mxu0 0
  %3580 = vmatpush1.bf16.xpose.msra.mxu0 0
  %3581 = vmatprep.subr.bf16.mxu0 0
  %3582 = vmatpush1.bf16.xpose.msra.mxu0 0
  %3583 = vmatprep.subr.bf16.mxu0 0
  %3584 = vmatpush1.bf16.xpose.msra.mxu0 0
  %3585 = vmatprep.subr.bf16.mxu0 0
  %3586 = vmatpush1.bf16.xpose.msra.mxu0 0
  %3587 = vmatprep.mubr.bf16.mxu0 0
  %3588 = vmatmul.mubr.bf16.gmra.mrb[0].mxu0 %v3547
  %v3589 = vpop.f32.mrb[0].mxu0
  %v3590 = vadd.f32 0.0, %v3589
  %v3591 = vpop.f32.mrb[0].mxu0
  %v3592 = vpop.f32.mrb[0].mxu0
  %v3593 = vpop.f32.mrb[0].mxu0
  %3594 = vdwg.mxu0
  %v3595 = vmul.f32 %v3541, 0.17677669
  %v3596 = vmul.f32 %v3590, 0.17677669
  %v3597 = vadd.f32 %v3595, %v3430
  %v3598 = vadd.f32 %v3596, %v3430
  %v3599 = vsel %vm781, %v3597, -inf
  %3600 = vmax.xlane.f32.xlu0 %v3599
  %v3601 = vpop.xlane.xlu0 %3600
  %v3602 = vsel %vm781, %v3598, -inf
  %3603 = vmax.xlane.f32.xlu0 %v3602
  %v3604 = vpop.xlane.xlu0 %3603
  %v3605 = vsub.f32 %v3597, %v3601
  %v3606 = vsub.f32 %v3598, %v3604
  %v3607 = vmul.f32 %v3605, 1.442695
  %v3608 = vpow.pop %v3607
  %v3609 = vmul.f32 %v3606, 1.442695
  %v3610 = vpow.pop %v3609
  %v3611 = vsel %vm781, %v3608, 0.0
  %3612 = vadd.xlane.f32.xlu0 %v3611
  %v3613 = vpop.xlane.xlu0 %3612
  %v3614 = vsel %vm781, %v3610, 0.0
  %3615 = vadd.xlane.f32.xlu0 %v3614
  %v3616 = vpop.xlane.xlu0 %3615
  %v3617 = vpack.c.bf16 %v3608, %v3608
  %v3618 = vpack.c.bf16 %v3610, %v3610
  %v3619 = vpack.c.bf16 %v3454, %v3453
  %v3620 = vpack.c.bf16 %v3456, %v3455
  %v3621 = vpack.c.bf16 %v3458, %v3457
  %v3622 = vpack.c.bf16 %v3460, %v3459
  %v3624 = vsel %vm781, %v3617, 0
  %3626 = vmatprep.subr.bf16.mxu0 0
  %3627 = vmatpush1.bf16.msra.mxu0 %v3619
  %3628 = vmatprep.subr.bf16.mxu0 0
  %3629 = vmatpush1.bf16.msra.mxu0 %v3620
  %3630 = vmatprep.subr.bf16.mxu0 0
  %3631 = vmatpush1.bf16.msra.mxu0 0
  %3632 = vmatprep.subr.bf16.mxu0 0
  %3633 = vmatpush1.bf16.msra.mxu0 0
  %3634 = vmatprep.subr.bf16.mxu0 0
  %3635 = vmatpush1.bf16.msra.mxu0 0
  %3636 = vmatprep.subr.bf16.mxu0 0
  %3637 = vmatpush1.bf16.msra.mxu0 0
  %3638 = vmatprep.subr.bf16.mxu0 0
  %3639 = vmatpush1.bf16.msra.mxu0 0
  %3640 = vmatprep.subr.bf16.mxu0 0
  %3641 = vmatpush1.bf16.msra.mxu0 0
  %3642 = vmatprep.subr.bf16.mxu0 0
  %3643 = vmatpush1.bf16.msra.mxu0 0
  %3644 = vmatprep.subr.bf16.mxu0 0
  %3645 = vmatpush1.bf16.msra.mxu0 0
  %3646 = vmatprep.subr.bf16.mxu0 0
  %3647 = vmatpush1.bf16.msra.mxu0 0
  %3648 = vmatprep.subr.bf16.mxu0 0
  %3649 = vmatpush1.bf16.msra.mxu0 0
  %3650 = vmatprep.subr.bf16.mxu0 0
  %3651 = vmatpush1.bf16.msra.mxu0 0
  %3652 = vmatprep.subr.bf16.mxu0 0
  %3653 = vmatpush1.bf16.msra.mxu0 0
  %3654 = vmatprep.subr.bf16.mxu0 0
  %3655 = vmatpush1.bf16.msra.mxu0 0
  %3656 = vmatprep.subr.bf16.mxu0 0
  %3657 = vmatpush1.bf16.msra.mxu0 0
  %3658 = vmatprep.mubr.bf16.mxu0 0
  %3659 = vmatmul.mubr.bf16.gmra.mrb[0].mxu0 %v3624
  %v3660 = vpop.f32.mrb[0].mxu0
  %v3661 = vadd.f32 0.0, %v3660
  %v3662 = vpop.f32.mrb[0].mxu0
  %v3663 = vpop.f32.mrb[0].mxu0
  %v3664 = vpop.f32.mrb[0].mxu0
  %3665 = vdwg.mxu0
  %v3667 = vsel %vm781, %v3618, 0
  %3669 = vmatprep.subr.bf16.mxu0 0
  %3670 = vmatpush1.bf16.msra.mxu0 %v3621
  %3671 = vmatprep.subr.bf16.mxu0 0
  %3672 = vmatpush1.bf16.msra.mxu0 %v3622
  %3673 = vmatprep.subr.bf16.mxu0 0
  %3674 = vmatpush1.bf16.msra.mxu0 0
  %3675 = vmatprep.subr.bf16.mxu0 0
  %3676 = vmatpush1.bf16.msra.mxu0 0
  %3677 = vmatprep.subr.bf16.mxu0 0
  %3678 = vmatpush1.bf16.msra.mxu0 0
  %3679 = vmatprep.subr.bf16.mxu0 0
  %3680 = vmatpush1.bf16.msra.mxu0 0
  %3681 = vmatprep.subr.bf16.mxu0 0
  %3682 = vmatpush1.bf16.msra.mxu0 0
  %3683 = vmatprep.subr.bf16.mxu0 0
  %3684 = vmatpush1.bf16.msra.mxu0 0
  %3685 = vmatprep.subr.bf16.mxu0 0
  %3686 = vmatpush1.bf16.msra.mxu0 0
  %3687 = vmatprep.subr.bf16.mxu0 0
  %3688 = vmatpush1.bf16.msra.mxu0 0
  %3689 = vmatprep.subr.bf16.mxu0 0
  %3690 = vmatpush1.bf16.msra.mxu0 0
  %3691 = vmatprep.subr.bf16.mxu0 0
  %3692 = vmatpush1.bf16.msra.mxu0 0
  %3693 = vmatprep.subr.bf16.mxu0 0
  %3694 = vmatpush1.bf16.msra.mxu0 0
  %3695 = vmatprep.subr.bf16.mxu0 0
  %3696 = vmatpush1.bf16.msra.mxu0 0
  %3697 = vmatprep.subr.bf16.mxu0 0
  %3698 = vmatpush1.bf16.msra.mxu0 0
  %3699 = vmatprep.subr.bf16.mxu0 0
  %3700 = vmatpush1.bf16.msra.mxu0 0
  %3701 = vmatprep.mubr.bf16.mxu0 0
  %3702 = vmatmul.mubr.bf16.gmra.mrb[0].mxu0 %v3667
  %v3703 = vpop.f32.mrb[0].mxu0
  %v3704 = vadd.f32 0.0, %v3703
  %v3705 = vpop.f32.mrb[0].mxu0
  %v3706 = vpop.f32.mrb[0].mxu0
  %v3707 = vpop.f32.mrb[0].mxu0
  %3708 = vdwg.mxu0
  %v3709 = vrcp.pop %v3613
  %v3710 = vrcp.pop %v3616
  %v3711 = vmul.f32 %v3661, %v3709
  %v3712 = vmul.f32 %v3704, %v3710
  %v3713 = vmul.f32 %v3711, %v3711
  %v3714 = vmul.f32 %v3712, %v3712
  %v3715 = vsel %vm781, %v3713, 0.0
  %3716 = vadd.xlane.f32.xlu0 %v3715
  %v3717 = vpop.xlane.xlu0 %3716
  %v3718 = vsel %vm781, %v3714, 0.0
  %3719 = vadd.xlane.f32.xlu0 %v3718
  %v3720 = vpop.xlane.xlu0 %3719
  %v3721 = vadd.f32 %v3717, %v3720
  %v3722 = vmul.f32 %v3721, %v1047
  %v3723 = vadd.f32 %v3722, 1e-05
  %v3724 = vrsqrt.pop %v3723
  %v3725 = vmul.f32 %v3711, %v3724
  %v3726 = vmul.f32 %v3712, %v3724
  %v3729 = vlaneseq
  %v3730 = vshrl.u32 %v3729, 7
  %v3731 = vsub.s32 0, %v3730
  %v3732 = vrot.slane %v3426, %v3731
  %v3733 = vlaneseq
  %v3734 = vshrl.u32 %v3733, 7
  %v3735 = vsub.s32 0, %v3734
  %v3736 = vrot.slane %v3427, %v3735
  %v3739 = vmul.f32 %v3725, %v3732
  %v3740 = vmul.f32 %v3726, %v3736
  %v3741 = vadd.f32 %v2390, %v3739
  %v3742 = vadd.f32 %v2391, %v3740
  %3743 = vst.msk [vmem:[%s1069] sm:$0xff] %vm781, %v3055
  %3744 = vst.msk [vmem:[%s1069 + $0x20] sm:$0xff] %vm781, %v3120
  %3745 = vst.msk [vmem:[%s1072] sm:$0xff] %vm781, %v3202
  %3746 = vst.msk [vmem:[%s1072 + $0x20] sm:$0xff] %vm781, %v3267
  %3747 = vst.msk [vmem:[%s1075] sm:$0xff] %vm781, %v3349
  %3748 = vst.msk [vmem:[%s1075 + $0x20] sm:$0xff] %vm781, %v3414
  %v3749 = vld [vmem:[%s1069] sm:$0xff]
  %v3750 = vld [vmem:[%s1069 + $0x8] sm:$0xff]
  %v3751 = vld [vmem:[%s1069 + $0x10] sm:$0xff]
  %v3752 = vld [vmem:[%s1069 + $0x18] sm:$0xff]
  %v3753 = vld [vmem:[%s1069 + $0x20] sm:$0xff]
  %v3754 = vld [vmem:[%s1069 + $0x28] sm:$0xff]
  %v3755 = vld [vmem:[%s1069 + $0x30] sm:$0xff]
  %v3756 = vld [vmem:[%s1069 + $0x38] sm:$0xff]
  %v3757 = vld [vmem:[%s1072] sm:$0xff]
  %v3758 = vld [vmem:[%s1072 + $0x8] sm:$0xff]
  %v3759 = vld [vmem:[%s1072 + $0x10] sm:$0xff]
  %v3760 = vld [vmem:[%s1072 + $0x18] sm:$0xff]
  %v3761 = vld [vmem:[%s1072 + $0x20] sm:$0xff]
  %v3762 = vld [vmem:[%s1072 + $0x28] sm:$0xff]
  %v3763 = vld [vmem:[%s1072 + $0x30] sm:$0xff]
  %v3764 = vld [vmem:[%s1072 + $0x38] sm:$0xff]
  %v3765 = vld [vmem:[%s1075] sm:$0xff]
  %v3766 = vld [vmem:[%s1075 + $0x8] sm:$0xff]
  %v3767 = vld [vmem:[%s1075 + $0x10] sm:$0xff]
  %v3768 = vld [vmem:[%s1075 + $0x18] sm:$0xff]
  %v3769 = vld [vmem:[%s1075 + $0x20] sm:$0xff]
  %v3770 = vld [vmem:[%s1075 + $0x28] sm:$0xff]
  %v3771 = vld [vmem:[%s1075 + $0x30] sm:$0xff]
  %v3772 = vld [vmem:[%s1075 + $0x38] sm:$0xff]
  %v3773 = vmul.f32 %v2761, %v33
  %v3774 = vmul.f32 %v2826, %v33
  %v3775 = vmul.f32 %v2908, %v34
  %v3776 = vmul.f32 %v2973, %v34
  %v3777 = vadd.f32 %v3773, %v3775
  %v3778 = vadd.f32 %v3774, %v3776
  %v3779 = vmul.f32 %v3749, %v3417
  %v3780 = vmul.f32 %v3750, %v3418
  %v3781 = vmul.f32 %v3751, %v3419
  %v3782 = vmul.f32 %v3752, %v3420
  %v3783 = vmul.f32 %v3753, %v3417
  %v3784 = vmul.f32 %v3754, %v3418
  %v3785 = vmul.f32 %v3755, %v3419
  %v3786 = vmul.f32 %v3756, %v3420
  %v3787 = vmul.f32 %v3757, %v3421
  %v3788 = vmul.f32 %v3758, %v3422
  %v3789 = vmul.f32 %v3759, %v3423
  %v3790 = vmul.f32 %v3760, %v3424
  %v3791 = vmul.f32 %v3761, %v3421
  %v3792 = vmul.f32 %v3762, %v3422
  %v3793 = vmul.f32 %v3763, %v3423
  %v3794 = vmul.f32 %v3764, %v3424
  %v3795 = vadd.f32 %v3779, %v3787
  %v3796 = vadd.f32 %v3780, %v3788
  %v3797 = vadd.f32 %v3781, %v3789
  %v3798 = vadd.f32 %v3782, %v3790
  %v3799 = vadd.f32 %v3783, %v3791
  %v3800 = vadd.f32 %v3784, %v3792
  %v3801 = vadd.f32 %v3785, %v3793
  %v3802 = vadd.f32 %v3786, %v3794
  %v3803 = vpack.c.bf16 %v3777, %v3777
  %v3804 = vpack.c.bf16 %v3778, %v3778
  %v3805 = vpack.c.bf16 %v3796, %v3795
  %v3806 = vpack.c.bf16 %v3798, %v3797
  %v3807 = vpack.c.bf16 %v3800, %v3799
  %v3808 = vpack.c.bf16 %v3802, %v3801
  %v3810 = vsel %vm781, %v3803, 0
  %v3813 = vsel %vm781, %v3805, 0
  %v3816 = vsel %vm781, %v3806, 0
  %3818 = vmatprep.subr.bf16.mxu0 0
  %3819 = vmatpush1.bf16.xpose.msra.mxu0 %v3813
  %3820 = vmatprep.subr.bf16.mxu0 0
  %3821 = vmatpush1.bf16.xpose.msra.mxu0 %v3816
  %3822 = vmatprep.subr.bf16.mxu0 0
  %3823 = vmatpush1.bf16.xpose.msra.mxu0 0
  %3824 = vmatprep.subr.bf16.mxu0 0
  %3825 = vmatpush1.bf16.xpose.msra.mxu0 0
  %3826 = vmatprep.subr.bf16.mxu0 0
  %3827 = vmatpush1.bf16.xpose.msra.mxu0 0
  %3828 = vmatprep.subr.bf16.mxu0 0
  %3829 = vmatpush1.bf16.xpose.msra.mxu0 0
  %3830 = vmatprep.subr.bf16.mxu0 0
  %3831 = vmatpush1.bf16.xpose.msra.mxu0 0
  %3832 = vmatprep.subr.bf16.mxu0 0
  %3833 = vmatpush1.bf16.xpose.msra.mxu0 0
  %3834 = vmatprep.subr.bf16.mxu0 0
  %3835 = vmatpush1.bf16.xpose.msra.mxu0 0
  %3836 = vmatprep.subr.bf16.mxu0 0
  %3837 = vmatpush1.bf16.xpose.msra.mxu0 0
  %3838 = vmatprep.subr.bf16.mxu0 0
  %3839 = vmatpush1.bf16.xpose.msra.mxu0 0
  %3840 = vmatprep.subr.bf16.mxu0 0
  %3841 = vmatpush1.bf16.xpose.msra.mxu0 0
  %3842 = vmatprep.subr.bf16.mxu0 0
  %3843 = vmatpush1.bf16.xpose.msra.mxu0 0
  %3844 = vmatprep.subr.bf16.mxu0 0
  %3845 = vmatpush1.bf16.xpose.msra.mxu0 0
  %3846 = vmatprep.subr.bf16.mxu0 0
  %3847 = vmatpush1.bf16.xpose.msra.mxu0 0
  %3848 = vmatprep.subr.bf16.mxu0 0
  %3849 = vmatpush1.bf16.xpose.msra.mxu0 0
  %3850 = vmatprep.mubr.bf16.mxu0 0
  %3851 = vmatmul.mubr.bf16.gmra.mrb[0].mxu0 %v3810
  %v3852 = vpop.f32.mrb[0].mxu0
  %v3853 = vadd.f32 0.0, %v3852
  %v3854 = vpop.f32.mrb[0].mxu0
  %v3855 = vpop.f32.mrb[0].mxu0
  %v3856 = vpop.f32.mrb[0].mxu0
  %3857 = vdwg.mxu0
  %v3859 = vsel %vm781, %v3804, 0
  %v3862 = vsel %vm781, %v3807, 0
  %v3865 = vsel %vm781, %v3808, 0
  %3867 = vmatprep.subr.bf16.mxu0 0
  %3868 = vmatpush1.bf16.xpose.msra.mxu0 %v3862
  %3869 = vmatprep.subr.bf16.mxu0 0
  %3870 = vmatpush1.bf16.xpose.msra.mxu0 %v3865
  %3871 = vmatprep.subr.bf16.mxu0 0
  %3872 = vmatpush1.bf16.xpose.msra.mxu0 0
  %3873 = vmatprep.subr.bf16.mxu0 0
  %3874 = vmatpush1.bf16.xpose.msra.mxu0 0
  %3875 = vmatprep.subr.bf16.mxu0 0
  %3876 = vmatpush1.bf16.xpose.msra.mxu0 0
  %3877 = vmatprep.subr.bf16.mxu0 0
  %3878 = vmatpush1.bf16.xpose.msra.mxu0 0
  %3879 = vmatprep.subr.bf16.mxu0 0
  %3880 = vmatpush1.bf16.xpose.msra.mxu0 0
  %3881 = vmatprep.subr.bf16.mxu0 0
  %3882 = vmatpush1.bf16.xpose.msra.mxu0 0
  %3883 = vmatprep.subr.bf16.mxu0 0
  %3884 = vmatpush1.bf16.xpose.msra.mxu0 0
  %3885 = vmatprep.subr.bf16.mxu0 0
  %3886 = vmatpush1.bf16.xpose.msra.mxu0 0
  %3887 = vmatprep.subr.bf16.mxu0 0
  %3888 = vmatpush1.bf16.xpose.msra.mxu0 0
  %3889 = vmatprep.subr.bf16.mxu0 0
  %3890 = vmatpush1.bf16.xpose.msra.mxu0 0
  %3891 = vmatprep.subr.bf16.mxu0 0
  %3892 = vmatpush1.bf16.xpose.msra.mxu0 0
  %3893 = vmatprep.subr.bf16.mxu0 0
  %3894 = vmatpush1.bf16.xpose.msra.mxu0 0
  %3895 = vmatprep.subr.bf16.mxu0 0
  %3896 = vmatpush1.bf16.xpose.msra.mxu0 0
  %3897 = vmatprep.subr.bf16.mxu0 0
  %3898 = vmatpush1.bf16.xpose.msra.mxu0 0
  %3899 = vmatprep.mubr.bf16.mxu0 0
  %3900 = vmatmul.mubr.bf16.gmra.mrb[0].mxu0 %v3859
  %v3901 = vpop.f32.mrb[0].mxu0
  %v3902 = vadd.f32 0.0, %v3901
  %v3903 = vpop.f32.mrb[0].mxu0
  %v3904 = vpop.f32.mrb[0].mxu0
  %v3905 = vpop.f32.mrb[0].mxu0
  %3906 = vdwg.mxu0
  %v3907 = vmul.f32 %v3853, 0.17677669
  %v3908 = vmul.f32 %v3902, 0.17677669
  %v3909 = vadd.f32 %v3907, %v3430
  %v3910 = vadd.f32 %v3908, %v3430
  %v3911 = vsel %vm781, %v3909, -inf
  %3912 = vmax.xlane.f32.xlu0 %v3911
  %v3913 = vpop.xlane.xlu0 %3912
  %v3914 = vsel %vm781, %v3910, -inf
  %3915 = vmax.xlane.f32.xlu0 %v3914
  %v3916 = vpop.xlane.xlu0 %3915
  %v3917 = vsub.f32 %v3909, %v3913
  %v3918 = vsub.f32 %v3910, %v3916
  %v3919 = vmul.f32 %v3917, 1.442695
  %v3920 = vpow.pop %v3919
  %v3921 = vmul.f32 %v3918, 1.442695
  %v3922 = vpow.pop %v3921
  %v3923 = vsel %vm781, %v3920, 0.0
  %3924 = vadd.xlane.f32.xlu0 %v3923
  %v3925 = vpop.xlane.xlu0 %3924
  %v3926 = vsel %vm781, %v3922, 0.0
  %3927 = vadd.xlane.f32.xlu0 %v3926
  %v3928 = vpop.xlane.xlu0 %3927
  %v3929 = vpack.c.bf16 %v3920, %v3920
  %v3930 = vpack.c.bf16 %v3922, %v3922
  %v3931 = vpack.c.bf16 %v3766, %v3765
  %v3932 = vpack.c.bf16 %v3768, %v3767
  %v3933 = vpack.c.bf16 %v3770, %v3769
  %v3934 = vpack.c.bf16 %v3772, %v3771
  %v3936 = vsel %vm781, %v3929, 0
  %3938 = vmatprep.subr.bf16.mxu0 0
  %3939 = vmatpush1.bf16.msra.mxu0 %v3931
  %3940 = vmatprep.subr.bf16.mxu0 0
  %3941 = vmatpush1.bf16.msra.mxu0 %v3932
  %3942 = vmatprep.subr.bf16.mxu0 0
  %3943 = vmatpush1.bf16.msra.mxu0 0
  %3944 = vmatprep.subr.bf16.mxu0 0
  %3945 = vmatpush1.bf16.msra.mxu0 0
  %3946 = vmatprep.subr.bf16.mxu0 0
  %3947 = vmatpush1.bf16.msra.mxu0 0
  %3948 = vmatprep.subr.bf16.mxu0 0
  %3949 = vmatpush1.bf16.msra.mxu0 0
  %3950 = vmatprep.subr.bf16.mxu0 0
  %3951 = vmatpush1.bf16.msra.mxu0 0
  %3952 = vmatprep.subr.bf16.mxu0 0
  %3953 = vmatpush1.bf16.msra.mxu0 0
  %3954 = vmatprep.subr.bf16.mxu0 0
  %3955 = vmatpush1.bf16.msra.mxu0 0
  %3956 = vmatprep.subr.bf16.mxu0 0
  %3957 = vmatpush1.bf16.msra.mxu0 0
  %3958 = vmatprep.subr.bf16.mxu0 0
  %3959 = vmatpush1.bf16.msra.mxu0 0
  %3960 = vmatprep.subr.bf16.mxu0 0
  %3961 = vmatpush1.bf16.msra.mxu0 0
  %3962 = vmatprep.subr.bf16.mxu0 0
  %3963 = vmatpush1.bf16.msra.mxu0 0
  %3964 = vmatprep.subr.bf16.mxu0 0
  %3965 = vmatpush1.bf16.msra.mxu0 0
  %3966 = vmatprep.subr.bf16.mxu0 0
  %3967 = vmatpush1.bf16.msra.mxu0 0
  %3968 = vmatprep.subr.bf16.mxu0 0
  %3969 = vmatpush1.bf16.msra.mxu0 0
  %3970 = vmatprep.mubr.bf16.mxu0 0
  %3971 = vmatmul.mubr.bf16.gmra.mrb[0].mxu0 %v3936
  %v3972 = vpop.f32.mrb[0].mxu0
  %v3973 = vadd.f32 0.0, %v3972
  %v3974 = vpop.f32.mrb[0].mxu0
  %v3975 = vpop.f32.mrb[0].mxu0
  %v3976 = vpop.f32.mrb[0].mxu0
  %3977 = vdwg.mxu0
  %v3979 = vsel %vm781, %v3930, 0
  %3981 = vmatprep.subr.bf16.mxu0 0
  %3982 = vmatpush1.bf16.msra.mxu0 %v3933
  %3983 = vmatprep.subr.bf16.mxu0 0
  %3984 = vmatpush1.bf16.msra.mxu0 %v3934
  %3985 = vmatprep.subr.bf16.mxu0 0
  %3986 = vmatpush1.bf16.msra.mxu0 0
  %3987 = vmatprep.subr.bf16.mxu0 0
  %3988 = vmatpush1.bf16.msra.mxu0 0
  %3989 = vmatprep.subr.bf16.mxu0 0
  %3990 = vmatpush1.bf16.msra.mxu0 0
  %3991 = vmatprep.subr.bf16.mxu0 0
  %3992 = vmatpush1.bf16.msra.mxu0 0
  %3993 = vmatprep.subr.bf16.mxu0 0
  %3994 = vmatpush1.bf16.msra.mxu0 0
  %3995 = vmatprep.subr.bf16.mxu0 0
  %3996 = vmatpush1.bf16.msra.mxu0 0
  %3997 = vmatprep.subr.bf16.mxu0 0
  %3998 = vmatpush1.bf16.msra.mxu0 0
  %3999 = vmatprep.subr.bf16.mxu0 0
  %4000 = vmatpush1.bf16.msra.mxu0 0
  %4001 = vmatprep.subr.bf16.mxu0 0
  %4002 = vmatpush1.bf16.msra.mxu0 0
  %4003 = vmatprep.subr.bf16.mxu0 0
  %4004 = vmatpush1.bf16.msra.mxu0 0
  %4005 = vmatprep.subr.bf16.mxu0 0
  %4006 = vmatpush1.bf16.msra.mxu0 0
  %4007 = vmatprep.subr.bf16.mxu0 0
  %4008 = vmatpush1.bf16.msra.mxu0 0
  %4009 = vmatprep.subr.bf16.mxu0 0
  %4010 = vmatpush1.bf16.msra.mxu0 0
  %4011 = vmatprep.subr.bf16.mxu0 0
  %4012 = vmatpush1.bf16.msra.mxu0 0
  %4013 = vmatprep.mubr.bf16.mxu0 0
  %4014 = vmatmul.mubr.bf16.gmra.mrb[0].mxu0 %v3979
  %v4015 = vpop.f32.mrb[0].mxu0
  %v4016 = vadd.f32 0.0, %v4015
  %v4017 = vpop.f32.mrb[0].mxu0
  %v4018 = vpop.f32.mrb[0].mxu0
  %v4019 = vpop.f32.mrb[0].mxu0
  %4020 = vdwg.mxu0
  %v4021 = vrcp.pop %v3925
  %v4022 = vrcp.pop %v3928
  %v4023 = vmul.f32 %v3973, %v4021
  %v4024 = vmul.f32 %v4016, %v4022
  %v4025 = vmul.f32 %v4023, %v4023
  %v4026 = vmul.f32 %v4024, %v4024
  %v4027 = vsel %vm781, %v4025, 0.0
  %4028 = vadd.xlane.f32.xlu0 %v4027
  %v4029 = vpop.xlane.xlu0 %4028
  %v4030 = vsel %vm781, %v4026, 0.0
  %4031 = vadd.xlane.f32.xlu0 %v4030
  %v4032 = vpop.xlane.xlu0 %4031
  %v4033 = vadd.f32 %v4029, %v4032
  %v4034 = vmul.f32 %v4033, %v1047
  %v4035 = vadd.f32 %v4034, 1e-05
  %v4036 = vrsqrt.pop %v4035
  %v4037 = vmul.f32 %v4023, %v4036
  %v4038 = vmul.f32 %v4024, %v4036
  %v4039 = vmul.f32 %v4037, %v3732
  %v4040 = vmul.f32 %v4038, %v3736
  %v4041 = vadd.f32 %v2680, %v4039
  %v4042 = vadd.f32 %v2681, %v4040
  %v4043 = vld [vmem:[%s5] sm:$0x1]
  %v4044 = vld [vmem:[%s5 + $0x1] sm:$0x1]
  %v4045 = vld [vmem:[%s1] sm:$0xff]
  %v4046 = vld [vmem:[%s1 + $0x8] sm:$0xff]
  %v4047 = vadd.f32 %v3741, %v4045
  %v4048 = vadd.f32 %v3742, %v4046
  %v4049 = vmul.f32 %v4047, %v4047
  %v4050 = vmul.f32 %v4048, %v4048
  %v4051 = vsel %vm781, %v4049, 0.0
  %4052 = vadd.xlane.f32.xlu0 %v4051
  %v4053 = vpop.xlane.xlu0 %4052
  %v4054 = vsel %vm781, %v4050, 0.0
  %4055 = vadd.xlane.f32.xlu0 %v4054
  %v4056 = vpop.xlane.xlu0 %4055
  %v4057 = vadd.f32 %v4053, %v4056
  %v4058 = vmul.f32 %v4057, %v1047
  %v4059 = vadd.f32 %v4058, 1e-05
  %v4060 = vrsqrt.pop %v4059
  %v4061 = vmul.f32 %v4047, %v4060
  %v4062 = vmul.f32 %v4048, %v4060
  %v4065 = vlaneseq
  %v4066 = vshrl.u32 %v4065, 7
  %v4067 = vsub.s32 0, %v4066
  %v4068 = vrot.slane %v4043, %v4067
  %v4069 = vlaneseq
  %v4070 = vshrl.u32 %v4069, 7
  %v4071 = vsub.s32 0, %v4070
  %v4072 = vrot.slane %v4044, %v4071
  %v4075 = vmul.f32 %v4061, %v4068
  %v4076 = vmul.f32 %v4062, %v4072
  %v4077 = vpack.c.bf16 %v4075, %v4075
  %v4078 = vpack.c.bf16 %v4076, %v4076
  %v4079 = vld [vmem:[%s3] sm:$0xf]
  %v4080 = vld [vmem:[%s3 + $0x4] sm:$0xf]
  %v4081 = vld [vmem:[%s3 + $0x8] sm:$0xf]
  %v4082 = vld [vmem:[%s3 + $0xc] sm:$0xf]
  %s4083 = scalar_lea.vmem %s3, 16
  %v4084 = vld [vmem:[%s4083] sm:$0xf]
  %v4085 = vld [vmem:[%s4083 + $0x4] sm:$0xf]
  %v4086 = vld [vmem:[%s4083 + $0x8] sm:$0xf]
  %v4087 = vld [vmem:[%s4083 + $0xc] sm:$0xf]
  %v4092 = vunpack.c.l.b16 %v4084
  %v4093 = vunpack.c.l.b16 %v4085
  %v4094 = vunpack.c.l.b16 %v4086
  %v4095 = vunpack.c.l.b16 %v4087
  %v4096 = vpack.c.b16 %v4093, %v4092
  %v4097 = vpack.c.b16 %v4095, %v4094
  %v4101 = vsel %vm781, %v4078, 0
  %4103 = vmatprep.subr.bf16.mxu0 0
  %4104 = vmatpush1.bf16.msra.mxu0 %v4096
  %4105 = vmatprep.subr.bf16.mxu0 0
  %4106 = vmatpush1.bf16.msra.mxu0 %v4097
  %4107 = vmatprep.subr.bf16.mxu0 0
  %4108 = vmatpush1.bf16.msra.mxu0 0
  %4109 = vmatprep.subr.bf16.mxu0 0
  %4110 = vmatpush1.bf16.msra.mxu0 0
  %4111 = vmatprep.subr.bf16.mxu0 0
  %4112 = vmatpush1.bf16.msra.mxu0 0
  %4113 = vmatprep.subr.bf16.mxu0 0
  %4114 = vmatpush1.bf16.msra.mxu0 0
  %4115 = vmatprep.subr.bf16.mxu0 0
  %4116 = vmatpush1.bf16.msra.mxu0 0
  %4117 = vmatprep.subr.bf16.mxu0 0
  %4118 = vmatpush1.bf16.msra.mxu0 0
  %4119 = vmatprep.subr.bf16.mxu0 0
  %4120 = vmatpush1.bf16.msra.mxu0 0
  %4121 = vmatprep.subr.bf16.mxu0 0
  %4122 = vmatpush1.bf16.msra.mxu0 0
  %4123 = vmatprep.subr.bf16.mxu0 0
  %4124 = vmatpush1.bf16.msra.mxu0 0
  %4125 = vmatprep.subr.bf16.mxu0 0
  %4126 = vmatpush1.bf16.msra.mxu0 0
  %4127 = vmatprep.subr.bf16.mxu0 0
  %4128 = vmatpush1.bf16.msra.mxu0 0
  %4129 = vmatprep.subr.bf16.mxu0 0
  %4130 = vmatpush1.bf16.msra.mxu0 0
  %4131 = vmatprep.subr.bf16.mxu0 0
  %4132 = vmatpush1.bf16.msra.mxu0 0
  %4133 = vmatprep.subr.bf16.mxu0 0
  %4134 = vmatpush1.bf16.msra.mxu0 0
  %4135 = vmatprep.mubr.bf16.mxu0 0
  %4136 = vmatmul.mubr.bf16.gmra.mrb[0].mxu0 %v4101
  %v4137 = vpop.f32.mrb[0].mxu0
  %v4138 = vadd.f32 0.0, %v4137
  %v4139 = vpop.f32.mrb[0].mxu0
  %v4140 = vpop.f32.mrb[0].mxu0
  %v4141 = vpop.f32.mrb[0].mxu0
  %4142 = vdwg.mxu0
  %v4147 = vunpack.c.l.b16 %v4079
  %v4148 = vunpack.c.l.b16 %v4080
  %v4149 = vunpack.c.l.b16 %v4081
  %v4150 = vunpack.c.l.b16 %v4082
  %v4151 = vpack.c.b16 %v4148, %v4147
  %v4152 = vpack.c.b16 %v4150, %v4149
  %v4156 = vsel %vm781, %v4077, 0
  %4158 = vmatprep.subr.bf16.mxu0 0
  %4159 = vmatpush1.bf16.msra.mxu0 %v4151
  %4160 = vmatprep.subr.bf16.mxu0 0
  %4161 = vmatpush1.bf16.msra.mxu0 %v4152
  %4162 = vmatprep.subr.bf16.mxu0 0
  %4163 = vmatpush1.bf16.msra.mxu0 0
  %4164 = vmatprep.subr.bf16.mxu0 0
  %4165 = vmatpush1.bf16.msra.mxu0 0
  %4166 = vmatprep.subr.bf16.mxu0 0
  %4167 = vmatpush1.bf16.msra.mxu0 0
  %4168 = vmatprep.subr.bf16.mxu0 0
  %4169 = vmatpush1.bf16.msra.mxu0 0
  %4170 = vmatprep.subr.bf16.mxu0 0
  %4171 = vmatpush1.bf16.msra.mxu0 0
  %4172 = vmatprep.subr.bf16.mxu0 0
  %4173 = vmatpush1.bf16.msra.mxu0 0
  %4174 = vmatprep.subr.bf16.mxu0 0
  %4175 = vmatpush1.bf16.msra.mxu0 0
  %4176 = vmatprep.subr.bf16.mxu0 0
  %4177 = vmatpush1.bf16.msra.mxu0 0
  %4178 = vmatprep.subr.bf16.mxu0 0
  %4179 = vmatpush1.bf16.msra.mxu0 0
  %4180 = vmatprep.subr.bf16.mxu0 0
  %4181 = vmatpush1.bf16.msra.mxu0 0
  %4182 = vmatprep.subr.bf16.mxu0 0
  %4183 = vmatpush1.bf16.msra.mxu0 0
  %4184 = vmatprep.subr.bf16.mxu0 0
  %4185 = vmatpush1.bf16.msra.mxu0 0
  %4186 = vmatprep.subr.bf16.mxu0 0
  %4187 = vmatpush1.bf16.msra.mxu0 0
  %4188 = vmatprep.subr.bf16.mxu0 0
  %4189 = vmatpush1.bf16.msra.mxu0 0
  %4190 = vmatprep.mubr.bf16.mxu0 0
  %4191 = vmatmul.mubr.bf16.gmra.mrb[0].mxu0 %v4156
  %v4192 = vpop.f32.mrb[0].mxu0
  %v4193 = vadd.f32 %v4138, %v4192
  %v4194 = vpop.f32.mrb[0].mxu0
  %v4195 = vpop.f32.mrb[0].mxu0
  %v4196 = vpop.f32.mrb[0].mxu0
  %4197 = vdwg.mxu0
  %s4198 = scalar_lea.vmem %s1, 16
  %v4199 = vld [vmem:[%s4198] sm:$0xff]
  %v4200 = vld [vmem:[%s4198 + $0x8] sm:$0xff]
  %v4201 = vadd.f32 %v4041, %v4199
  %v4202 = vadd.f32 %v4042, %v4200
  %v4203 = vmul.f32 %v4201, %v4201
  %v4204 = vmul.f32 %v4202, %v4202
  %v4205 = vsel %vm781, %v4203, 0.0
  %4206 = vadd.xlane.f32.xlu0 %v4205
  %v4207 = vpop.xlane.xlu0 %4206
  %v4208 = vsel %vm781, %v4204, 0.0
  %4209 = vadd.xlane.f32.xlu0 %v4208
  %v4210 = vpop.xlane.xlu0 %4209
  %v4211 = vadd.f32 %v4207, %v4210
  %v4212 = vmul.f32 %v4211, %v1047
  %v4213 = vadd.f32 %v4212, 1e-05
  %v4214 = vrsqrt.pop %v4213
  %v4215 = vmul.f32 %v4201, %v4214
  %v4216 = vmul.f32 %v4202, %v4214
  %v4217 = vmul.f32 %v4215, %v4068
  %v4218 = vmul.f32 %v4216, %v4072
  %v4219 = vpack.c.bf16 %v4217, %v4217
  %v4220 = vpack.c.bf16 %v4218, %v4218
  %v4222 = vsel %vm781, %v4220, 0
  %4224 = vmatprep.subr.bf16.mxu0 0
  %4225 = vmatpush1.bf16.msra.mxu0 %v4096
  %4226 = vmatprep.subr.bf16.mxu0 0
  %4227 = vmatpush1.bf16.msra.mxu0 %v4097
  %4228 = vmatprep.subr.bf16.mxu0 0
  %4229 = vmatpush1.bf16.msra.mxu0 0
  %4230 = vmatprep.subr.bf16.mxu0 0
  %4231 = vmatpush1.bf16.msra.mxu0 0
  %4232 = vmatprep.subr.bf16.mxu0 0
  %4233 = vmatpush1.bf16.msra.mxu0 0
  %4234 = vmatprep.subr.bf16.mxu0 0
  %4235 = vmatpush1.bf16.msra.mxu0 0
  %4236 = vmatprep.subr.bf16.mxu0 0
  %4237 = vmatpush1.bf16.msra.mxu0 0
  %4238 = vmatprep.subr.bf16.mxu0 0
  %4239 = vmatpush1.bf16.msra.mxu0 0
  %4240 = vmatprep.subr.bf16.mxu0 0
  %4241 = vmatpush1.bf16.msra.mxu0 0
  %4242 = vmatprep.subr.bf16.mxu0 0
  %4243 = vmatpush1.bf16.msra.mxu0 0
  %4244 = vmatprep.subr.bf16.mxu0 0
  %4245 = vmatpush1.bf16.msra.mxu0 0
  %4246 = vmatprep.subr.bf16.mxu0 0
  %4247 = vmatpush1.bf16.msra.mxu0 0
  %4248 = vmatprep.subr.bf16.mxu0 0
  %4249 = vmatpush1.bf16.msra.mxu0 0
  %4250 = vmatprep.subr.bf16.mxu0 0
  %4251 = vmatpush1.bf16.msra.mxu0 0
  %4252 = vmatprep.subr.bf16.mxu0 0
  %4253 = vmatpush1.bf16.msra.mxu0 0
  %4254 = vmatprep.subr.bf16.mxu0 0
  %4255 = vmatpush1.bf16.msra.mxu0 0
  %4256 = vmatprep.mubr.bf16.mxu0 0
  %4257 = vmatmul.mubr.bf16.gmra.mrb[0].mxu0 %v4222
  %v4258 = vpop.f32.mrb[0].mxu0
  %v4259 = vadd.f32 0.0, %v4258
  %v4260 = vpop.f32.mrb[0].mxu0
  %v4261 = vpop.f32.mrb[0].mxu0
  %v4262 = vpop.f32.mrb[0].mxu0
  %4263 = vdwg.mxu0
  %v4265 = vsel %vm781, %v4219, 0
  %4267 = vmatprep.subr.bf16.mxu0 0
  %4268 = vmatpush1.bf16.msra.mxu0 %v4151
  %4269 = vmatprep.subr.bf16.mxu0 0
  %4270 = vmatpush1.bf16.msra.mxu0 %v4152
  %4271 = vmatprep.subr.bf16.mxu0 0
  %4272 = vmatpush1.bf16.msra.mxu0 0
  %4273 = vmatprep.subr.bf16.mxu0 0
  %4274 = vmatpush1.bf16.msra.mxu0 0
  %4275 = vmatprep.subr.bf16.mxu0 0
  %4276 = vmatpush1.bf16.msra.mxu0 0
  %4277 = vmatprep.subr.bf16.mxu0 0
  %4278 = vmatpush1.bf16.msra.mxu0 0
  %4279 = vmatprep.subr.bf16.mxu0 0
  %4280 = vmatpush1.bf16.msra.mxu0 0
  %4281 = vmatprep.subr.bf16.mxu0 0
  %4282 = vmatpush1.bf16.msra.mxu0 0
  %4283 = vmatprep.subr.bf16.mxu0 0
  %4284 = vmatpush1.bf16.msra.mxu0 0
  %4285 = vmatprep.subr.bf16.mxu0 0
  %4286 = vmatpush1.bf16.msra.mxu0 0
  %4287 = vmatprep.subr.bf16.mxu0 0
  %4288 = vmatpush1.bf16.msra.mxu0 0
  %4289 = vmatprep.subr.bf16.mxu0 0
  %4290 = vmatpush1.bf16.msra.mxu0 0
  %4291 = vmatprep.subr.bf16.mxu0 0
  %4292 = vmatpush1.bf16.msra.mxu0 0
  %4293 = vmatprep.subr.bf16.mxu0 0
  %4294 = vmatpush1.bf16.msra.mxu0 0
  %4295 = vmatprep.subr.bf16.mxu0 0
  %4296 = vmatpush1.bf16.msra.mxu0 0
  %4297 = vmatprep.subr.bf16.mxu0 0
  %4298 = vmatpush1.bf16.msra.mxu0 0
  %4299 = vmatprep.mubr.bf16.mxu0 0
  %4300 = vmatmul.mubr.bf16.gmra.mrb[0].mxu0 %v4265
  %v4301 = vpop.f32.mrb[0].mxu0
  %v4302 = vadd.f32 %v4259, %v4301
  %v4303 = vpop.f32.mrb[0].mxu0
  %v4304 = vpop.f32.mrb[0].mxu0
  %v4305 = vpop.f32.mrb[0].mxu0
  %4306 = vdwg.mxu0
  %4308 = vrot.lane.b32.xlu0 %v4302, 64
  %v4309 = vpop.permute.xlu0 %4308
  %v4311 = vsel %vm75, %v4193, %v4309
  %4312 = vst [vmem:[%s8] sm:$0xff] %v4311
  // Predicated region
  $region34: #{forward.1} parent=0 // pred_check
    _
  $region35: #{forward.1} parent=0 // pred_check_branch
    %4314 = sbr.rel (0) target = $region37
  $region36: #{forward.1} parent=0 // pred_region
    _
  $region37: #{forward.1} parent=0 // pred_fallthru
    _
  // Predicated region
  $region38: #{forward.1} parent=0 // pred_check
    _
  $region39: #{forward.1} parent=0 // pred_check_branch
    %4316 = sbr.rel (0) target = $region41
  $region40: #{forward.1} parent=0 // pred_region
    _
  $region41: #{forward.1} parent=0 // pred_fallthru
    _

</llo_original>
